<compile_context>
chip_gen: v7x
topology: tpu7x:2x2x1
jax: 0.10.0
libtpu: 0.0.40
codegen_flags: <defaults>
</compile_context>

<pallas_src>
import jax
import jax.numpy as jnp
from jax.experimental import pallas as pl
from jax.experimental.pallas import tpu as pltpu

# ----------------------------- model constants ------------------------------
N = 2               # batch
H = W = 16          # input spatial (input_size)
C0 = 4              # input channels
C1, C2 = 8, 16      # channel_sizes
K = 3               # kernel size (both conv layers)
P = 2               # max-pool size (both layers)
NUM_CLASSES = 10
EPS = 1e-5          # torch BatchNorm2d default

H1, W1 = H - K + 1, W - K + 1          # conv1 out: 14 x 14
HP1, WP1 = H1 // P, W1 // P            # pool1 out: 7 x 7
H2, W2 = HP1 - K + 1, WP1 - K + 1      # conv2 out: 5 x 5
HP2, WP2 = H2 // P, W2 // P            # pool2 out: 2 x 2
NPOS2 = HP2 * WP2                      # 4 spatial positions after pool2
DENSE_IN = C2 * NPOS2                  # 64

R1 = N * H * W                         # 512 conv1 overscan output rows
X1_ROWS = R1 + (K - 1) * W             # 544 rows in conv1 im2col slab
X1_LANES = K * C0                      # 12  (kw-packed input lanes)
CHUNK1 = 128                           # conv1 row chunk (acc stays in vregs)

WP1P = 8                               # pool1 width padded 7 -> 8 (alignment)
IMG1 = HP1 * WP1P                      # 56 rows / image in pool1 layout
R2 = N * IMG1                          # 112 conv2 overscan output rows
X2_ROWS = R2 + (K - 1) * WP1P          # 128 rows in conv2 im2col slab
X2_LANES = K * C1                      # 24
P1_ROWS = ((X2_ROWS + (K - 1) + 7) // 8) * 8     # 136 (x2col build reads row 129)

# static layout invariants
assert R1 % CHUNK1 == 0
# last pool1 corner read stays inside the conv1 overscan slab:
assert (N - 1) * H * W + P * (HP1 - 1) * W + (W + 1) + (WP1 - 1) * P < R1
assert X2_ROWS + (K - 1) <= P1_ROWS
assert (K - 1) * WP1P + R2 <= X2_ROWS


# ------------------------------ fused kernel --------------------------------

def _fused_cnn_kernel(x_ref, w1_ref, b1_ref, w2_ref, b2_ref, wf_ref, bf_ref,
                      o_ref, x1_ref, a1_ref, p1_ref, x2_ref, a2_ref, p2_ref):
    """Whole CNN forward, single grid point; every intermediate lives in VMEM.

    Activation layout: row = n*rows_per_image + h*row_width + w, lanes = channels.
    The kw taps of each conv are packed into the lane (contraction) dim of an
    im2col slab, so a 3x3 valid conv is 3 matmuls whose kh row shifts are
    8-sublane aligned; accumulation happens in vregs, never via scratch-ref +=.
    Overscan rows (h/w past the valid range) hold junk and are never gathered.
    """
    # ---------------- conv1 im2col slab: x1[r, kw*C0+c] = x[r+kw, c] --------------
    # Zero the overscan tail once (deterministic; those rows only feed conv1
    # overscan outputs which pool1 never reads).
    x1_ref[pl.ds(R1 - 8, X1_ROWS - (R1 - 8)), :] = jnp.zeros(
        (X1_ROWS - (R1 - 8), X1_LANES), jnp.float32)
    for kw in range(K):
        x1_ref[pl.ds(0, R1 - kw), pl.ds(kw * C0, C0)] = x_ref[pl.ds(kw, R1 - kw), :]

    # ---------------- conv1 (BN0 pre-folded) + ReLU -------------------------------
    w1_taps = [w1_ref[kh] for kh in range(K)]            # (K*C0, C1) each, hoisted
    b1 = b1_ref[...]
    for i in range(R1 // CHUNK1):                        # 4 chunks of 128 rows
        base = i * CHUNK1                                # static, 8-aligned
        acc = jnp.dot(x1_ref[pl.ds(base, CHUNK1), :], w1_taps[0],
                      preferred_element_type=jnp.float32)
        for kh in range(1, K):                           # shifts 16, 32: aligned
            acc = acc + jnp.dot(x1_ref[pl.ds(base + kh * W, CHUNK1), :], w1_taps[kh],
                                preferred_element_type=jnp.float32)
        a1_ref[pl.ds(base, CHUNK1), :] = jnp.maximum(acc + b1, 0.0)

    # ---------------- maxpool1 (2x2, stride 2): stride-2 corner reads -------------
    # p1 layout: row = n*56 + ph*8 + pw (pw padded to 8 so conv2 shifts align).
    p1_ref[...] = jnp.zeros_like(p1_ref)                 # dummy pw=7 col + tail = 0
    for n in range(N):
        for ph in range(HP1):
            src = n * H * W + (P * ph) * W
            dst = n * IMG1 + ph * WP1P
            c00 = a1_ref[pl.ds(src,         WP1, stride=P), :]
            c01 = a1_ref[pl.ds(src + 1,     WP1, stride=P), :]
            c10 = a1_ref[pl.ds(src + W,     WP1, stride=P), :]
            c11 = a1_ref[pl.ds(src + W + 1, WP1, stride=P), :]
            p1_ref[pl.ds(dst, WP1), :] = jnp.maximum(jnp.maximum(c00, c01),
                                                     jnp.maximum(c10, c11))

    # ---------------- conv2 im2col slab: x2[r, kw*C1+c] = p1[r+kw, c] -------------
    for kw in range(K):
        x2_ref[pl.ds(0, X2_ROWS), pl.ds(kw * C1, C1)] = p1_ref[pl.ds(kw, X2_ROWS), :]

    # ---------------- conv2 (BN1 pre-folded) + ReLU (single 112-row chunk) --------
    w2_taps = [w2_ref[kh] for kh in range(K)]
    acc2 = jnp.dot(x2_ref[pl.ds(0, R2), :], w2_taps[0],
                   preferred_element_type=jnp.float32)
    for kh in range(1, K):                               # shifts 8, 16: aligned
        acc2 = acc2 + jnp.dot(x2_ref[pl.ds(kh * WP1P, R2), :], w2_taps[kh],
                              preferred_element_type=jnp.float32)
    a2_ref[...] = jnp.maximum(acc2 + b2_ref[...], 0.0)

    # ---------------- maxpool2 (2x2) -> lane-packed (N, NPOS2*C2) dense input -----
    for n in range(N):
        for s in range(NPOS2):                           # s = h*WP2 + w (matches wf)
            h, w = s // WP2, s % WP2
            base = n * IMG1 + (P * h) * WP1P + P * w
            top = a2_ref[pl.ds(base, P), :]              # rows (2h, 2w), (2h, 2w+1)
            bot = a2_ref[pl.ds(base + WP1P, P), :]       # rows (2h+1, 2w), (2h+1, 2w+1)
            p2_ref[pl.ds(n, 1), pl.ds(s * C2, C2)] = jnp.max(
                jnp.maximum(top, bot), axis=0, keepdims=True)

    # ---------------- dense (torch NCHW flatten folded into wf) + log_softmax -----
    logits = jnp.dot(p2_ref[...], wf_ref[...],
                     preferred_element_type=jnp.float32) + bf_ref[...]
    mx = jnp.max(logits, axis=-1, keepdims=True)
    sh = logits - mx
    lse = jnp.log(jnp.sum(jnp.exp(sh), axis=-1, keepdims=True))
    # (N, 10) result: the ONLY HBM store of the kernel.  Kept un-padded on purpose:
    # padding to a lane-dense tile would need an extra XLA slice dispatch, which
    # costs more than one tiny masked store at this size.
    o_ref[...] = sh - lse


# --------------------- one-time parameter preparation -----------------------

def _fold_bn_into_conv(w_oikk, b_o, bn):
    """Exact fold of an (eval-mode) BatchNorm that precedes a valid conv."""
    gamma = bn["gamma"].reshape(-1)
    beta = bn["beta"].reshape(-1)
    mean = bn["mean"].reshape(-1)
    var = bn["var"].reshape(-1)
    s = gamma * jax.lax.rsqrt(var + EPS)          # per-input-channel scale
    t = beta - mean * s                           # per-input-channel shift
    w_f = w_oikk * s[None, :, None, None]
    b_f = b_o + jnp.einsum("oikl,i->o", w_oikk, t)
    return w_f, b_f


def prepare_params(params):
    """Hoisted, one-time weight prep: BN folds + kernel-friendly layouts."""
    w1, b1 = _fold_bn_into_conv(params["conv1_w"], params["conv1_b"], params["bn0"])
    w2, b2 = _fold_bn_into_conv(params["conv2_w"], params["conv2_b"], params["bn1"])
    # (Cout, Cin, KH, KW) -> (KH, KW*Cin, Cout); lane order kw-major / ci-minor
    # matches the im2col slabs built in-kernel.
    w1_tap = jnp.transpose(w1, (2, 3, 1, 0)).reshape(K, K * C0, C1)
    w2_tap = jnp.transpose(w2, (2, 3, 1, 0)).reshape(K, K * C1, C2)
    # torch NCHW flatten is f = c*NPOS2 + s (s = h*WP2 + w); the kernel packs the
    # pooled activations as lanes [s*C2 + c], so reorder fc_w once into (64, 10).
    wf = jnp.transpose(params["fc_w"].reshape(NUM_CLASSES, C2, NPOS2),
                       (2, 1, 0)).reshape(DENSE_IN, NUM_CLASSES)
    return dict(
        w1=w1_tap.astype(jnp.float32), b1=b1.reshape(1, C1).astype(jnp.float32),
        w2=w2_tap.astype(jnp.float32), b2=b2.reshape(1, C2).astype(jnp.float32),
        wf=wf.astype(jnp.float32),
        bf=params["fc_b"].reshape(1, NUM_CLASSES).astype(jnp.float32),
    )


# ------------------------------ full forward --------------------------------

def cnn_forward(x_nchw, prep):
    """x_nchw: (N, C0, H, W) float32 (PyTorch layout). prep: prepare_params(...)."""
    # Input glue is one tiny XLA transpose (8 KB) NCHW -> NHWC; the reshape to the
    # row-flat (R1, C0) slab is layout-preserving.  Overscan padding + kw lane
    # packing happen inside the kernel (no jnp.pad dispatch / padded HBM tensor).
    # TODO(synk): consuming NCHW directly in-kernel would need a per-(n,c)
    # lane<->sublane transpose in VMEM; not worth it at this size.
    x = jnp.transpose(x_nchw, (0, 2, 3, 1)).astype(jnp.float32).reshape(R1, C0)

    vmem = pl.BlockSpec(memory_space=pltpu.MemorySpace.VMEM)
    return pl.pallas_call(
        _fused_cnn_kernel,
        out_shape=jax.ShapeDtypeStruct((N, NUM_CLASSES), jnp.float32),
        in_specs=[vmem] * 7,
        out_specs=vmem,
        scratch_shapes=[
            pltpu.VMEM((X1_ROWS, X1_LANES), jnp.float32),   # x1: conv1 im2col slab
            pltpu.VMEM((R1, C1), jnp.float32),              # a1: conv1+relu overscan
            pltpu.VMEM((P1_ROWS, C1), jnp.float32),         # p1: pool1 out (width->8)
            pltpu.VMEM((X2_ROWS, X2_LANES), jnp.float32),   # x2: conv2 im2col slab
            pltpu.VMEM((R2, C2), jnp.float32),              # a2: conv2+relu overscan
            pltpu.VMEM((N, DENSE_IN), jnp.float32),         # p2: lane-packed dense in
        ],
        # Single grid point on purpose: the body is latency-bound at N=2, so a
        # batch grid axis / second TensorCore would only add per-step overhead.
    )(x, prep["w1"], prep["b1"], prep["w2"], prep["b2"], prep["wf"], prep["bf"])


# ------------------------- deterministic parameter init ---------------------

def init_params(key):
    ks = jax.random.split(key, 16)

    def unif(k, shape, scale):
        return jax.random.uniform(k, shape, jnp.float32, -scale, scale)

    def bn_params(k0, k1, k2, k3, c):
        return dict(
            gamma=(1.0 + 0.1 * jax.random.normal(k0, (1, c))).astype(jnp.float32),
            beta=(0.1 * jax.random.normal(k1, (1, c))).astype(jnp.float32),
            mean=(0.1 * jax.random.normal(k2, (1, c))).astype(jnp.float32),
            var=(1.0 + 0.5 * jax.random.uniform(k3, (1, c))).astype(jnp.float32),
        )

    params = {}
    params["bn0"] = bn_params(ks[0], ks[1], ks[2], ks[3], C0)       # BatchNorm2d(4)
    s1 = 1.0 / (C0 * K * K) ** 0.5
    params["conv1_w"] = unif(ks[4], (C1, C0, K, K), s1)             # Conv2d(4, 8, 3)
    params["conv1_b"] = unif(ks[5], (C1,), s1)
    params["bn1"] = bn_params(ks[6], ks[7], ks[8], ks[9], C1)       # BatchNorm2d(8)
    s2 = 1.0 / (C1 * K * K) ** 0.5
    params["conv2_w"] = unif(ks[10], (C2, C1, K, K), s2)            # Conv2d(8, 16, 3)
    params["conv2_b"] = unif(ks[11], (C2,), s2)
    s3 = 1.0 / DENSE_IN ** 0.5
    params["fc_w"] = unif(ks[12], (NUM_CLASSES, DENSE_IN), s3)      # Linear(64, 10)
    params["fc_b"] = unif(ks[13], (NUM_CLASSES,), s3)
    return params


# --------------------------- pure-JAX reference -----------------------------

def _reference_forward(x_nchw, params):
    """Straightforward XLA implementation of the module (eval-mode BN)."""
    def bn(x_nhwc, p):
        g, b = p["gamma"].reshape(-1), p["beta"].reshape(-1)
        m, v = p["mean"].reshape(-1), p["var"].reshape(-1)
        return (x_nhwc - m) * jax.lax.rsqrt(v + EPS) * g + b

    def conv(x_nhwc, w_oikk, bias):
        y = jax.lax.conv_general_dilated(
            x_nhwc, jnp.transpose(w_oikk, (2, 3, 1, 0)),
            window_strides=(1, 1), padding="VALID",
            dimension_numbers=("NHWC", "HWIO", "NHWC"),
            precision=jax.lax.Precision.HIGHEST)
        return y + bias

    def pool(x_nhwc, p):
        n, h, w, c = x_nhwc.shape
        hp, wp = h // p, w // p
        xr = x_nhwc[:, :hp * p, :wp * p, :].reshape(n, hp, p, wp, p, c)
        return xr.max(axis=(2, 4))

    x = jnp.transpose(x_nchw, (0, 2, 3, 1)).astype(jnp.float32)
    x = bn(x, params["bn0"])
    x = pool(jnp.maximum(conv(x, params["conv1_w"], params["conv1_b"]), 0.0), P)
    x = bn(x, params["bn1"])
    x = pool(jnp.maximum(conv(x, params["conv2_w"], params["conv2_b"]), 0.0), P)
    x = jnp.transpose(x, (0, 3, 1, 2)).reshape(x.shape[0], -1)      # torch NCHW flatten
    logits = jnp.dot(x, params["fc_w"].T,
                     precision=jax.lax.Precision.HIGHEST) + params["fc_b"]
    return jax.nn.log_softmax(logits, axis=1)


if __name__ == "__main__":
    key = jax.random.PRNGKey(0)
    kx, kp = jax.random.split(key)
    x = jax.random.normal(kx, (N, C0, H, W), jnp.float32)     # NCHW, like torch
    params = init_params(kp)

    prep = prepare_params(params)          # one-time: BN fold + weight re-layout
    fwd = jax.jit(cnn_forward)
    out = jax.block_until_ready(fwd(x, prep))

    assert out.shape == (N, NUM_CLASSES), out.shape
    assert bool(jnp.all(jnp.isfinite(out)))
    # log_softmax rows must exponentiate to probability simplices
    assert bool(jnp.allclose(jnp.sum(jnp.exp(out), axis=1), 1.0, atol=1e-4))
    # match the straightforward XLA reference (tolerance covers MXU precision modes)
    ref = _reference_forward(x, params)
    assert bool(jnp.allclose(out, ref, atol=5e-2, rtol=5e-2)), \
        float(jnp.max(jnp.abs(out - ref)))
    print("KERNEL_OK")
</pallas_src>

<mosaic_0001>
module attributes {stable_mosaic.version = 11 : i64} {
  func.func @_fused_cnn_kernel(%arg0: memref<512x4xf32, #tpu.memory_space<vmem>>, %arg1: memref<3x12x8xf32, #tpu.memory_space<vmem>>, %arg2: memref<1x8xf32, #tpu.memory_space<vmem>>, %arg3: memref<3x24x16xf32, #tpu.memory_space<vmem>>, %arg4: memref<1x16xf32, #tpu.memory_space<vmem>>, %arg5: memref<64x10xf32, #tpu.memory_space<vmem>>, %arg6: memref<1x10xf32, #tpu.memory_space<vmem>>, %arg7: memref<2x10xf32, #tpu.memory_space<vmem>>, %arg8: memref<544x12xf32, #tpu.memory_space<vmem>>, %arg9: memref<512x8xf32, #tpu.memory_space<vmem>>, %arg10: memref<136x8xf32, #tpu.memory_space<vmem>>, %arg11: memref<128x24xf32, #tpu.memory_space<vmem>>, %arg12: memref<112x16xf32, #tpu.memory_space<vmem>>, %arg13: memref<2x64xf32, #tpu.memory_space<vmem>>) attributes {dimension_semantics = [], scalar_prefetch = 0 : i64, scratch_operands = 6 : i64, tpu.core_type = #tpu.core_type<tc>} {
    %cst = arith.constant 0.000000e+00 : f32
    %0 = vector.broadcast %cst : f32 to vector<40x12xf32>
    %c504 = arith.constant 504 : index
    %c0 = arith.constant 0 : index
    %1 = vector.load %arg8[%c504, %c0] : memref<544x12xf32, #tpu.memory_space<vmem>>, vector<40x12xf32>
    tpu.vector_store %arg8[%c504, %c0], %0 {strides = array<i32>} : memref<544x12xf32, #tpu.memory_space<vmem>>, vector<40x12xf32>,
    %c0_0 = arith.constant 0 : index
    %c0_1 = arith.constant 0 : index
    %2 = vector.load %arg0[%c0_0, %c0_1] : memref<512x4xf32, #tpu.memory_space<vmem>>, vector<512x4xf32>
    %c0_2 = arith.constant 0 : index
    %c0_3 = arith.constant 0 : index
    %3 = vector.load %arg8[%c0_2, %c0_3] : memref<544x12xf32, #tpu.memory_space<vmem>>, vector<512x4xf32>
    tpu.vector_store %arg8[%c0_2, %c0_3], %2 {strides = array<i32>} : memref<544x12xf32, #tpu.memory_space<vmem>>, vector<512x4xf32>,
    %c1 = arith.constant 1 : index
    %c0_4 = arith.constant 0 : index
    %4 = vector.load %arg0[%c1, %c0_4] : memref<512x4xf32, #tpu.memory_space<vmem>>, vector<511x4xf32>
    %c0_5 = arith.constant 0 : index
    %c4 = arith.constant 4 : index
    %5 = vector.load %arg8[%c0_5, %c4] : memref<544x12xf32, #tpu.memory_space<vmem>>, vector<511x4xf32>
    tpu.vector_store %arg8[%c0_5, %c4], %4 {strides = array<i32>} : memref<544x12xf32, #tpu.memory_space<vmem>>, vector<511x4xf32>,
    %c2 = arith.constant 2 : index
    %c0_6 = arith.constant 0 : index
    %6 = vector.load %arg0[%c2, %c0_6] : memref<512x4xf32, #tpu.memory_space<vmem>>, vector<510x4xf32>
    %c0_7 = arith.constant 0 : index
    %c8 = arith.constant 8 : index
    %7 = vector.load %arg8[%c0_7, %c8] : memref<544x12xf32, #tpu.memory_space<vmem>>, vector<510x4xf32>
    tpu.vector_store %arg8[%c0_7, %c8], %6 {strides = array<i32>} : memref<544x12xf32, #tpu.memory_space<vmem>>, vector<510x4xf32>,
    %c0_8 = arith.constant 0 : index
    %c0_9 = arith.constant 0 : index
    %c0_10 = arith.constant 0 : index
    %8 = vector.load %arg1[%c0_8, %c0_9, %c0_10] : memref<3x12x8xf32, #tpu.memory_space<vmem>>, vector<1x12x8xf32>
    %9 = vector.shape_cast %8 : vector<1x12x8xf32> to vector<12x8xf32>
    %c1_11 = arith.constant 1 : index
    %c0_12 = arith.constant 0 : index
    %c0_13 = arith.constant 0 : index
    %10 = vector.load %arg1[%c1_11, %c0_12, %c0_13] : memref<3x12x8xf32, #tpu.memory_space<vmem>>, vector<1x12x8xf32>
    %11 = vector.shape_cast %10 : vector<1x12x8xf32> to vector<12x8xf32>
    %c2_14 = arith.constant 2 : index
    %c0_15 = arith.constant 0 : index
    %c0_16 = arith.constant 0 : index
    %12 = vector.load %arg1[%c2_14, %c0_15, %c0_16] : memref<3x12x8xf32, #tpu.memory_space<vmem>>, vector<1x12x8xf32>
    %13 = vector.shape_cast %12 : vector<1x12x8xf32> to vector<12x8xf32>
    %c0_17 = arith.constant 0 : index
    %c0_18 = arith.constant 0 : index
    %14 = vector.load %arg2[%c0_17, %c0_18] : memref<1x8xf32, #tpu.memory_space<vmem>>, vector<1x8xf32>
    %c0_19 = arith.constant 0 : index
    %c0_20 = arith.constant 0 : index
    %15 = vector.load %arg8[%c0_19, %c0_20] : memref<544x12xf32, #tpu.memory_space<vmem>>, vector<128x12xf32>
    %cst_21 = arith.constant dense<0.000000e+00> : vector<128x8xf32>
    %16 = tpu.matmul %15, %9, %cst_21 {dimension_numbers = #tpu.dot_dimension_numbers<[1], [0], [0], [1], [0, 0, 1, 1], [], []>} : vector<128x12xf32>, vector<12x8xf32>, vector<128x8xf32> -> vector<128x8xf32>
    %c16 = arith.constant 16 : index
    %c0_22 = arith.constant 0 : index
    %17 = vector.load %arg8[%c16, %c0_22] : memref<544x12xf32, #tpu.memory_space<vmem>>, vector<128x12xf32>
    %cst_23 = arith.constant dense<0.000000e+00> : vector<128x8xf32>
    %18 = tpu.matmul %17, %11, %cst_23 {dimension_numbers = #tpu.dot_dimension_numbers<[1], [0], [0], [1], [0, 0, 1, 1], [], []>} : vector<128x12xf32>, vector<12x8xf32>, vector<128x8xf32> -> vector<128x8xf32>
    %19 = arith.addf %16, %18 : vector<128x8xf32>
    %c32 = arith.constant 32 : index
    %c0_24 = arith.constant 0 : index
    %20 = vector.load %arg8[%c32, %c0_24] : memref<544x12xf32, #tpu.memory_space<vmem>>, vector<128x12xf32>
    %cst_25 = arith.constant dense<0.000000e+00> : vector<128x8xf32>
    %21 = tpu.matmul %20, %13, %cst_25 {dimension_numbers = #tpu.dot_dimension_numbers<[1], [0], [0], [1], [0, 0, 1, 1], [], []>} : vector<128x12xf32>, vector<12x8xf32>, vector<128x8xf32> -> vector<128x8xf32>
    %22 = arith.addf %19, %21 : vector<128x8xf32>
    %23 = vector.broadcast %14 : vector<1x8xf32> to vector<128x8xf32>
    %24 = arith.addf %22, %23 : vector<128x8xf32>
    %cst_26 = arith.constant 0.000000e+00 : f32
    %25 = vector.broadcast %cst_26 : f32 to vector<128x8xf32>
    %26 = arith.maximumf %24, %25 : vector<128x8xf32>
    %c0_27 = arith.constant 0 : index
    %c0_28 = arith.constant 0 : index
    %27 = vector.load %arg9[%c0_27, %c0_28] : memref<512x8xf32, #tpu.memory_space<vmem>>, vector<128x8xf32>
    tpu.vector_store %arg9[%c0_27, %c0_28], %26 {strides = array<i32>} : memref<512x8xf32, #tpu.memory_space<vmem>>, vector<128x8xf32>,
    %c128 = arith.constant 128 : index
    %c0_29 = arith.constant 0 : index
    %28 = vector.load %arg8[%c128, %c0_29] : memref<544x12xf32, #tpu.memory_space<vmem>>, vector<128x12xf32>
    %cst_30 = arith.constant dense<0.000000e+00> : vector<128x8xf32>
    %29 = tpu.matmul %28, %9, %cst_30 {dimension_numbers = #tpu.dot_dimension_numbers<[1], [0], [0], [1], [0, 0, 1, 1], [], []>} : vector<128x12xf32>, vector<12x8xf32>, vector<128x8xf32> -> vector<128x8xf32>
    %c144 = arith.constant 144 : index
    %c0_31 = arith.constant 0 : index
    %30 = vector.load %arg8[%c144, %c0_31] : memref<544x12xf32, #tpu.memory_space<vmem>>, vector<128x12xf32>
    %cst_32 = arith.constant dense<0.000000e+00> : vector<128x8xf32>
    %31 = tpu.matmul %30, %11, %cst_32 {dimension_numbers = #tpu.dot_dimension_numbers<[1], [0], [0], [1], [0, 0, 1, 1], [], []>} : vector<128x12xf32>, vector<12x8xf32>, vector<128x8xf32> -> vector<128x8xf32>
    %32 = arith.addf %29, %31 : vector<128x8xf32>
    %c160 = arith.constant 160 : index
    %c0_33 = arith.constant 0 : index
    %33 = vector.load %arg8[%c160, %c0_33] : memref<544x12xf32, #tpu.memory_space<vmem>>, vector<128x12xf32>
    %cst_34 = arith.constant dense<0.000000e+00> : vector<128x8xf32>
    %34 = tpu.matmul %33, %13, %cst_34 {dimension_numbers = #tpu.dot_dimension_numbers<[1], [0], [0], [1], [0, 0, 1, 1], [], []>} : vector<128x12xf32>, vector<12x8xf32>, vector<128x8xf32> -> vector<128x8xf32>
    %35 = arith.addf %32, %34 : vector<128x8xf32>
    %36 = vector.broadcast %14 : vector<1x8xf32> to vector<128x8xf32>
    %37 = arith.addf %35, %36 : vector<128x8xf32>
    %cst_35 = arith.constant 0.000000e+00 : f32
    %38 = vector.broadcast %cst_35 : f32 to vector<128x8xf32>
    %39 = arith.maximumf %37, %38 : vector<128x8xf32>
    %c128_36 = arith.constant 128 : index
    %c0_37 = arith.constant 0 : index
    %40 = vector.load %arg9[%c128_36, %c0_37] : memref<512x8xf32, #tpu.memory_space<vmem>>, vector<128x8xf32>
    tpu.vector_store %arg9[%c128_36, %c0_37], %39 {strides = array<i32>} : memref<512x8xf32, #tpu.memory_space<vmem>>, vector<128x8xf32>,
    %c256 = arith.constant 256 : index
    %c0_38 = arith.constant 0 : index
    %41 = vector.load %arg8[%c256, %c0_38] : memref<544x12xf32, #tpu.memory_space<vmem>>, vector<128x12xf32>
    %cst_39 = arith.constant dense<0.000000e+00> : vector<128x8xf32>
    %42 = tpu.matmul %41, %9, %cst_39 {dimension_numbers = #tpu.dot_dimension_numbers<[1], [0], [0], [1], [0, 0, 1, 1], [], []>} : vector<128x12xf32>, vector<12x8xf32>, vector<128x8xf32> -> vector<128x8xf32>
    %c272 = arith.constant 272 : index
    %c0_40 = arith.constant 0 : index
    %43 = vector.load %arg8[%c272, %c0_40] : memref<544x12xf32, #tpu.memory_space<vmem>>, vector<128x12xf32>
    %cst_41 = arith.constant dense<0.000000e+00> : vector<128x8xf32>
    %44 = tpu.matmul %43, %11, %cst_41 {dimension_numbers = #tpu.dot_dimension_numbers<[1], [0], [0], [1], [0, 0, 1, 1], [], []>} : vector<128x12xf32>, vector<12x8xf32>, vector<128x8xf32> -> vector<128x8xf32>
    %45 = arith.addf %42, %44 : vector<128x8xf32>
    %c288 = arith.constant 288 : index
    %c0_42 = arith.constant 0 : index
    %46 = vector.load %arg8[%c288, %c0_42] : memref<544x12xf32, #tpu.memory_space<vmem>>, vector<128x12xf32>
    %cst_43 = arith.constant dense<0.000000e+00> : vector<128x8xf32>
    %47 = tpu.matmul %46, %13, %cst_43 {dimension_numbers = #tpu.dot_dimension_numbers<[1], [0], [0], [1], [0, 0, 1, 1], [], []>} : vector<128x12xf32>, vector<12x8xf32>, vector<128x8xf32> -> vector<128x8xf32>
    %48 = arith.addf %45, %47 : vector<128x8xf32>
    %49 = vector.broadcast %14 : vector<1x8xf32> to vector<128x8xf32>
    %50 = arith.addf %48, %49 : vector<128x8xf32>
    %cst_44 = arith.constant 0.000000e+00 : f32
    %51 = vector.broadcast %cst_44 : f32 to vector<128x8xf32>
    %52 = arith.maximumf %50, %51 : vector<128x8xf32>
    %c256_45 = arith.constant 256 : index
    %c0_46 = arith.constant 0 : index
    %53 = vector.load %arg9[%c256_45, %c0_46] : memref<512x8xf32, #tpu.memory_space<vmem>>, vector<128x8xf32>
    tpu.vector_store %arg9[%c256_45, %c0_46], %52 {strides = array<i32>} : memref<512x8xf32, #tpu.memory_space<vmem>>, vector<128x8xf32>,
    %c384 = arith.constant 384 : index
    %c0_47 = arith.constant 0 : index
    %54 = vector.load %arg8[%c384, %c0_47] : memref<544x12xf32, #tpu.memory_space<vmem>>, vector<128x12xf32>
    %cst_48 = arith.constant dense<0.000000e+00> : vector<128x8xf32>
    %55 = tpu.matmul %54, %9, %cst_48 {dimension_numbers = #tpu.dot_dimension_numbers<[1], [0], [0], [1], [0, 0, 1, 1], [], []>} : vector<128x12xf32>, vector<12x8xf32>, vector<128x8xf32> -> vector<128x8xf32>
    %c400 = arith.constant 400 : index
    %c0_49 = arith.constant 0 : index
    %56 = vector.load %arg8[%c400, %c0_49] : memref<544x12xf32, #tpu.memory_space<vmem>>, vector<128x12xf32>
    %cst_50 = arith.constant dense<0.000000e+00> : vector<128x8xf32>
    %57 = tpu.matmul %56, %11, %cst_50 {dimension_numbers = #tpu.dot_dimension_numbers<[1], [0], [0], [1], [0, 0, 1, 1], [], []>} : vector<128x12xf32>, vector<12x8xf32>, vector<128x8xf32> -> vector<128x8xf32>
    %58 = arith.addf %55, %57 : vector<128x8xf32>
    %c416 = arith.constant 416 : index
    %c0_51 = arith.constant 0 : index
    %59 = vector.load %arg8[%c416, %c0_51] : memref<544x12xf32, #tpu.memory_space<vmem>>, vector<128x12xf32>
    %cst_52 = arith.constant dense<0.000000e+00> : vector<128x8xf32>
    %60 = tpu.matmul %59, %13, %cst_52 {dimension_numbers = #tpu.dot_dimension_numbers<[1], [0], [0], [1], [0, 0, 1, 1], [], []>} : vector<128x12xf32>, vector<12x8xf32>, vector<128x8xf32> -> vector<128x8xf32>
    %61 = arith.addf %58, %60 : vector<128x8xf32>
    %62 = vector.broadcast %14 : vector<1x8xf32> to vector<128x8xf32>
    %63 = arith.addf %61, %62 : vector<128x8xf32>
    %cst_53 = arith.constant 0.000000e+00 : f32
    %64 = vector.broadcast %cst_53 : f32 to vector<128x8xf32>
    %65 = arith.maximumf %63, %64 : vector<128x8xf32>
    %c384_54 = arith.constant 384 : index
    %c0_55 = arith.constant 0 : index
    %66 = vector.load %arg9[%c384_54, %c0_55] : memref<512x8xf32, #tpu.memory_space<vmem>>, vector<128x8xf32>
    tpu.vector_store %arg9[%c384_54, %c0_55], %65 {strides = array<i32>} : memref<512x8xf32, #tpu.memory_space<vmem>>, vector<128x8xf32>,
    %cst_56 = arith.constant 0.000000e+00 : f32
    %67 = vector.broadcast %cst_56 : f32 to vector<136x8xf32>
    %c0_57 = arith.constant 0 : index
    %c0_58 = arith.constant 0 : index
    %68 = vector.load %arg10[%c0_57, %c0_58] : memref<136x8xf32, #tpu.memory_space<vmem>>, vector<136x8xf32>
    tpu.vector_store %arg10[%c0_57, %c0_58], %67 {strides = array<i32>} : memref<136x8xf32, #tpu.memory_space<vmem>>, vector<136x8xf32>,
    %c0_59 = arith.constant 0 : index
    %c0_60 = arith.constant 0 : index
    %69 = tpu.strided_load %arg9[%c0_59, %c0_60] {strides = array<i32: 2, 1>} : memref<512x8xf32, #tpu.memory_space<vmem>>, vector<7x8xf32>
    %c1_61 = arith.constant 1 : index
    %c0_62 = arith.constant 0 : index
    %70 = tpu.strided_load %arg9[%c1_61, %c0_62] {strides = array<i32: 2, 1>} : memref<512x8xf32, #tpu.memory_space<vmem>>, vector<7x8xf32>
    %c16_63 = arith.constant 16 : index
    %c0_64 = arith.constant 0 : index
    %71 = tpu.strided_load %arg9[%c16_63, %c0_64] {strides = array<i32: 2, 1>} : memref<512x8xf32, #tpu.memory_space<vmem>>, vector<7x8xf32>
    %c17 = arith.constant 17 : index
    %c0_65 = arith.constant 0 : index
    %72 = tpu.strided_load %arg9[%c17, %c0_65] {strides = array<i32: 2, 1>} : memref<512x8xf32, #tpu.memory_space<vmem>>, vector<7x8xf32>
    %73 = arith.maximumf %69, %70 : vector<7x8xf32>
    %74 = arith.maximumf %71, %72 : vector<7x8xf32>
    %75 = arith.maximumf %73, %74 : vector<7x8xf32>
    %c0_66 = arith.constant 0 : index
    %c0_67 = arith.constant 0 : index
    %76 = vector.load %arg10[%c0_66, %c0_67] : memref<136x8xf32, #tpu.memory_space<vmem>>, vector<7x8xf32>
    tpu.vector_store %arg10[%c0_66, %c0_67], %75 {strides = array<i32>} : memref<136x8xf32, #tpu.memory_space<vmem>>, vector<7x8xf32>,
    %c32_68 = arith.constant 32 : index
    %c0_69 = arith.constant 0 : index
    %77 = tpu.strided_load %arg9[%c32_68, %c0_69] {strides = array<i32: 2, 1>} : memref<512x8xf32, #tpu.memory_space<vmem>>, vector<7x8xf32>
    %c33 = arith.constant 33 : index
    %c0_70 = arith.constant 0 : index
    %78 = tpu.strided_load %arg9[%c33, %c0_70] {strides = array<i32: 2, 1>} : memref<512x8xf32, #tpu.memory_space<vmem>>, vector<7x8xf32>
    %c48 = arith.constant 48 : index
    %c0_71 = arith.constant 0 : index
    %79 = tpu.strided_load %arg9[%c48, %c0_71] {strides = array<i32: 2, 1>} : memref<512x8xf32, #tpu.memory_space<vmem>>, vector<7x8xf32>
    %c49 = arith.constant 49 : index
    %c0_72 = arith.constant 0 : index
    %80 = tpu.strided_load %arg9[%c49, %c0_72] {strides = array<i32: 2, 1>} : memref<512x8xf32, #tpu.memory_space<vmem>>, vector<7x8xf32>
    %81 = arith.maximumf %77, %78 : vector<7x8xf32>
    %82 = arith.maximumf %79, %80 : vector<7x8xf32>
    %83 = arith.maximumf %81, %82 : vector<7x8xf32>
    %c8_73 = arith.constant 8 : index
    %c0_74 = arith.constant 0 : index
    %84 = vector.load %arg10[%c8_73, %c0_74] : memref<136x8xf32, #tpu.memory_space<vmem>>, vector<7x8xf32>
    tpu.vector_store %arg10[%c8_73, %c0_74], %83 {strides = array<i32>} : memref<136x8xf32, #tpu.memory_space<vmem>>, vector<7x8xf32>,
    %c64 = arith.constant 64 : index
    %c0_75 = arith.constant 0 : index
    %85 = tpu.strided_load %arg9[%c64, %c0_75] {strides = array<i32: 2, 1>} : memref<512x8xf32, #tpu.memory_space<vmem>>, vector<7x8xf32>
    %c65 = arith.constant 65 : index
    %c0_76 = arith.constant 0 : index
    %86 = tpu.strided_load %arg9[%c65, %c0_76] {strides = array<i32: 2, 1>} : memref<512x8xf32, #tpu.memory_space<vmem>>, vector<7x8xf32>
    %c80 = arith.constant 80 : index
    %c0_77 = arith.constant 0 : index
    %87 = tpu.strided_load %arg9[%c80, %c0_77] {strides = array<i32: 2, 1>} : memref<512x8xf32, #tpu.memory_space<vmem>>, vector<7x8xf32>
    %c81 = arith.constant 81 : index
    %c0_78 = arith.constant 0 : index
    %88 = tpu.strided_load %arg9[%c81, %c0_78] {strides = array<i32: 2, 1>} : memref<512x8xf32, #tpu.memory_space<vmem>>, vector<7x8xf32>
    %89 = arith.maximumf %85, %86 : vector<7x8xf32>
    %90 = arith.maximumf %87, %88 : vector<7x8xf32>
    %91 = arith.maximumf %89, %90 : vector<7x8xf32>
    %c16_79 = arith.constant 16 : index
    %c0_80 = arith.constant 0 : index
    %92 = vector.load %arg10[%c16_79, %c0_80] : memref<136x8xf32, #tpu.memory_space<vmem>>, vector<7x8xf32>
    tpu.vector_store %arg10[%c16_79, %c0_80], %91 {strides = array<i32>} : memref<136x8xf32, #tpu.memory_space<vmem>>, vector<7x8xf32>,
    %c96 = arith.constant 96 : index
    %c0_81 = arith.constant 0 : index
    %93 = tpu.strided_load %arg9[%c96, %c0_81] {strides = array<i32: 2, 1>} : memref<512x8xf32, #tpu.memory_space<vmem>>, vector<7x8xf32>
    %c97 = arith.constant 97 : index
    %c0_82 = arith.constant 0 : index
    %94 = tpu.strided_load %arg9[%c97, %c0_82] {strides = array<i32: 2, 1>} : memref<512x8xf32, #tpu.memory_space<vmem>>, vector<7x8xf32>
    %c112 = arith.constant 112 : index
    %c0_83 = arith.constant 0 : index
    %95 = tpu.strided_load %arg9[%c112, %c0_83] {strides = array<i32: 2, 1>} : memref<512x8xf32, #tpu.memory_space<vmem>>, vector<7x8xf32>
    %c113 = arith.constant 113 : index
    %c0_84 = arith.constant 0 : index
    %96 = tpu.strided_load %arg9[%c113, %c0_84] {strides = array<i32: 2, 1>} : memref<512x8xf32, #tpu.memory_space<vmem>>, vector<7x8xf32>
    %97 = arith.maximumf %93, %94 : vector<7x8xf32>
    %98 = arith.maximumf %95, %96 : vector<7x8xf32>
    %99 = arith.maximumf %97, %98 : vector<7x8xf32>
    %c24 = arith.constant 24 : index
    %c0_85 = arith.constant 0 : index
    %100 = vector.load %arg10[%c24, %c0_85] : memref<136x8xf32, #tpu.memory_space<vmem>>, vector<7x8xf32>
    tpu.vector_store %arg10[%c24, %c0_85], %99 {strides = array<i32>} : memref<136x8xf32, #tpu.memory_space<vmem>>, vector<7x8xf32>,
    %c128_86 = arith.constant 128 : index
    %c0_87 = arith.constant 0 : index
    %101 = tpu.strided_load %arg9[%c128_86, %c0_87] {strides = array<i32: 2, 1>} : memref<512x8xf32, #tpu.memory_space<vmem>>, vector<7x8xf32>
    %c129 = arith.constant 129 : index
    %c0_88 = arith.constant 0 : index
    %102 = tpu.strided_load %arg9[%c129, %c0_88] {strides = array<i32: 2, 1>} : memref<512x8xf32, #tpu.memory_space<vmem>>, vector<7x8xf32>
    %c144_89 = arith.constant 144 : index
    %c0_90 = arith.constant 0 : index
    %103 = tpu.strided_load %arg9[%c144_89, %c0_90] {strides = array<i32: 2, 1>} : memref<512x8xf32, #tpu.memory_space<vmem>>, vector<7x8xf32>
    %c145 = arith.constant 145 : index
    %c0_91 = arith.constant 0 : index
    %104 = tpu.strided_load %arg9[%c145, %c0_91] {strides = array<i32: 2, 1>} : memref<512x8xf32, #tpu.memory_space<vmem>>, vector<7x8xf32>
    %105 = arith.maximumf %101, %102 : vector<7x8xf32>
    %106 = arith.maximumf %103, %104 : vector<7x8xf32>
    %107 = arith.maximumf %105, %106 : vector<7x8xf32>
    %c32_92 = arith.constant 32 : index
    %c0_93 = arith.constant 0 : index
    %108 = vector.load %arg10[%c32_92, %c0_93] : memref<136x8xf32, #tpu.memory_space<vmem>>, vector<7x8xf32>
    tpu.vector_store %arg10[%c32_92, %c0_93], %107 {strides = array<i32>} : memref<136x8xf32, #tpu.memory_space<vmem>>, vector<7x8xf32>,
    %c160_94 = arith.constant 160 : index
    %c0_95 = arith.constant 0 : index
    %109 = tpu.strided_load %arg9[%c160_94, %c0_95] {strides = array<i32: 2, 1>} : memref<512x8xf32, #tpu.memory_space<vmem>>, vector<7x8xf32>
    %c161 = arith.constant 161 : index
    %c0_96 = arith.constant 0 : index
    %110 = tpu.strided_load %arg9[%c161, %c0_96] {strides = array<i32: 2, 1>} : memref<512x8xf32, #tpu.memory_space<vmem>>, vector<7x8xf32>
    %c176 = arith.constant 176 : index
    %c0_97 = arith.constant 0 : index
    %111 = tpu.strided_load %arg9[%c176, %c0_97] {strides = array<i32: 2, 1>} : memref<512x8xf32, #tpu.memory_space<vmem>>, vector<7x8xf32>
    %c177 = arith.constant 177 : index
    %c0_98 = arith.constant 0 : index
    %112 = tpu.strided_load %arg9[%c177, %c0_98] {strides = array<i32: 2, 1>} : memref<512x8xf32, #tpu.memory_space<vmem>>, vector<7x8xf32>
    %113 = arith.maximumf %109, %110 : vector<7x8xf32>
    %114 = arith.maximumf %111, %112 : vector<7x8xf32>
    %115 = arith.maximumf %113, %114 : vector<7x8xf32>
    %c40 = arith.constant 40 : index
    %c0_99 = arith.constant 0 : index
    %116 = vector.load %arg10[%c40, %c0_99] : memref<136x8xf32, #tpu.memory_space<vmem>>, vector<7x8xf32>
    tpu.vector_store %arg10[%c40, %c0_99], %115 {strides = array<i32>} : memref<136x8xf32, #tpu.memory_space<vmem>>, vector<7x8xf32>,
    %c192 = arith.constant 192 : index
    %c0_100 = arith.constant 0 : index
    %117 = tpu.strided_load %arg9[%c192, %c0_100] {strides = array<i32: 2, 1>} : memref<512x8xf32, #tpu.memory_space<vmem>>, vector<7x8xf32>
    %c193 = arith.constant 193 : index
    %c0_101 = arith.constant 0 : index
    %118 = tpu.strided_load %arg9[%c193, %c0_101] {strides = array<i32: 2, 1>} : memref<512x8xf32, #tpu.memory_space<vmem>>, vector<7x8xf32>
    %c208 = arith.constant 208 : index
    %c0_102 = arith.constant 0 : index
    %119 = tpu.strided_load %arg9[%c208, %c0_102] {strides = array<i32: 2, 1>} : memref<512x8xf32, #tpu.memory_space<vmem>>, vector<7x8xf32>
    %c209 = arith.constant 209 : index
    %c0_103 = arith.constant 0 : index
    %120 = tpu.strided_load %arg9[%c209, %c0_103] {strides = array<i32: 2, 1>} : memref<512x8xf32, #tpu.memory_space<vmem>>, vector<7x8xf32>
    %121 = arith.maximumf %117, %118 : vector<7x8xf32>
    %122 = arith.maximumf %119, %120 : vector<7x8xf32>
    %123 = arith.maximumf %121, %122 : vector<7x8xf32>
    %c48_104 = arith.constant 48 : index
    %c0_105 = arith.constant 0 : index
    %124 = vector.load %arg10[%c48_104, %c0_105] : memref<136x8xf32, #tpu.memory_space<vmem>>, vector<7x8xf32>
    tpu.vector_store %arg10[%c48_104, %c0_105], %123 {strides = array<i32>} : memref<136x8xf32, #tpu.memory_space<vmem>>, vector<7x8xf32>,
    %c256_106 = arith.constant 256 : index
    %c0_107 = arith.constant 0 : index
    %125 = tpu.strided_load %arg9[%c256_106, %c0_107] {strides = array<i32: 2, 1>} : memref<512x8xf32, #tpu.memory_space<vmem>>, vector<7x8xf32>
    %c257 = arith.constant 257 : index
    %c0_108 = arith.constant 0 : index
    %126 = tpu.strided_load %arg9[%c257, %c0_108] {strides = array<i32: 2, 1>} : memref<512x8xf32, #tpu.memory_space<vmem>>, vector<7x8xf32>
    %c272_109 = arith.constant 272 : index
    %c0_110 = arith.constant 0 : index
    %127 = tpu.strided_load %arg9[%c272_109, %c0_110] {strides = array<i32: 2, 1>} : memref<512x8xf32, #tpu.memory_space<vmem>>, vector<7x8xf32>
    %c273 = arith.constant 273 : index
    %c0_111 = arith.constant 0 : index
    %128 = tpu.strided_load %arg9[%c273, %c0_111] {strides = array<i32: 2, 1>} : memref<512x8xf32, #tpu.memory_space<vmem>>, vector<7x8xf32>
    %129 = arith.maximumf %125, %126 : vector<7x8xf32>
    %130 = arith.maximumf %127, %128 : vector<7x8xf32>
    %131 = arith.maximumf %129, %130 : vector<7x8xf32>
    %c56 = arith.constant 56 : index
    %c0_112 = arith.constant 0 : index
    %132 = vector.load %arg10[%c56, %c0_112] : memref<136x8xf32, #tpu.memory_space<vmem>>, vector<7x8xf32>
    tpu.vector_store %arg10[%c56, %c0_112], %131 {strides = array<i32>} : memref<136x8xf32, #tpu.memory_space<vmem>>, vector<7x8xf32>,
    %c288_113 = arith.constant 288 : index
    %c0_114 = arith.constant 0 : index
    %133 = tpu.strided_load %arg9[%c288_113, %c0_114] {strides = array<i32: 2, 1>} : memref<512x8xf32, #tpu.memory_space<vmem>>, vector<7x8xf32>
    %c289 = arith.constant 289 : index
    %c0_115 = arith.constant 0 : index
    %134 = tpu.strided_load %arg9[%c289, %c0_115] {strides = array<i32: 2, 1>} : memref<512x8xf32, #tpu.memory_space<vmem>>, vector<7x8xf32>
    %c304 = arith.constant 304 : index
    %c0_116 = arith.constant 0 : index
    %135 = tpu.strided_load %arg9[%c304, %c0_116] {strides = array<i32: 2, 1>} : memref<512x8xf32, #tpu.memory_space<vmem>>, vector<7x8xf32>
    %c305 = arith.constant 305 : index
    %c0_117 = arith.constant 0 : index
    %136 = tpu.strided_load %arg9[%c305, %c0_117] {strides = array<i32: 2, 1>} : memref<512x8xf32, #tpu.memory_space<vmem>>, vector<7x8xf32>
    %137 = arith.maximumf %133, %134 : vector<7x8xf32>
    %138 = arith.maximumf %135, %136 : vector<7x8xf32>
    %139 = arith.maximumf %137, %138 : vector<7x8xf32>
    %c64_118 = arith.constant 64 : index
    %c0_119 = arith.constant 0 : index
    %140 = vector.load %arg10[%c64_118, %c0_119] : memref<136x8xf32, #tpu.memory_space<vmem>>, vector<7x8xf32>
    tpu.vector_store %arg10[%c64_118, %c0_119], %139 {strides = array<i32>} : memref<136x8xf32, #tpu.memory_space<vmem>>, vector<7x8xf32>,
    %c320 = arith.constant 320 : index
    %c0_120 = arith.constant 0 : index
    %141 = tpu.strided_load %arg9[%c320, %c0_120] {strides = array<i32: 2, 1>} : memref<512x8xf32, #tpu.memory_space<vmem>>, vector<7x8xf32>
    %c321 = arith.constant 321 : index
    %c0_121 = arith.constant 0 : index
    %142 = tpu.strided_load %arg9[%c321, %c0_121] {strides = array<i32: 2, 1>} : memref<512x8xf32, #tpu.memory_space<vmem>>, vector<7x8xf32>
    %c336 = arith.constant 336 : index
    %c0_122 = arith.constant 0 : index
    %143 = tpu.strided_load %arg9[%c336, %c0_122] {strides = array<i32: 2, 1>} : memref<512x8xf32, #tpu.memory_space<vmem>>, vector<7x8xf32>
    %c337 = arith.constant 337 : index
    %c0_123 = arith.constant 0 : index
    %144 = tpu.strided_load %arg9[%c337, %c0_123] {strides = array<i32: 2, 1>} : memref<512x8xf32, #tpu.memory_space<vmem>>, vector<7x8xf32>
    %145 = arith.maximumf %141, %142 : vector<7x8xf32>
    %146 = arith.maximumf %143, %144 : vector<7x8xf32>
    %147 = arith.maximumf %145, %146 : vector<7x8xf32>
    %c72 = arith.constant 72 : index
    %c0_124 = arith.constant 0 : index
    %148 = vector.load %arg10[%c72, %c0_124] : memref<136x8xf32, #tpu.memory_space<vmem>>, vector<7x8xf32>
    tpu.vector_store %arg10[%c72, %c0_124], %147 {strides = array<i32>} : memref<136x8xf32, #tpu.memory_space<vmem>>, vector<7x8xf32>,
    %c352 = arith.constant 352 : index
    %c0_125 = arith.constant 0 : index
    %149 = tpu.strided_load %arg9[%c352, %c0_125] {strides = array<i32: 2, 1>} : memref<512x8xf32, #tpu.memory_space<vmem>>, vector<7x8xf32>
    %c353 = arith.constant 353 : index
    %c0_126 = arith.constant 0 : index
    %150 = tpu.strided_load %arg9[%c353, %c0_126] {strides = array<i32: 2, 1>} : memref<512x8xf32, #tpu.memory_space<vmem>>, vector<7x8xf32>
    %c368 = arith.constant 368 : index
    %c0_127 = arith.constant 0 : index
    %151 = tpu.strided_load %arg9[%c368, %c0_127] {strides = array<i32: 2, 1>} : memref<512x8xf32, #tpu.memory_space<vmem>>, vector<7x8xf32>
    %c369 = arith.constant 369 : index
    %c0_128 = arith.constant 0 : index
    %152 = tpu.strided_load %arg9[%c369, %c0_128] {strides = array<i32: 2, 1>} : memref<512x8xf32, #tpu.memory_space<vmem>>, vector<7x8xf32>
    %153 = arith.maximumf %149, %150 : vector<7x8xf32>
    %154 = arith.maximumf %151, %152 : vector<7x8xf32>
    %155 = arith.maximumf %153, %154 : vector<7x8xf32>
    %c80_129 = arith.constant 80 : index
    %c0_130 = arith.constant 0 : index
    %156 = vector.load %arg10[%c80_129, %c0_130] : memref<136x8xf32, #tpu.memory_space<vmem>>, vector<7x8xf32>
    tpu.vector_store %arg10[%c80_129, %c0_130], %155 {strides = array<i32>} : memref<136x8xf32, #tpu.memory_space<vmem>>, vector<7x8xf32>,
    %c384_131 = arith.constant 384 : index
    %c0_132 = arith.constant 0 : index
    %157 = tpu.strided_load %arg9[%c384_131, %c0_132] {strides = array<i32: 2, 1>} : memref<512x8xf32, #tpu.memory_space<vmem>>, vector<7x8xf32>
    %c385 = arith.constant 385 : index
    %c0_133 = arith.constant 0 : index
    %158 = tpu.strided_load %arg9[%c385, %c0_133] {strides = array<i32: 2, 1>} : memref<512x8xf32, #tpu.memory_space<vmem>>, vector<7x8xf32>
    %c400_134 = arith.constant 400 : index
    %c0_135 = arith.constant 0 : index
    %159 = tpu.strided_load %arg9[%c400_134, %c0_135] {strides = array<i32: 2, 1>} : memref<512x8xf32, #tpu.memory_space<vmem>>, vector<7x8xf32>
    %c401 = arith.constant 401 : index
    %c0_136 = arith.constant 0 : index
    %160 = tpu.strided_load %arg9[%c401, %c0_136] {strides = array<i32: 2, 1>} : memref<512x8xf32, #tpu.memory_space<vmem>>, vector<7x8xf32>
    %161 = arith.maximumf %157, %158 : vector<7x8xf32>
    %162 = arith.maximumf %159, %160 : vector<7x8xf32>
    %163 = arith.maximumf %161, %162 : vector<7x8xf32>
    %c88 = arith.constant 88 : index
    %c0_137 = arith.constant 0 : index
    %164 = vector.load %arg10[%c88, %c0_137] : memref<136x8xf32, #tpu.memory_space<vmem>>, vector<7x8xf32>
    tpu.vector_store %arg10[%c88, %c0_137], %163 {strides = array<i32>} : memref<136x8xf32, #tpu.memory_space<vmem>>, vector<7x8xf32>,
    %c416_138 = arith.constant 416 : index
    %c0_139 = arith.constant 0 : index
    %165 = tpu.strided_load %arg9[%c416_138, %c0_139] {strides = array<i32: 2, 1>} : memref<512x8xf32, #tpu.memory_space<vmem>>, vector<7x8xf32>
    %c417 = arith.constant 417 : index
    %c0_140 = arith.constant 0 : index
    %166 = tpu.strided_load %arg9[%c417, %c0_140] {strides = array<i32: 2, 1>} : memref<512x8xf32, #tpu.memory_space<vmem>>, vector<7x8xf32>
    %c432 = arith.constant 432 : index
    %c0_141 = arith.constant 0 : index
    %167 = tpu.strided_load %arg9[%c432, %c0_141] {strides = array<i32: 2, 1>} : memref<512x8xf32, #tpu.memory_space<vmem>>, vector<7x8xf32>
    %c433 = arith.constant 433 : index
    %c0_142 = arith.constant 0 : index
    %168 = tpu.strided_load %arg9[%c433, %c0_142] {strides = array<i32: 2, 1>} : memref<512x8xf32, #tpu.memory_space<vmem>>, vector<7x8xf32>
    %169 = arith.maximumf %165, %166 : vector<7x8xf32>
    %170 = arith.maximumf %167, %168 : vector<7x8xf32>
    %171 = arith.maximumf %169, %170 : vector<7x8xf32>
    %c96_143 = arith.constant 96 : index
    %c0_144 = arith.constant 0 : index
    %172 = vector.load %arg10[%c96_143, %c0_144] : memref<136x8xf32, #tpu.memory_space<vmem>>, vector<7x8xf32>
    tpu.vector_store %arg10[%c96_143, %c0_144], %171 {strides = array<i32>} : memref<136x8xf32, #tpu.memory_space<vmem>>, vector<7x8xf32>,
    %c448 = arith.constant 448 : index
    %c0_145 = arith.constant 0 : index
    %173 = tpu.strided_load %arg9[%c448, %c0_145] {strides = array<i32: 2, 1>} : memref<512x8xf32, #tpu.memory_space<vmem>>, vector<7x8xf32>
    %c449 = arith.constant 449 : index
    %c0_146 = arith.constant 0 : index
    %174 = tpu.strided_load %arg9[%c449, %c0_146] {strides = array<i32: 2, 1>} : memref<512x8xf32, #tpu.memory_space<vmem>>, vector<7x8xf32>
    %c464 = arith.constant 464 : index
    %c0_147 = arith.constant 0 : index
    %175 = tpu.strided_load %arg9[%c464, %c0_147] {strides = array<i32: 2, 1>} : memref<512x8xf32, #tpu.memory_space<vmem>>, vector<7x8xf32>
    %c465 = arith.constant 465 : index
    %c0_148 = arith.constant 0 : index
    %176 = tpu.strided_load %arg9[%c465, %c0_148] {strides = array<i32: 2, 1>} : memref<512x8xf32, #tpu.memory_space<vmem>>, vector<7x8xf32>
    %177 = arith.maximumf %173, %174 : vector<7x8xf32>
    %178 = arith.maximumf %175, %176 : vector<7x8xf32>
    %179 = arith.maximumf %177, %178 : vector<7x8xf32>
    %c104 = arith.constant 104 : index
    %c0_149 = arith.constant 0 : index
    %180 = vector.load %arg10[%c104, %c0_149] : memref<136x8xf32, #tpu.memory_space<vmem>>, vector<7x8xf32>
    tpu.vector_store %arg10[%c104, %c0_149], %179 {strides = array<i32>} : memref<136x8xf32, #tpu.memory_space<vmem>>, vector<7x8xf32>,
    %c0_150 = arith.constant 0 : index
    %c0_151 = arith.constant 0 : index
    %181 = vector.load %arg10[%c0_150, %c0_151] : memref<136x8xf32, #tpu.memory_space<vmem>>, vector<128x8xf32>
    %c0_152 = arith.constant 0 : index
    %c0_153 = arith.constant 0 : index
    %182 = vector.load %arg11[%c0_152, %c0_153] : memref<128x24xf32, #tpu.memory_space<vmem>>, vector<128x8xf32>
    tpu.vector_store %arg11[%c0_152, %c0_153], %181 {strides = array<i32>} : memref<128x24xf32, #tpu.memory_space<vmem>>, vector<128x8xf32>,
    %c1_154 = arith.constant 1 : index
    %c0_155 = arith.constant 0 : index
    %183 = vector.load %arg10[%c1_154, %c0_155] : memref<136x8xf32, #tpu.memory_space<vmem>>, vector<128x8xf32>
    %c0_156 = arith.constant 0 : index
    %c8_157 = arith.constant 8 : index
    %184 = vector.load %arg11[%c0_156, %c8_157] : memref<128x24xf32, #tpu.memory_space<vmem>>, vector<128x8xf32>
    tpu.vector_store %arg11[%c0_156, %c8_157], %183 {strides = array<i32>} : memref<128x24xf32, #tpu.memory_space<vmem>>, vector<128x8xf32>,
    %c2_158 = arith.constant 2 : index
    %c0_159 = arith.constant 0 : index
    %185 = vector.load %arg10[%c2_158, %c0_159] : memref<136x8xf32, #tpu.memory_space<vmem>>, vector<128x8xf32>
    %c0_160 = arith.constant 0 : index
    %c16_161 = arith.constant 16 : index
    %186 = vector.load %arg11[%c0_160, %c16_161] : memref<128x24xf32, #tpu.memory_space<vmem>>, vector<128x8xf32>
    tpu.vector_store %arg11[%c0_160, %c16_161], %185 {strides = array<i32>} : memref<128x24xf32, #tpu.memory_space<vmem>>, vector<128x8xf32>,
    %c0_162 = arith.constant 0 : index
    %c0_163 = arith.constant 0 : index
    %c0_164 = arith.constant 0 : index
    %187 = vector.load %arg3[%c0_162, %c0_163, %c0_164] : memref<3x24x16xf32, #tpu.memory_space<vmem>>, vector<1x24x16xf32>
    %188 = vector.shape_cast %187 : vector<1x24x16xf32> to vector<24x16xf32>
    %c1_165 = arith.constant 1 : index
    %c0_166 = arith.constant 0 : index
    %c0_167 = arith.constant 0 : index
    %189 = vector.load %arg3[%c1_165, %c0_166, %c0_167] : memref<3x24x16xf32, #tpu.memory_space<vmem>>, vector<1x24x16xf32>
    %190 = vector.shape_cast %189 : vector<1x24x16xf32> to vector<24x16xf32>
    %c2_168 = arith.constant 2 : index
    %c0_169 = arith.constant 0 : index
    %c0_170 = arith.constant 0 : index
    %191 = vector.load %arg3[%c2_168, %c0_169, %c0_170] : memref<3x24x16xf32, #tpu.memory_space<vmem>>, vector<1x24x16xf32>
    %192 = vector.shape_cast %191 : vector<1x24x16xf32> to vector<24x16xf32>
    %c0_171 = arith.constant 0 : index
    %c0_172 = arith.constant 0 : index
    %193 = vector.load %arg11[%c0_171, %c0_172] : memref<128x24xf32, #tpu.memory_space<vmem>>, vector<112x24xf32>
    %cst_173 = arith.constant dense<0.000000e+00> : vector<112x16xf32>
    %194 = tpu.matmul %193, %188, %cst_173 {dimension_numbers = #tpu.dot_dimension_numbers<[1], [0], [0], [1], [0, 0, 1, 1], [], []>} : vector<112x24xf32>, vector<24x16xf32>, vector<112x16xf32> -> vector<112x16xf32>
    %c8_174 = arith.constant 8 : index
    %c0_175 = arith.constant 0 : index
    %195 = vector.load %arg11[%c8_174, %c0_175] : memref<128x24xf32, #tpu.memory_space<vmem>>, vector<112x24xf32>
    %cst_176 = arith.constant dense<0.000000e+00> : vector<112x16xf32>
    %196 = tpu.matmul %195, %190, %cst_176 {dimension_numbers = #tpu.dot_dimension_numbers<[1], [0], [0], [1], [0, 0, 1, 1], [], []>} : vector<112x24xf32>, vector<24x16xf32>, vector<112x16xf32> -> vector<112x16xf32>
    %197 = arith.addf %194, %196 : vector<112x16xf32>
    %c16_177 = arith.constant 16 : index
    %c0_178 = arith.constant 0 : index
    %198 = vector.load %arg11[%c16_177, %c0_178] : memref<128x24xf32, #tpu.memory_space<vmem>>, vector<112x24xf32>
    %cst_179 = arith.constant dense<0.000000e+00> : vector<112x16xf32>
    %199 = tpu.matmul %198, %192, %cst_179 {dimension_numbers = #tpu.dot_dimension_numbers<[1], [0], [0], [1], [0, 0, 1, 1], [], []>} : vector<112x24xf32>, vector<24x16xf32>, vector<112x16xf32> -> vector<112x16xf32>
    %200 = arith.addf %197, %199 : vector<112x16xf32>
    %c0_180 = arith.constant 0 : index
    %c0_181 = arith.constant 0 : index
    %201 = vector.load %arg4[%c0_180, %c0_181] : memref<1x16xf32, #tpu.memory_space<vmem>>, vector<1x16xf32>
    %202 = vector.broadcast %201 : vector<1x16xf32> to vector<112x16xf32>
    %203 = arith.addf %200, %202 : vector<112x16xf32>
    %cst_182 = arith.constant 0.000000e+00 : f32
    %204 = vector.broadcast %cst_182 : f32 to vector<112x16xf32>
    %205 = arith.maximumf %203, %204 : vector<112x16xf32>
    %c0_183 = arith.constant 0 : index
    %c0_184 = arith.constant 0 : index
    %206 = vector.load %arg12[%c0_183, %c0_184] : memref<112x16xf32, #tpu.memory_space<vmem>>, vector<112x16xf32>
    tpu.vector_store %arg12[%c0_183, %c0_184], %205 {strides = array<i32>} : memref<112x16xf32, #tpu.memory_space<vmem>>, vector<112x16xf32>,
    %c0_185 = arith.constant 0 : index
    %c0_186 = arith.constant 0 : index
    %207 = vector.load %arg12[%c0_185, %c0_186] : memref<112x16xf32, #tpu.memory_space<vmem>>, vector<2x16xf32>
    %c8_187 = arith.constant 8 : index
    %c0_188 = arith.constant 0 : index
    %208 = vector.load %arg12[%c8_187, %c0_188] : memref<112x16xf32, #tpu.memory_space<vmem>>, vector<2x16xf32>
    %209 = arith.maximumf %207, %208 : vector<2x16xf32>
    %cst_189 = arith.constant dense<0xFF800000> : vector<16xf32>
    %210 = vector.multi_reduction <maximumf>, %209, %cst_189 [0] : vector<2x16xf32> to vector<16xf32>
    %211 = vector.shape_cast %210 : vector<16xf32> to vector<1x16xf32>
    %c0_190 = arith.constant 0 : index
    %c0_191 = arith.constant 0 : index
    %212 = vector.load %arg13[%c0_190, %c0_191] : memref<2x64xf32, #tpu.memory_space<vmem>>, vector<1x16xf32>
    tpu.vector_store %arg13[%c0_190, %c0_191], %211 {strides = array<i32>} : memref<2x64xf32, #tpu.memory_space<vmem>>, vector<1x16xf32>,
    %c2_192 = arith.constant 2 : index
    %c0_193 = arith.constant 0 : index
    %213 = vector.load %arg12[%c2_192, %c0_193] : memref<112x16xf32, #tpu.memory_space<vmem>>, vector<2x16xf32>
    %c10 = arith.constant 10 : index
    %c0_194 = arith.constant 0 : index
    %214 = vector.load %arg12[%c10, %c0_194] : memref<112x16xf32, #tpu.memory_space<vmem>>, vector<2x16xf32>
    %215 = arith.maximumf %213, %214 : vector<2x16xf32>
    %cst_195 = arith.constant dense<0xFF800000> : vector<16xf32>
    %216 = vector.multi_reduction <maximumf>, %215, %cst_195 [0] : vector<2x16xf32> to vector<16xf32>
    %217 = vector.shape_cast %216 : vector<16xf32> to vector<1x16xf32>
    %c0_196 = arith.constant 0 : index
    %c16_197 = arith.constant 16 : index
    %218 = vector.load %arg13[%c0_196, %c16_197] : memref<2x64xf32, #tpu.memory_space<vmem>>, vector<1x16xf32>
    tpu.vector_store %arg13[%c0_196, %c16_197], %217 {strides = array<i32>} : memref<2x64xf32, #tpu.memory_space<vmem>>, vector<1x16xf32>,
    %c16_198 = arith.constant 16 : index
    %c0_199 = arith.constant 0 : index
    %219 = vector.load %arg12[%c16_198, %c0_199] : memref<112x16xf32, #tpu.memory_space<vmem>>, vector<2x16xf32>
    %c24_200 = arith.constant 24 : index
    %c0_201 = arith.constant 0 : index
    %220 = vector.load %arg12[%c24_200, %c0_201] : memref<112x16xf32, #tpu.memory_space<vmem>>, vector<2x16xf32>
    %221 = arith.maximumf %219, %220 : vector<2x16xf32>
    %cst_202 = arith.constant dense<0xFF800000> : vector<16xf32>
    %222 = vector.multi_reduction <maximumf>, %221, %cst_202 [0] : vector<2x16xf32> to vector<16xf32>
    %223 = vector.shape_cast %222 : vector<16xf32> to vector<1x16xf32>
    %c0_203 = arith.constant 0 : index
    %c32_204 = arith.constant 32 : index
    %224 = vector.load %arg13[%c0_203, %c32_204] : memref<2x64xf32, #tpu.memory_space<vmem>>, vector<1x16xf32>
    tpu.vector_store %arg13[%c0_203, %c32_204], %223 {strides = array<i32>} : memref<2x64xf32, #tpu.memory_space<vmem>>, vector<1x16xf32>,
    %c18 = arith.constant 18 : index
    %c0_205 = arith.constant 0 : index
    %225 = vector.load %arg12[%c18, %c0_205] : memref<112x16xf32, #tpu.memory_space<vmem>>, vector<2x16xf32>
    %c26 = arith.constant 26 : index
    %c0_206 = arith.constant 0 : index
    %226 = vector.load %arg12[%c26, %c0_206] : memref<112x16xf32, #tpu.memory_space<vmem>>, vector<2x16xf32>
    %227 = arith.maximumf %225, %226 : vector<2x16xf32>
    %cst_207 = arith.constant dense<0xFF800000> : vector<16xf32>
    %228 = vector.multi_reduction <maximumf>, %227, %cst_207 [0] : vector<2x16xf32> to vector<16xf32>
    %229 = vector.shape_cast %228 : vector<16xf32> to vector<1x16xf32>
    %c0_208 = arith.constant 0 : index
    %c48_209 = arith.constant 48 : index
    %230 = vector.load %arg13[%c0_208, %c48_209] : memref<2x64xf32, #tpu.memory_space<vmem>>, vector<1x16xf32>
    tpu.vector_store %arg13[%c0_208, %c48_209], %229 {strides = array<i32>} : memref<2x64xf32, #tpu.memory_space<vmem>>, vector<1x16xf32>,
    %c56_210 = arith.constant 56 : index
    %c0_211 = arith.constant 0 : index
    %231 = vector.load %arg12[%c56_210, %c0_211] : memref<112x16xf32, #tpu.memory_space<vmem>>, vector<2x16xf32>
    %c64_212 = arith.constant 64 : index
    %c0_213 = arith.constant 0 : index
    %232 = vector.load %arg12[%c64_212, %c0_213] : memref<112x16xf32, #tpu.memory_space<vmem>>, vector<2x16xf32>
    %233 = arith.maximumf %231, %232 : vector<2x16xf32>
    %cst_214 = arith.constant dense<0xFF800000> : vector<16xf32>
    %234 = vector.multi_reduction <maximumf>, %233, %cst_214 [0] : vector<2x16xf32> to vector<16xf32>
    %235 = vector.shape_cast %234 : vector<16xf32> to vector<1x16xf32>
    %c1_215 = arith.constant 1 : index
    %c0_216 = arith.constant 0 : index
    %236 = vector.load %arg13[%c1_215, %c0_216] : memref<2x64xf32, #tpu.memory_space<vmem>>, vector<1x16xf32>
    tpu.vector_store %arg13[%c1_215, %c0_216], %235 {strides = array<i32>} : memref<2x64xf32, #tpu.memory_space<vmem>>, vector<1x16xf32>,
    %c58 = arith.constant 58 : index
    %c0_217 = arith.constant 0 : index
    %237 = vector.load %arg12[%c58, %c0_217] : memref<112x16xf32, #tpu.memory_space<vmem>>, vector<2x16xf32>
    %c66 = arith.constant 66 : index
    %c0_218 = arith.constant 0 : index
    %238 = vector.load %arg12[%c66, %c0_218] : memref<112x16xf32, #tpu.memory_space<vmem>>, vector<2x16xf32>
    %239 = arith.maximumf %237, %238 : vector<2x16xf32>
    %cst_219 = arith.constant dense<0xFF800000> : vector<16xf32>
    %240 = vector.multi_reduction <maximumf>, %239, %cst_219 [0] : vector<2x16xf32> to vector<16xf32>
    %241 = vector.shape_cast %240 : vector<16xf32> to vector<1x16xf32>
    %c1_220 = arith.constant 1 : index
    %c16_221 = arith.constant 16 : index
    %242 = vector.load %arg13[%c1_220, %c16_221] : memref<2x64xf32, #tpu.memory_space<vmem>>, vector<1x16xf32>
    tpu.vector_store %arg13[%c1_220, %c16_221], %241 {strides = array<i32>} : memref<2x64xf32, #tpu.memory_space<vmem>>, vector<1x16xf32>,
    %c72_222 = arith.constant 72 : index
    %c0_223 = arith.constant 0 : index
    %243 = vector.load %arg12[%c72_222, %c0_223] : memref<112x16xf32, #tpu.memory_space<vmem>>, vector<2x16xf32>
    %c80_224 = arith.constant 80 : index
    %c0_225 = arith.constant 0 : index
    %244 = vector.load %arg12[%c80_224, %c0_225] : memref<112x16xf32, #tpu.memory_space<vmem>>, vector<2x16xf32>
    %245 = arith.maximumf %243, %244 : vector<2x16xf32>
    %cst_226 = arith.constant dense<0xFF800000> : vector<16xf32>
    %246 = vector.multi_reduction <maximumf>, %245, %cst_226 [0] : vector<2x16xf32> to vector<16xf32>
    %247 = vector.shape_cast %246 : vector<16xf32> to vector<1x16xf32>
    %c1_227 = arith.constant 1 : index
    %c32_228 = arith.constant 32 : index
    %248 = vector.load %arg13[%c1_227, %c32_228] : memref<2x64xf32, #tpu.memory_space<vmem>>, vector<1x16xf32>
    tpu.vector_store %arg13[%c1_227, %c32_228], %247 {strides = array<i32>} : memref<2x64xf32, #tpu.memory_space<vmem>>, vector<1x16xf32>,
    %c74 = arith.constant 74 : index
    %c0_229 = arith.constant 0 : index
    %249 = vector.load %arg12[%c74, %c0_229] : memref<112x16xf32, #tpu.memory_space<vmem>>, vector<2x16xf32>
    %c82 = arith.constant 82 : index
    %c0_230 = arith.constant 0 : index
    %250 = vector.load %arg12[%c82, %c0_230] : memref<112x16xf32, #tpu.memory_space<vmem>>, vector<2x16xf32>
    %251 = arith.maximumf %249, %250 : vector<2x16xf32>
    %cst_231 = arith.constant dense<0xFF800000> : vector<16xf32>
    %252 = vector.multi_reduction <maximumf>, %251, %cst_231 [0] : vector<2x16xf32> to vector<16xf32>
    %253 = vector.shape_cast %252 : vector<16xf32> to vector<1x16xf32>
    %c1_232 = arith.constant 1 : index
    %c48_233 = arith.constant 48 : index
    %254 = vector.load %arg13[%c1_232, %c48_233] : memref<2x64xf32, #tpu.memory_space<vmem>>, vector<1x16xf32>
    tpu.vector_store %arg13[%c1_232, %c48_233], %253 {strides = array<i32>} : memref<2x64xf32, #tpu.memory_space<vmem>>, vector<1x16xf32>,
    %c0_234 = arith.constant 0 : index
    %c0_235 = arith.constant 0 : index
    %255 = vector.load %arg13[%c0_234, %c0_235] : memref<2x64xf32, #tpu.memory_space<vmem>>, vector<2x64xf32>
    %c0_236 = arith.constant 0 : index
    %c0_237 = arith.constant 0 : index
    %256 = vector.load %arg5[%c0_236, %c0_237] : memref<64x10xf32, #tpu.memory_space<vmem>>, vector<64x10xf32>
    %cst_238 = arith.constant dense<0.000000e+00> : vector<2x10xf32>
    %257 = tpu.matmul %255, %256, %cst_238 {dimension_numbers = #tpu.dot_dimension_numbers<[1], [0], [0], [1], [0, 0, 1, 1], [], []>} : vector<2x64xf32>, vector<64x10xf32>, vector<2x10xf32> -> vector<2x10xf32>
    %c0_239 = arith.constant 0 : index
    %c0_240 = arith.constant 0 : index
    %258 = vector.load %arg6[%c0_239, %c0_240] : memref<1x10xf32, #tpu.memory_space<vmem>>, vector<1x10xf32>
    %259 = vector.broadcast %258 : vector<1x10xf32> to vector<2x10xf32>
    %260 = arith.addf %257, %259 : vector<2x10xf32>
    %cst_241 = arith.constant dense<0xFF800000> : vector<2xf32>
    %261 = vector.multi_reduction <maximumf>, %260, %cst_241 [1] : vector<2x10xf32> to vector<2xf32>
    %262 = vector.shape_cast %261 : vector<2xf32> to vector<2x1xf32>
    %263 = vector.broadcast %262 : vector<2x1xf32> to vector<2x10xf32>
    %264 = arith.subf %260, %263 : vector<2x10xf32>
    %265 = math.exp %264 : vector<2x10xf32>
    %cst_242 = arith.constant dense<0.000000e+00> : vector<2xf32>
    %266 = vector.multi_reduction <add>, %265, %cst_242 [1] : vector<2x10xf32> to vector<2xf32>
    %267 = vector.shape_cast %266 : vector<2xf32> to vector<2x1xf32>
    %268 = math.log %267 : vector<2x1xf32>
    %269 = vector.broadcast %268 : vector<2x1xf32> to vector<2x10xf32>
    %270 = arith.subf %264, %269 : vector<2x10xf32>
    %c0_243 = arith.constant 0 : index
    %c0_244 = arith.constant 0 : index
    %271 = vector.load %arg7[%c0_243, %c0_244] : memref<2x10xf32, #tpu.memory_space<vmem>>, vector<2x10xf32>
    tpu.vector_store %arg7[%c0_243, %c0_244], %270 {strides = array<i32>} : memref<2x10xf32, #tpu.memory_space<vmem>>, vector<2x10xf32>,
    return
  }
}

</mosaic_0001>

<llo_original>
// kernel: cnn_forward.1
$region0: #{cnn_forward.1}
  #allocation0 [shape = 'u32[]', space=smem, size = 0x4, offset = 0x4, fixed_abs, tag = 'smem constant byte address 0x4 - core index']
  #allocation1 [shape = 'u32[144,128]{1,0:T(1,128)}', space=vmem, size = 0x12000, scoped, tag = 'internal scratch']
  #allocation2 [shape = 'f32[544,12]{1,0:T(8,128)}', space=vmem, size = 0x44000, scoped, tag = 'scratch operand']
  #allocation3 [shape = 'f32[512,8]{1,0:T(8,128)}', space=vmem, size = 0x40000, scoped, tag = 'scratch operand']
  #allocation4 [shape = 'f32[136,8]{1,0:T(8,128)}', space=vmem, size = 0x11000, scoped, tag = 'scratch operand']
  #allocation5 [shape = 'f32[128,24]{1,0:T(8,128)}', space=vmem, size = 0x10000, scoped, tag = 'scratch operand']
  #allocation6 [shape = 'f32[112,16]{1,0:T(8,128)}', space=vmem, size = 0xe000, scoped, tag = 'scratch operand']
  #allocation7 [shape = 'f32[2,64]{1,0:T(2,128)}', space=vmem, size = 0x400, scoped, tag = 'scratch operand']
  %s0 = inlined_call_operand.vmem [shape: f32[512,4], index: 0, kind: input, shape index: {}]
  %s1 = inlined_call_operand.vmem [shape: f32[3,12,8], index: 1, kind: input, shape index: {}]
  %s2 = inlined_call_operand.vmem [shape: f32[1,8], index: 2, kind: input, shape index: {}]
  %s3 = inlined_call_operand.vmem [shape: f32[3,24,16], index: 3, kind: input, shape index: {}]
  %s4 = inlined_call_operand.vmem [shape: f32[1,16], index: 4, kind: input, shape index: {}]
  %s5 = inlined_call_operand.vmem [shape: f32[64,10], index: 5, kind: input, shape index: {}]
  %s6 = inlined_call_operand.vmem [shape: f32[1,10], index: 6, kind: input, shape index: {}]
  %s7 = inlined_call_operand.hbm [shape: f32[2,10], index: 7, kind: output, shape index: {}]
  %s8 = sld [smem:[#allocation0]]
  $region38: #{cnn_forward.1} parent=0
    _
  %s10 = ssub.s32 1, %s8
  %s11 = scalar_select 0, %s10, %s8
  $region1: #{cnn_forward.1} parent=0
    #allocation8 [shape = 'u8[1024]{0}', space=vmem, size = 0x400, scoped, tag = 'output window, operand 0, single buffered']
    #allocation9 [shape = 's32[1]{0}', space=sflag, size = 0x4, scoped, tag = 'scoped memory for cnn_forward.1']
    %12 = vsyncpa [#allocation9], 0
    // Predicated region
    $region2: #{cnn_forward.1} parent=1 // pred_check
      _
    $region3: #{cnn_forward.1} parent=1 // pred_check_branch
      %14 = sbr.rel (0) target = $region5
    $region4: #{cnn_forward.1} parent=1 // pred_region
      _
    $region5: #{cnn_forward.1} parent=1 // pred_fallthru
      _
    // Predicated region
    $region6: #{cnn_forward.1} parent=1 // pred_check
      _
    $region7: #{cnn_forward.1} parent=1 // pred_check_branch
      %16 = sbr.rel (0) target = $region9
    $region8: #{cnn_forward.1} parent=1 // pred_region
      _
    $region9: #{cnn_forward.1} parent=1 // pred_fallthru
      _
    // Predicated region
    $region10: #{cnn_forward.1} parent=1 // pred_check
      _
    $region11: #{cnn_forward.1} parent=1 // pred_check_branch
      %18 = sbr.rel (0) target = $region13
    $region12: #{cnn_forward.1} parent=1 // pred_region
      _
    $region13: #{cnn_forward.1} parent=1 // pred_fallthru
      _
    // Predicated region
    $region14: #{cnn_forward.1} parent=1 // pred_check
      _
    $region15: #{cnn_forward.1} parent=1 // pred_check_branch
      %20 = sbr.rel (0) target = $region17
    $region16: #{cnn_forward.1} parent=1 // pred_region
      _
    $region17: #{cnn_forward.1} parent=1 // pred_fallthru
      _
    // Predicated region
    $region18: #{cnn_forward.1} parent=1 // pred_check
      _
    $region19: #{cnn_forward.1} parent=1 // pred_check_branch
      %22 = sbr.rel (0) target = $region21
    $region20: #{cnn_forward.1} parent=1 // pred_region
      _
    $region21: #{cnn_forward.1} parent=1 // pred_fallthru
      _
    // Predicated region
    $region22: #{cnn_forward.1} parent=1 // pred_check
      _
    $region23: #{cnn_forward.1} parent=1 // pred_check_branch
      %24 = sbr.rel (0) target = $region25
    $region24: #{cnn_forward.1} parent=1 // pred_region
      _
    $region25: #{cnn_forward.1} parent=1 // pred_fallthru
      _
    // Predicated region
    $region26: #{cnn_forward.1} parent=1 // pred_check
      _
    $region27: #{cnn_forward.1} parent=1 // pred_check_branch
      %26 = sbr.rel (0) target = $region29
    $region28: #{cnn_forward.1} parent=1 // pred_region
      _
    $region29: #{cnn_forward.1} parent=1 // pred_fallthru
      _
    %vm27 = vcmask 97280
    %28 = vst.msk [vmem:[#allocation2 + $0x1f8] sm:$0xff] %vm27, 0.0
    %29 = vst.msk [vmem:[#allocation2 + $0x200] sm:$0xff] %vm27, 0.0
    %30 = vst.msk [vmem:[#allocation2 + $0x208] sm:$0xff] %vm27, 0.0
    %31 = vst.msk [vmem:[#allocation2 + $0x210] sm:$0xff] %vm27, 0.0
    %32 = vst.msk [vmem:[#allocation2 + $0x218] sm:$0xff] %vm27, 0.0
    %v33 = vld [vmem:[%s0] sm:$0xff]
    %v34 = vld [vmem:[%s0 + $0x8] sm:$0xff]
    %v35 = vld [vmem:[%s0 + $0x10] sm:$0xff]
    %v36 = vld [vmem:[%s0 + $0x18] sm:$0xff]
    %v37 = vld [vmem:[%s0 + $0x20] sm:$0xff]
    %v38 = vld [vmem:[%s0 + $0x28] sm:$0xff]
    %v39 = vld [vmem:[%s0 + $0x30] sm:$0xff]
    %v40 = vld [vmem:[%s0 + $0x38] sm:$0xff]
    %v41 = vld [vmem:[%s0 + $0x40] sm:$0xff]
    %v42 = vld [vmem:[%s0 + $0x48] sm:$0xff]
    %v43 = vld [vmem:[%s0 + $0x50] sm:$0xff]
    %v44 = vld [vmem:[%s0 + $0x58] sm:$0xff]
    %v45 = vld [vmem:[%s0 + $0x60] sm:$0xff]
    %v46 = vld [vmem:[%s0 + $0x68] sm:$0xff]
    %v47 = vld [vmem:[%s0 + $0x70] sm:$0xff]
    %v48 = vld [vmem:[%s0 + $0x78] sm:$0xff]
    %v49 = vld [vmem:[%s0 + $0x80] sm:$0xff]
    %v50 = vld [vmem:[%s0 + $0x88] sm:$0xff]
    %v51 = vld [vmem:[%s0 + $0x90] sm:$0xff]
    %v52 = vld [vmem:[%s0 + $0x98] sm:$0xff]
    %v53 = vld [vmem:[%s0 + $0xa0] sm:$0xff]
    %v54 = vld [vmem:[%s0 + $0xa8] sm:$0xff]
    %v55 = vld [vmem:[%s0 + $0xb0] sm:$0xff]
    %v56 = vld [vmem:[%s0 + $0xb8] sm:$0xff]
    %v57 = vld [vmem:[%s0 + $0xc0] sm:$0xff]
    %v58 = vld [vmem:[%s0 + $0xc8] sm:$0xff]
    %v59 = vld [vmem:[%s0 + $0xd0] sm:$0xff]
    %v60 = vld [vmem:[%s0 + $0xd8] sm:$0xff]
    %v61 = vld [vmem:[%s0 + $0xe0] sm:$0xff]
    %v62 = vld [vmem:[%s0 + $0xe8] sm:$0xff]
    %v63 = vld [vmem:[%s0 + $0xf0] sm:$0xff]
    %v64 = vld [vmem:[%s0 + $0xf8] sm:$0xff]
    %v65 = vld [vmem:[%s0 + $0x100] sm:$0xff]
    %v66 = vld [vmem:[%s0 + $0x108] sm:$0xff]
    %v67 = vld [vmem:[%s0 + $0x110] sm:$0xff]
    %v68 = vld [vmem:[%s0 + $0x118] sm:$0xff]
    %v69 = vld [vmem:[%s0 + $0x120] sm:$0xff]
    %v70 = vld [vmem:[%s0 + $0x128] sm:$0xff]
    %v71 = vld [vmem:[%s0 + $0x130] sm:$0xff]
    %v72 = vld [vmem:[%s0 + $0x138] sm:$0xff]
    %v73 = vld [vmem:[%s0 + $0x140] sm:$0xff]
    %v74 = vld [vmem:[%s0 + $0x148] sm:$0xff]
    %v75 = vld [vmem:[%s0 + $0x150] sm:$0xff]
    %v76 = vld [vmem:[%s0 + $0x158] sm:$0xff]
    %v77 = vld [vmem:[%s0 + $0x160] sm:$0xff]
    %v78 = vld [vmem:[%s0 + $0x168] sm:$0xff]
    %v79 = vld [vmem:[%s0 + $0x170] sm:$0xff]
    %v80 = vld [vmem:[%s0 + $0x178] sm:$0xff]
    %v81 = vld [vmem:[%s0 + $0x180] sm:$0xff]
    %v82 = vld [vmem:[%s0 + $0x188] sm:$0xff]
    %v83 = vld [vmem:[%s0 + $0x190] sm:$0xff]
    %v84 = vld [vmem:[%s0 + $0x198] sm:$0xff]
    %v85 = vld [vmem:[%s0 + $0x1a0] sm:$0xff]
    %v86 = vld [vmem:[%s0 + $0x1a8] sm:$0xff]
    %v87 = vld [vmem:[%s0 + $0x1b0] sm:$0xff]
    %v88 = vld [vmem:[%s0 + $0x1b8] sm:$0xff]
    %v89 = vld [vmem:[%s0 + $0x1c0] sm:$0xff]
    %v90 = vld [vmem:[%s0 + $0x1c8] sm:$0xff]
    %v91 = vld [vmem:[%s0 + $0x1d0] sm:$0xff]
    %v92 = vld [vmem:[%s0 + $0x1d8] sm:$0xff]
    %v93 = vld [vmem:[%s0 + $0x1e0] sm:$0xff]
    %v94 = vld [vmem:[%s0 + $0x1e8] sm:$0xff]
    %v95 = vld [vmem:[%s0 + $0x1f0] sm:$0xff]
    %v96 = vld [vmem:[%s0 + $0x1f8] sm:$0xff]
    %vm97 = vcmask 31744
    %98 = vst.msk [vmem:[#allocation2] sm:$0xff] %vm97, %v33
    %99 = vst.msk [vmem:[#allocation2 + $0x8] sm:$0xff] %vm97, %v34
    %100 = vst.msk [vmem:[#allocation2 + $0x10] sm:$0xff] %vm97, %v35
    %101 = vst.msk [vmem:[#allocation2 + $0x18] sm:$0xff] %vm97, %v36
    %102 = vst.msk [vmem:[#allocation2 + $0x20] sm:$0xff] %vm97, %v37
    %103 = vst.msk [vmem:[#allocation2 + $0x28] sm:$0xff] %vm97, %v38
    %104 = vst.msk [vmem:[#allocation2 + $0x30] sm:$0xff] %vm97, %v39
    %105 = vst.msk [vmem:[#allocation2 + $0x38] sm:$0xff] %vm97, %v40
    %106 = vst.msk [vmem:[#allocation2 + $0x40] sm:$0xff] %vm97, %v41
    %107 = vst.msk [vmem:[#allocation2 + $0x48] sm:$0xff] %vm97, %v42
    %108 = vst.msk [vmem:[#allocation2 + $0x50] sm:$0xff] %vm97, %v43
    %109 = vst.msk [vmem:[#allocation2 + $0x58] sm:$0xff] %vm97, %v44
    %110 = vst.msk [vmem:[#allocation2 + $0x60] sm:$0xff] %vm97, %v45
    %111 = vst.msk [vmem:[#allocation2 + $0x68] sm:$0xff] %vm97, %v46
    %112 = vst.msk [vmem:[#allocation2 + $0x70] sm:$0xff] %vm97, %v47
    %113 = vst.msk [vmem:[#allocation2 + $0x78] sm:$0xff] %vm97, %v48
    %114 = vst.msk [vmem:[#allocation2 + $0x80] sm:$0xff] %vm97, %v49
    %115 = vst.msk [vmem:[#allocation2 + $0x88] sm:$0xff] %vm97, %v50
    %116 = vst.msk [vmem:[#allocation2 + $0x90] sm:$0xff] %vm97, %v51
    %117 = vst.msk [vmem:[#allocation2 + $0x98] sm:$0xff] %vm97, %v52
    %118 = vst.msk [vmem:[#allocation2 + $0xa0] sm:$0xff] %vm97, %v53
    %119 = vst.msk [vmem:[#allocation2 + $0xa8] sm:$0xff] %vm97, %v54
    %120 = vst.msk [vmem:[#allocation2 + $0xb0] sm:$0xff] %vm97, %v55
    %121 = vst.msk [vmem:[#allocation2 + $0xb8] sm:$0xff] %vm97, %v56
    %122 = vst.msk [vmem:[#allocation2 + $0xc0] sm:$0xff] %vm97, %v57
    %123 = vst.msk [vmem:[#allocation2 + $0xc8] sm:$0xff] %vm97, %v58
    %124 = vst.msk [vmem:[#allocation2 + $0xd0] sm:$0xff] %vm97, %v59
    %125 = vst.msk [vmem:[#allocation2 + $0xd8] sm:$0xff] %vm97, %v60
    %126 = vst.msk [vmem:[#allocation2 + $0xe0] sm:$0xff] %vm97, %v61
    %127 = vst.msk [vmem:[#allocation2 + $0xe8] sm:$0xff] %vm97, %v62
    %128 = vst.msk [vmem:[#allocation2 + $0xf0] sm:$0xff] %vm97, %v63
    %129 = vst.msk [vmem:[#allocation2 + $0xf8] sm:$0xff] %vm97, %v64
    %130 = vst.msk [vmem:[#allocation2 + $0x100] sm:$0xff] %vm97, %v65
    %131 = vst.msk [vmem:[#allocation2 + $0x108] sm:$0xff] %vm97, %v66
    %132 = vst.msk [vmem:[#allocation2 + $0x110] sm:$0xff] %vm97, %v67
    %133 = vst.msk [vmem:[#allocation2 + $0x118] sm:$0xff] %vm97, %v68
    %134 = vst.msk [vmem:[#allocation2 + $0x120] sm:$0xff] %vm97, %v69
    %135 = vst.msk [vmem:[#allocation2 + $0x128] sm:$0xff] %vm97, %v70
    %136 = vst.msk [vmem:[#allocation2 + $0x130] sm:$0xff] %vm97, %v71
    %137 = vst.msk [vmem:[#allocation2 + $0x138] sm:$0xff] %vm97, %v72
    %138 = vst.msk [vmem:[#allocation2 + $0x140] sm:$0xff] %vm97, %v73
    %139 = vst.msk [vmem:[#allocation2 + $0x148] sm:$0xff] %vm97, %v74
    %140 = vst.msk [vmem:[#allocation2 + $0x150] sm:$0xff] %vm97, %v75
    %141 = vst.msk [vmem:[#allocation2 + $0x158] sm:$0xff] %vm97, %v76
    %142 = vst.msk [vmem:[#allocation2 + $0x160] sm:$0xff] %vm97, %v77
    %143 = vst.msk [vmem:[#allocation2 + $0x168] sm:$0xff] %vm97, %v78
    %144 = vst.msk [vmem:[#allocation2 + $0x170] sm:$0xff] %vm97, %v79
    %145 = vst.msk [vmem:[#allocation2 + $0x178] sm:$0xff] %vm97, %v80
    %146 = vst.msk [vmem:[#allocation2 + $0x180] sm:$0xff] %vm97, %v81
    %147 = vst.msk [vmem:[#allocation2 + $0x188] sm:$0xff] %vm97, %v82
    %148 = vst.msk [vmem:[#allocation2 + $0x190] sm:$0xff] %vm97, %v83
    %149 = vst.msk [vmem:[#allocation2 + $0x198] sm:$0xff] %vm97, %v84
    %150 = vst.msk [vmem:[#allocation2 + $0x1a0] sm:$0xff] %vm97, %v85
    %151 = vst.msk [vmem:[#allocation2 + $0x1a8] sm:$0xff] %vm97, %v86
    %152 = vst.msk [vmem:[#allocation2 + $0x1b0] sm:$0xff] %vm97, %v87
    %153 = vst.msk [vmem:[#allocation2 + $0x1b8] sm:$0xff] %vm97, %v88
    %154 = vst.msk [vmem:[#allocation2 + $0x1c0] sm:$0xff] %vm97, %v89
    %155 = vst.msk [vmem:[#allocation2 + $0x1c8] sm:$0xff] %vm97, %v90
    %156 = vst.msk [vmem:[#allocation2 + $0x1d0] sm:$0xff] %vm97, %v91
    %157 = vst.msk [vmem:[#allocation2 + $0x1d8] sm:$0xff] %vm97, %v92
    %158 = vst.msk [vmem:[#allocation2 + $0x1e0] sm:$0xff] %vm97, %v93
    %159 = vst.msk [vmem:[#allocation2 + $0x1e8] sm:$0xff] %vm97, %v94
    %160 = vst.msk [vmem:[#allocation2 + $0x1f0] sm:$0xff] %vm97, %v95
    %161 = vst.msk [vmem:[#allocation2 + $0x1f8] sm:$0xff] %vm97, %v96
    %v162 = vld [vmem:[%s0 + $0x1] sm:$0xff]
    %v163 = vld [vmem:[%s0 + $0x9] sm:$0xff]
    %v164 = vld [vmem:[%s0 + $0x11] sm:$0xff]
    %v165 = vld [vmem:[%s0 + $0x19] sm:$0xff]
    %v166 = vld [vmem:[%s0 + $0x21] sm:$0xff]
    %v167 = vld [vmem:[%s0 + $0x29] sm:$0xff]
    %v168 = vld [vmem:[%s0 + $0x31] sm:$0xff]
    %v169 = vld [vmem:[%s0 + $0x39] sm:$0xff]
    %v170 = vld [vmem:[%s0 + $0x41] sm:$0xff]
    %v171 = vld [vmem:[%s0 + $0x49] sm:$0xff]
    %v172 = vld [vmem:[%s0 + $0x51] sm:$0xff]
    %v173 = vld [vmem:[%s0 + $0x59] sm:$0xff]
    %v174 = vld [vmem:[%s0 + $0x61] sm:$0xff]
    %v175 = vld [vmem:[%s0 + $0x69] sm:$0xff]
    %v176 = vld [vmem:[%s0 + $0x71] sm:$0xff]
    %v177 = vld [vmem:[%s0 + $0x79] sm:$0xff]
    %v178 = vld [vmem:[%s0 + $0x81] sm:$0xff]
    %v179 = vld [vmem:[%s0 + $0x89] sm:$0xff]
    %v180 = vld [vmem:[%s0 + $0x91] sm:$0xff]
    %v181 = vld [vmem:[%s0 + $0x99] sm:$0xff]
    %v182 = vld [vmem:[%s0 + $0xa1] sm:$0xff]
    %v183 = vld [vmem:[%s0 + $0xa9] sm:$0xff]
    %v184 = vld [vmem:[%s0 + $0xb1] sm:$0xff]
    %v185 = vld [vmem:[%s0 + $0xb9] sm:$0xff]
    %v186 = vld [vmem:[%s0 + $0xc1] sm:$0xff]
    %v187 = vld [vmem:[%s0 + $0xc9] sm:$0xff]
    %v188 = vld [vmem:[%s0 + $0xd1] sm:$0xff]
    %v189 = vld [vmem:[%s0 + $0xd9] sm:$0xff]
    %v190 = vld [vmem:[%s0 + $0xe1] sm:$0xff]
    %v191 = vld [vmem:[%s0 + $0xe9] sm:$0xff]
    %v192 = vld [vmem:[%s0 + $0xf1] sm:$0xff]
    %v193 = vld [vmem:[%s0 + $0xf9] sm:$0xff]
    %v194 = vld [vmem:[%s0 + $0x101] sm:$0xff]
    %v195 = vld [vmem:[%s0 + $0x109] sm:$0xff]
    %v196 = vld [vmem:[%s0 + $0x111] sm:$0xff]
    %v197 = vld [vmem:[%s0 + $0x119] sm:$0xff]
    %v198 = vld [vmem:[%s0 + $0x121] sm:$0xff]
    %v199 = vld [vmem:[%s0 + $0x129] sm:$0xff]
    %v200 = vld [vmem:[%s0 + $0x131] sm:$0xff]
    %v201 = vld [vmem:[%s0 + $0x139] sm:$0xff]
    %v202 = vld [vmem:[%s0 + $0x141] sm:$0xff]
    %v203 = vld [vmem:[%s0 + $0x149] sm:$0xff]
    %v204 = vld [vmem:[%s0 + $0x151] sm:$0xff]
    %v205 = vld [vmem:[%s0 + $0x159] sm:$0xff]
    %v206 = vld [vmem:[%s0 + $0x161] sm:$0xff]
    %v207 = vld [vmem:[%s0 + $0x169] sm:$0xff]
    %v208 = vld [vmem:[%s0 + $0x171] sm:$0xff]
    %v209 = vld [vmem:[%s0 + $0x179] sm:$0xff]
    %v210 = vld [vmem:[%s0 + $0x181] sm:$0xff]
    %v211 = vld [vmem:[%s0 + $0x189] sm:$0xff]
    %v212 = vld [vmem:[%s0 + $0x191] sm:$0xff]
    %v213 = vld [vmem:[%s0 + $0x199] sm:$0xff]
    %v214 = vld [vmem:[%s0 + $0x1a1] sm:$0xff]
    %v215 = vld [vmem:[%s0 + $0x1a9] sm:$0xff]
    %v216 = vld [vmem:[%s0 + $0x1b1] sm:$0xff]
    %v217 = vld [vmem:[%s0 + $0x1b9] sm:$0xff]
    %v218 = vld [vmem:[%s0 + $0x1c1] sm:$0xff]
    %v219 = vld [vmem:[%s0 + $0x1c9] sm:$0xff]
    %v220 = vld [vmem:[%s0 + $0x1d1] sm:$0xff]
    %v221 = vld [vmem:[%s0 + $0x1d9] sm:$0xff]
    %v222 = vld [vmem:[%s0 + $0x1e1] sm:$0xff]
    %v223 = vld [vmem:[%s0 + $0x1e9] sm:$0xff]
    %v224 = vld [vmem:[%s0 + $0x1f1] sm:$0xff]
    %v225 = vld [vmem:[%s0 + $0x1f9] sm:$0x7f]
    %290 = vrot.lane.b32.xlu0 %v162, 4
    %v291 = vpop.permute.xlu0 %290
    %292 = vrot.lane.b32.xlu0 %v163, 4
    %v293 = vpop.permute.xlu0 %292
    %294 = vrot.lane.b32.xlu0 %v164, 4
    %v295 = vpop.permute.xlu0 %294
    %296 = vrot.lane.b32.xlu0 %v165, 4
    %v297 = vpop.permute.xlu0 %296
    %298 = vrot.lane.b32.xlu0 %v166, 4
    %v299 = vpop.permute.xlu0 %298
    %300 = vrot.lane.b32.xlu0 %v167, 4
    %v301 = vpop.permute.xlu0 %300
    %302 = vrot.lane.b32.xlu0 %v168, 4
    %v303 = vpop.permute.xlu0 %302
    %304 = vrot.lane.b32.xlu0 %v169, 4
    %v305 = vpop.permute.xlu0 %304
    %306 = vrot.lane.b32.xlu0 %v170, 4
    %v307 = vpop.permute.xlu0 %306
    %308 = vrot.lane.b32.xlu0 %v171, 4
    %v309 = vpop.permute.xlu0 %308
    %310 = vrot.lane.b32.xlu0 %v172, 4
    %v311 = vpop.permute.xlu0 %310
    %312 = vrot.lane.b32.xlu0 %v173, 4
    %v313 = vpop.permute.xlu0 %312
    %314 = vrot.lane.b32.xlu0 %v174, 4
    %v315 = vpop.permute.xlu0 %314
    %316 = vrot.lane.b32.xlu0 %v175, 4
    %v317 = vpop.permute.xlu0 %316
    %318 = vrot.lane.b32.xlu0 %v176, 4
    %v319 = vpop.permute.xlu0 %318
    %320 = vrot.lane.b32.xlu0 %v177, 4
    %v321 = vpop.permute.xlu0 %320
    %322 = vrot.lane.b32.xlu0 %v178, 4
    %v323 = vpop.permute.xlu0 %322
    %324 = vrot.lane.b32.xlu0 %v179, 4
    %v325 = vpop.permute.xlu0 %324
    %326 = vrot.lane.b32.xlu0 %v180, 4
    %v327 = vpop.permute.xlu0 %326
    %328 = vrot.lane.b32.xlu0 %v181, 4
    %v329 = vpop.permute.xlu0 %328
    %330 = vrot.lane.b32.xlu0 %v182, 4
    %v331 = vpop.permute.xlu0 %330
    %332 = vrot.lane.b32.xlu0 %v183, 4
    %v333 = vpop.permute.xlu0 %332
    %334 = vrot.lane.b32.xlu0 %v184, 4
    %v335 = vpop.permute.xlu0 %334
    %336 = vrot.lane.b32.xlu0 %v185, 4
    %v337 = vpop.permute.xlu0 %336
    %338 = vrot.lane.b32.xlu0 %v186, 4
    %v339 = vpop.permute.xlu0 %338
    %340 = vrot.lane.b32.xlu0 %v187, 4
    %v341 = vpop.permute.xlu0 %340
    %342 = vrot.lane.b32.xlu0 %v188, 4
    %v343 = vpop.permute.xlu0 %342
    %344 = vrot.lane.b32.xlu0 %v189, 4
    %v345 = vpop.permute.xlu0 %344
    %346 = vrot.lane.b32.xlu0 %v190, 4
    %v347 = vpop.permute.xlu0 %346
    %348 = vrot.lane.b32.xlu0 %v191, 4
    %v349 = vpop.permute.xlu0 %348
    %350 = vrot.lane.b32.xlu0 %v192, 4
    %v351 = vpop.permute.xlu0 %350
    %352 = vrot.lane.b32.xlu0 %v193, 4
    %v353 = vpop.permute.xlu0 %352
    %354 = vrot.lane.b32.xlu0 %v194, 4
    %v355 = vpop.permute.xlu0 %354
    %356 = vrot.lane.b32.xlu0 %v195, 4
    %v357 = vpop.permute.xlu0 %356
    %358 = vrot.lane.b32.xlu0 %v196, 4
    %v359 = vpop.permute.xlu0 %358
    %360 = vrot.lane.b32.xlu0 %v197, 4
    %v361 = vpop.permute.xlu0 %360
    %362 = vrot.lane.b32.xlu0 %v198, 4
    %v363 = vpop.permute.xlu0 %362
    %364 = vrot.lane.b32.xlu0 %v199, 4
    %v365 = vpop.permute.xlu0 %364
    %366 = vrot.lane.b32.xlu0 %v200, 4
    %v367 = vpop.permute.xlu0 %366
    %368 = vrot.lane.b32.xlu0 %v201, 4
    %v369 = vpop.permute.xlu0 %368
    %370 = vrot.lane.b32.xlu0 %v202, 4
    %v371 = vpop.permute.xlu0 %370
    %372 = vrot.lane.b32.xlu0 %v203, 4
    %v373 = vpop.permute.xlu0 %372
    %374 = vrot.lane.b32.xlu0 %v204, 4
    %v375 = vpop.permute.xlu0 %374
    %376 = vrot.lane.b32.xlu0 %v205, 4
    %v377 = vpop.permute.xlu0 %376
    %378 = vrot.lane.b32.xlu0 %v206, 4
    %v379 = vpop.permute.xlu0 %378
    %380 = vrot.lane.b32.xlu0 %v207, 4
    %v381 = vpop.permute.xlu0 %380
    %382 = vrot.lane.b32.xlu0 %v208, 4
    %v383 = vpop.permute.xlu0 %382
    %384 = vrot.lane.b32.xlu0 %v209, 4
    %v385 = vpop.permute.xlu0 %384
    %386 = vrot.lane.b32.xlu0 %v210, 4
    %v387 = vpop.permute.xlu0 %386
    %388 = vrot.lane.b32.xlu0 %v211, 4
    %v389 = vpop.permute.xlu0 %388
    %390 = vrot.lane.b32.xlu0 %v212, 4
    %v391 = vpop.permute.xlu0 %390
    %392 = vrot.lane.b32.xlu0 %v213, 4
    %v393 = vpop.permute.xlu0 %392
    %394 = vrot.lane.b32.xlu0 %v214, 4
    %v395 = vpop.permute.xlu0 %394
    %396 = vrot.lane.b32.xlu0 %v215, 4
    %v397 = vpop.permute.xlu0 %396
    %398 = vrot.lane.b32.xlu0 %v216, 4
    %v399 = vpop.permute.xlu0 %398
    %400 = vrot.lane.b32.xlu0 %v217, 4
    %v401 = vpop.permute.xlu0 %400
    %402 = vrot.lane.b32.xlu0 %v218, 4
    %v403 = vpop.permute.xlu0 %402
    %404 = vrot.lane.b32.xlu0 %v219, 4
    %v405 = vpop.permute.xlu0 %404
    %406 = vrot.lane.b32.xlu0 %v220, 4
    %v407 = vpop.permute.xlu0 %406
    %408 = vrot.lane.b32.xlu0 %v221, 4
    %v409 = vpop.permute.xlu0 %408
    %410 = vrot.lane.b32.xlu0 %v222, 4
    %v411 = vpop.permute.xlu0 %410
    %412 = vrot.lane.b32.xlu0 %v223, 4
    %v413 = vpop.permute.xlu0 %412
    %414 = vrot.lane.b32.xlu0 %v224, 4
    %v415 = vpop.permute.xlu0 %414
    %416 = vrot.lane.b32.xlu0 %v225, 4
    %v417 = vpop.permute.xlu0 %416
    %vm482 = vcmask 64544
    %483 = vst.msk [vmem:[#allocation2] sm:$0xff] %vm482, %v291
    %484 = vst.msk [vmem:[#allocation2 + $0x8] sm:$0xff] %vm482, %v293
    %485 = vst.msk [vmem:[#allocation2 + $0x10] sm:$0xff] %vm482, %v295
    %486 = vst.msk [vmem:[#allocation2 + $0x18] sm:$0xff] %vm482, %v297
    %487 = vst.msk [vmem:[#allocation2 + $0x20] sm:$0xff] %vm482, %v299
    %488 = vst.msk [vmem:[#allocation2 + $0x28] sm:$0xff] %vm482, %v301
    %489 = vst.msk [vmem:[#allocation2 + $0x30] sm:$0xff] %vm482, %v303
    %490 = vst.msk [vmem:[#allocation2 + $0x38] sm:$0xff] %vm482, %v305
    %491 = vst.msk [vmem:[#allocation2 + $0x40] sm:$0xff] %vm482, %v307
    %492 = vst.msk [vmem:[#allocation2 + $0x48] sm:$0xff] %vm482, %v309
    %493 = vst.msk [vmem:[#allocation2 + $0x50] sm:$0xff] %vm482, %v311
    %494 = vst.msk [vmem:[#allocation2 + $0x58] sm:$0xff] %vm482, %v313
    %495 = vst.msk [vmem:[#allocation2 + $0x60] sm:$0xff] %vm482, %v315
    %496 = vst.msk [vmem:[#allocation2 + $0x68] sm:$0xff] %vm482, %v317
    %497 = vst.msk [vmem:[#allocation2 + $0x70] sm:$0xff] %vm482, %v319
    %498 = vst.msk [vmem:[#allocation2 + $0x78] sm:$0xff] %vm482, %v321
    %499 = vst.msk [vmem:[#allocation2 + $0x80] sm:$0xff] %vm482, %v323
    %500 = vst.msk [vmem:[#allocation2 + $0x88] sm:$0xff] %vm482, %v325
    %501 = vst.msk [vmem:[#allocation2 + $0x90] sm:$0xff] %vm482, %v327
    %502 = vst.msk [vmem:[#allocation2 + $0x98] sm:$0xff] %vm482, %v329
    %503 = vst.msk [vmem:[#allocation2 + $0xa0] sm:$0xff] %vm482, %v331
    %504 = vst.msk [vmem:[#allocation2 + $0xa8] sm:$0xff] %vm482, %v333
    %505 = vst.msk [vmem:[#allocation2 + $0xb0] sm:$0xff] %vm482, %v335
    %506 = vst.msk [vmem:[#allocation2 + $0xb8] sm:$0xff] %vm482, %v337
    %507 = vst.msk [vmem:[#allocation2 + $0xc0] sm:$0xff] %vm482, %v339
    %508 = vst.msk [vmem:[#allocation2 + $0xc8] sm:$0xff] %vm482, %v341
    %509 = vst.msk [vmem:[#allocation2 + $0xd0] sm:$0xff] %vm482, %v343
    %510 = vst.msk [vmem:[#allocation2 + $0xd8] sm:$0xff] %vm482, %v345
    %511 = vst.msk [vmem:[#allocation2 + $0xe0] sm:$0xff] %vm482, %v347
    %512 = vst.msk [vmem:[#allocation2 + $0xe8] sm:$0xff] %vm482, %v349
    %513 = vst.msk [vmem:[#allocation2 + $0xf0] sm:$0xff] %vm482, %v351
    %514 = vst.msk [vmem:[#allocation2 + $0xf8] sm:$0xff] %vm482, %v353
    %515 = vst.msk [vmem:[#allocation2 + $0x100] sm:$0xff] %vm482, %v355
    %516 = vst.msk [vmem:[#allocation2 + $0x108] sm:$0xff] %vm482, %v357
    %517 = vst.msk [vmem:[#allocation2 + $0x110] sm:$0xff] %vm482, %v359
    %518 = vst.msk [vmem:[#allocation2 + $0x118] sm:$0xff] %vm482, %v361
    %519 = vst.msk [vmem:[#allocation2 + $0x120] sm:$0xff] %vm482, %v363
    %520 = vst.msk [vmem:[#allocation2 + $0x128] sm:$0xff] %vm482, %v365
    %521 = vst.msk [vmem:[#allocation2 + $0x130] sm:$0xff] %vm482, %v367
    %522 = vst.msk [vmem:[#allocation2 + $0x138] sm:$0xff] %vm482, %v369
    %523 = vst.msk [vmem:[#allocation2 + $0x140] sm:$0xff] %vm482, %v371
    %524 = vst.msk [vmem:[#allocation2 + $0x148] sm:$0xff] %vm482, %v373
    %525 = vst.msk [vmem:[#allocation2 + $0x150] sm:$0xff] %vm482, %v375
    %526 = vst.msk [vmem:[#allocation2 + $0x158] sm:$0xff] %vm482, %v377
    %527 = vst.msk [vmem:[#allocation2 + $0x160] sm:$0xff] %vm482, %v379
    %528 = vst.msk [vmem:[#allocation2 + $0x168] sm:$0xff] %vm482, %v381
    %529 = vst.msk [vmem:[#allocation2 + $0x170] sm:$0xff] %vm482, %v383
    %530 = vst.msk [vmem:[#allocation2 + $0x178] sm:$0xff] %vm482, %v385
    %531 = vst.msk [vmem:[#allocation2 + $0x180] sm:$0xff] %vm482, %v387
    %532 = vst.msk [vmem:[#allocation2 + $0x188] sm:$0xff] %vm482, %v389
    %533 = vst.msk [vmem:[#allocation2 + $0x190] sm:$0xff] %vm482, %v391
    %534 = vst.msk [vmem:[#allocation2 + $0x198] sm:$0xff] %vm482, %v393
    %535 = vst.msk [vmem:[#allocation2 + $0x1a0] sm:$0xff] %vm482, %v395
    %536 = vst.msk [vmem:[#allocation2 + $0x1a8] sm:$0xff] %vm482, %v397
    %537 = vst.msk [vmem:[#allocation2 + $0x1b0] sm:$0xff] %vm482, %v399
    %538 = vst.msk [vmem:[#allocation2 + $0x1b8] sm:$0xff] %vm482, %v401
    %539 = vst.msk [vmem:[#allocation2 + $0x1c0] sm:$0xff] %vm482, %v403
    %540 = vst.msk [vmem:[#allocation2 + $0x1c8] sm:$0xff] %vm482, %v405
    %541 = vst.msk [vmem:[#allocation2 + $0x1d0] sm:$0xff] %vm482, %v407
    %542 = vst.msk [vmem:[#allocation2 + $0x1d8] sm:$0xff] %vm482, %v409
    %543 = vst.msk [vmem:[#allocation2 + $0x1e0] sm:$0xff] %vm482, %v411
    %544 = vst.msk [vmem:[#allocation2 + $0x1e8] sm:$0xff] %vm482, %v413
    %545 = vst.msk [vmem:[#allocation2 + $0x1f0] sm:$0xff] %vm482, %v415
    %vm546 = vcmask 63520
    %547 = vst.msk [vmem:[#allocation2 + $0x1f8] sm:$0x7f] %vm546, %v417
    %v548 = vld [vmem:[%s0 + $0x2] sm:$0xff]
    %v549 = vld [vmem:[%s0 + $0xa] sm:$0xff]
    %v550 = vld [vmem:[%s0 + $0x12] sm:$0xff]
    %v551 = vld [vmem:[%s0 + $0x1a] sm:$0xff]
    %v552 = vld [vmem:[%s0 + $0x22] sm:$0xff]
    %v553 = vld [vmem:[%s0 + $0x2a] sm:$0xff]
    %v554 = vld [vmem:[%s0 + $0x32] sm:$0xff]
    %v555 = vld [vmem:[%s0 + $0x3a] sm:$0xff]
    %v556 = vld [vmem:[%s0 + $0x42] sm:$0xff]
    %v557 = vld [vmem:[%s0 + $0x4a] sm:$0xff]
    %v558 = vld [vmem:[%s0 + $0x52] sm:$0xff]
    %v559 = vld [vmem:[%s0 + $0x5a] sm:$0xff]
    %v560 = vld [vmem:[%s0 + $0x62] sm:$0xff]
    %v561 = vld [vmem:[%s0 + $0x6a] sm:$0xff]
    %v562 = vld [vmem:[%s0 + $0x72] sm:$0xff]
    %v563 = vld [vmem:[%s0 + $0x7a] sm:$0xff]
    %v564 = vld [vmem:[%s0 + $0x82] sm:$0xff]
    %v565 = vld [vmem:[%s0 + $0x8a] sm:$0xff]
    %v566 = vld [vmem:[%s0 + $0x92] sm:$0xff]
    %v567 = vld [vmem:[%s0 + $0x9a] sm:$0xff]
    %v568 = vld [vmem:[%s0 + $0xa2] sm:$0xff]
    %v569 = vld [vmem:[%s0 + $0xaa] sm:$0xff]
    %v570 = vld [vmem:[%s0 + $0xb2] sm:$0xff]
    %v571 = vld [vmem:[%s0 + $0xba] sm:$0xff]
    %v572 = vld [vmem:[%s0 + $0xc2] sm:$0xff]
    %v573 = vld [vmem:[%s0 + $0xca] sm:$0xff]
    %v574 = vld [vmem:[%s0 + $0xd2] sm:$0xff]
    %v575 = vld [vmem:[%s0 + $0xda] sm:$0xff]
    %v576 = vld [vmem:[%s0 + $0xe2] sm:$0xff]
    %v577 = vld [vmem:[%s0 + $0xea] sm:$0xff]
    %v578 = vld [vmem:[%s0 + $0xf2] sm:$0xff]
    %v579 = vld [vmem:[%s0 + $0xfa] sm:$0xff]
    %v580 = vld [vmem:[%s0 + $0x102] sm:$0xff]
    %v581 = vld [vmem:[%s0 + $0x10a] sm:$0xff]
    %v582 = vld [vmem:[%s0 + $0x112] sm:$0xff]
    %v583 = vld [vmem:[%s0 + $0x11a] sm:$0xff]
    %v584 = vld [vmem:[%s0 + $0x122] sm:$0xff]
    %v585 = vld [vmem:[%s0 + $0x12a] sm:$0xff]
    %v586 = vld [vmem:[%s0 + $0x132] sm:$0xff]
    %v587 = vld [vmem:[%s0 + $0x13a] sm:$0xff]
    %v588 = vld [vmem:[%s0 + $0x142] sm:$0xff]
    %v589 = vld [vmem:[%s0 + $0x14a] sm:$0xff]
    %v590 = vld [vmem:[%s0 + $0x152] sm:$0xff]
    %v591 = vld [vmem:[%s0 + $0x15a] sm:$0xff]
    %v592 = vld [vmem:[%s0 + $0x162] sm:$0xff]
    %v593 = vld [vmem:[%s0 + $0x16a] sm:$0xff]
    %v594 = vld [vmem:[%s0 + $0x172] sm:$0xff]
    %v595 = vld [vmem:[%s0 + $0x17a] sm:$0xff]
    %v596 = vld [vmem:[%s0 + $0x182] sm:$0xff]
    %v597 = vld [vmem:[%s0 + $0x18a] sm:$0xff]
    %v598 = vld [vmem:[%s0 + $0x192] sm:$0xff]
    %v599 = vld [vmem:[%s0 + $0x19a] sm:$0xff]
    %v600 = vld [vmem:[%s0 + $0x1a2] sm:$0xff]
    %v601 = vld [vmem:[%s0 + $0x1aa] sm:$0xff]
    %v602 = vld [vmem:[%s0 + $0x1b2] sm:$0xff]
    %v603 = vld [vmem:[%s0 + $0x1ba] sm:$0xff]
    %v604 = vld [vmem:[%s0 + $0x1c2] sm:$0xff]
    %v605 = vld [vmem:[%s0 + $0x1ca] sm:$0xff]
    %v606 = vld [vmem:[%s0 + $0x1d2] sm:$0xff]
    %v607 = vld [vmem:[%s0 + $0x1da] sm:$0xff]
    %v608 = vld [vmem:[%s0 + $0x1e2] sm:$0xff]
    %v609 = vld [vmem:[%s0 + $0x1ea] sm:$0xff]
    %v610 = vld [vmem:[%s0 + $0x1f2] sm:$0xff]
    %v611 = vld [vmem:[%s0 + $0x1fa] sm:$0x3f]
    %676 = vrot.lane.b32.xlu0 %v548, 8
    %v677 = vpop.permute.xlu0 %676
    %678 = vrot.lane.b32.xlu0 %v549, 8
    %v679 = vpop.permute.xlu0 %678
    %680 = vrot.lane.b32.xlu0 %v550, 8
    %v681 = vpop.permute.xlu0 %680
    %682 = vrot.lane.b32.xlu0 %v551, 8
    %v683 = vpop.permute.xlu0 %682
    %684 = vrot.lane.b32.xlu0 %v552, 8
    %v685 = vpop.permute.xlu0 %684
    %686 = vrot.lane.b32.xlu0 %v553, 8
    %v687 = vpop.permute.xlu0 %686
    %688 = vrot.lane.b32.xlu0 %v554, 8
    %v689 = vpop.permute.xlu0 %688
    %690 = vrot.lane.b32.xlu0 %v555, 8
    %v691 = vpop.permute.xlu0 %690
    %692 = vrot.lane.b32.xlu0 %v556, 8
    %v693 = vpop.permute.xlu0 %692
    %694 = vrot.lane.b32.xlu0 %v557, 8
    %v695 = vpop.permute.xlu0 %694
    %696 = vrot.lane.b32.xlu0 %v558, 8
    %v697 = vpop.permute.xlu0 %696
    %698 = vrot.lane.b32.xlu0 %v559, 8
    %v699 = vpop.permute.xlu0 %698
    %700 = vrot.lane.b32.xlu0 %v560, 8
    %v701 = vpop.permute.xlu0 %700
    %702 = vrot.lane.b32.xlu0 %v561, 8
    %v703 = vpop.permute.xlu0 %702
    %704 = vrot.lane.b32.xlu0 %v562, 8
    %v705 = vpop.permute.xlu0 %704
    %706 = vrot.lane.b32.xlu0 %v563, 8
    %v707 = vpop.permute.xlu0 %706
    %708 = vrot.lane.b32.xlu0 %v564, 8
    %v709 = vpop.permute.xlu0 %708
    %710 = vrot.lane.b32.xlu0 %v565, 8
    %v711 = vpop.permute.xlu0 %710
    %712 = vrot.lane.b32.xlu0 %v566, 8
    %v713 = vpop.permute.xlu0 %712
    %714 = vrot.lane.b32.xlu0 %v567, 8
    %v715 = vpop.permute.xlu0 %714
    %716 = vrot.lane.b32.xlu0 %v568, 8
    %v717 = vpop.permute.xlu0 %716
    %718 = vrot.lane.b32.xlu0 %v569, 8
    %v719 = vpop.permute.xlu0 %718
    %720 = vrot.lane.b32.xlu0 %v570, 8
    %v721 = vpop.permute.xlu0 %720
    %722 = vrot.lane.b32.xlu0 %v571, 8
    %v723 = vpop.permute.xlu0 %722
    %724 = vrot.lane.b32.xlu0 %v572, 8
    %v725 = vpop.permute.xlu0 %724
    %726 = vrot.lane.b32.xlu0 %v573, 8
    %v727 = vpop.permute.xlu0 %726
    %728 = vrot.lane.b32.xlu0 %v574, 8
    %v729 = vpop.permute.xlu0 %728
    %730 = vrot.lane.b32.xlu0 %v575, 8
    %v731 = vpop.permute.xlu0 %730
    %732 = vrot.lane.b32.xlu0 %v576, 8
    %v733 = vpop.permute.xlu0 %732
    %734 = vrot.lane.b32.xlu0 %v577, 8
    %v735 = vpop.permute.xlu0 %734
    %736 = vrot.lane.b32.xlu0 %v578, 8
    %v737 = vpop.permute.xlu0 %736
    %738 = vrot.lane.b32.xlu0 %v579, 8
    %v739 = vpop.permute.xlu0 %738
    %740 = vrot.lane.b32.xlu0 %v580, 8
    %v741 = vpop.permute.xlu0 %740
    %742 = vrot.lane.b32.xlu0 %v581, 8
    %v743 = vpop.permute.xlu0 %742
    %744 = vrot.lane.b32.xlu0 %v582, 8
    %v745 = vpop.permute.xlu0 %744
    %746 = vrot.lane.b32.xlu0 %v583, 8
    %v747 = vpop.permute.xlu0 %746
    %748 = vrot.lane.b32.xlu0 %v584, 8
    %v749 = vpop.permute.xlu0 %748
    %750 = vrot.lane.b32.xlu0 %v585, 8
    %v751 = vpop.permute.xlu0 %750
    %752 = vrot.lane.b32.xlu0 %v586, 8
    %v753 = vpop.permute.xlu0 %752
    %754 = vrot.lane.b32.xlu0 %v587, 8
    %v755 = vpop.permute.xlu0 %754
    %756 = vrot.lane.b32.xlu0 %v588, 8
    %v757 = vpop.permute.xlu0 %756
    %758 = vrot.lane.b32.xlu0 %v589, 8
    %v759 = vpop.permute.xlu0 %758
    %760 = vrot.lane.b32.xlu0 %v590, 8
    %v761 = vpop.permute.xlu0 %760
    %762 = vrot.lane.b32.xlu0 %v591, 8
    %v763 = vpop.permute.xlu0 %762
    %764 = vrot.lane.b32.xlu0 %v592, 8
    %v765 = vpop.permute.xlu0 %764
    %766 = vrot.lane.b32.xlu0 %v593, 8
    %v767 = vpop.permute.xlu0 %766
    %768 = vrot.lane.b32.xlu0 %v594, 8
    %v769 = vpop.permute.xlu0 %768
    %770 = vrot.lane.b32.xlu0 %v595, 8
    %v771 = vpop.permute.xlu0 %770
    %772 = vrot.lane.b32.xlu0 %v596, 8
    %v773 = vpop.permute.xlu0 %772
    %774 = vrot.lane.b32.xlu0 %v597, 8
    %v775 = vpop.permute.xlu0 %774
    %776 = vrot.lane.b32.xlu0 %v598, 8
    %v777 = vpop.permute.xlu0 %776
    %778 = vrot.lane.b32.xlu0 %v599, 8
    %v779 = vpop.permute.xlu0 %778
    %780 = vrot.lane.b32.xlu0 %v600, 8
    %v781 = vpop.permute.xlu0 %780
    %782 = vrot.lane.b32.xlu0 %v601, 8
    %v783 = vpop.permute.xlu0 %782
    %784 = vrot.lane.b32.xlu0 %v602, 8
    %v785 = vpop.permute.xlu0 %784
    %786 = vrot.lane.b32.xlu0 %v603, 8
    %v787 = vpop.permute.xlu0 %786
    %788 = vrot.lane.b32.xlu0 %v604, 8
    %v789 = vpop.permute.xlu0 %788
    %790 = vrot.lane.b32.xlu0 %v605, 8
    %v791 = vpop.permute.xlu0 %790
    %792 = vrot.lane.b32.xlu0 %v606, 8
    %v793 = vpop.permute.xlu0 %792
    %794 = vrot.lane.b32.xlu0 %v607, 8
    %v795 = vpop.permute.xlu0 %794
    %796 = vrot.lane.b32.xlu0 %v608, 8
    %v797 = vpop.permute.xlu0 %796
    %798 = vrot.lane.b32.xlu0 %v609, 8
    %v799 = vpop.permute.xlu0 %798
    %800 = vrot.lane.b32.xlu0 %v610, 8
    %v801 = vpop.permute.xlu0 %800
    %802 = vrot.lane.b32.xlu0 %v611, 8
    %v803 = vpop.permute.xlu0 %802
    %vm868 = vcmask 97344
    %869 = vst.msk [vmem:[#allocation2] sm:$0xff] %vm868, %v677
    %870 = vst.msk [vmem:[#allocation2 + $0x8] sm:$0xff] %vm868, %v679
    %871 = vst.msk [vmem:[#allocation2 + $0x10] sm:$0xff] %vm868, %v681
    %872 = vst.msk [vmem:[#allocation2 + $0x18] sm:$0xff] %vm868, %v683
    %873 = vst.msk [vmem:[#allocation2 + $0x20] sm:$0xff] %vm868, %v685
    %874 = vst.msk [vmem:[#allocation2 + $0x28] sm:$0xff] %vm868, %v687
    %875 = vst.msk [vmem:[#allocation2 + $0x30] sm:$0xff] %vm868, %v689
    %876 = vst.msk [vmem:[#allocation2 + $0x38] sm:$0xff] %vm868, %v691
    %877 = vst.msk [vmem:[#allocation2 + $0x40] sm:$0xff] %vm868, %v693
    %878 = vst.msk [vmem:[#allocation2 + $0x48] sm:$0xff] %vm868, %v695
    %879 = vst.msk [vmem:[#allocation2 + $0x50] sm:$0xff] %vm868, %v697
    %880 = vst.msk [vmem:[#allocation2 + $0x58] sm:$0xff] %vm868, %v699
    %881 = vst.msk [vmem:[#allocation2 + $0x60] sm:$0xff] %vm868, %v701
    %882 = vst.msk [vmem:[#allocation2 + $0x68] sm:$0xff] %vm868, %v703
    %883 = vst.msk [vmem:[#allocation2 + $0x70] sm:$0xff] %vm868, %v705
    %884 = vst.msk [vmem:[#allocation2 + $0x78] sm:$0xff] %vm868, %v707
    %885 = vst.msk [vmem:[#allocation2 + $0x80] sm:$0xff] %vm868, %v709
    %886 = vst.msk [vmem:[#allocation2 + $0x88] sm:$0xff] %vm868, %v711
    %887 = vst.msk [vmem:[#allocation2 + $0x90] sm:$0xff] %vm868, %v713
    %888 = vst.msk [vmem:[#allocation2 + $0x98] sm:$0xff] %vm868, %v715
    %889 = vst.msk [vmem:[#allocation2 + $0xa0] sm:$0xff] %vm868, %v717
    %890 = vst.msk [vmem:[#allocation2 + $0xa8] sm:$0xff] %vm868, %v719
    %891 = vst.msk [vmem:[#allocation2 + $0xb0] sm:$0xff] %vm868, %v721
    %892 = vst.msk [vmem:[#allocation2 + $0xb8] sm:$0xff] %vm868, %v723
    %893 = vst.msk [vmem:[#allocation2 + $0xc0] sm:$0xff] %vm868, %v725
    %894 = vst.msk [vmem:[#allocation2 + $0xc8] sm:$0xff] %vm868, %v727
    %895 = vst.msk [vmem:[#allocation2 + $0xd0] sm:$0xff] %vm868, %v729
    %896 = vst.msk [vmem:[#allocation2 + $0xd8] sm:$0xff] %vm868, %v731
    %897 = vst.msk [vmem:[#allocation2 + $0xe0] sm:$0xff] %vm868, %v733
    %898 = vst.msk [vmem:[#allocation2 + $0xe8] sm:$0xff] %vm868, %v735
    %899 = vst.msk [vmem:[#allocation2 + $0xf0] sm:$0xff] %vm868, %v737
    %900 = vst.msk [vmem:[#allocation2 + $0xf8] sm:$0xff] %vm868, %v739
    %901 = vst.msk [vmem:[#allocation2 + $0x100] sm:$0xff] %vm868, %v741
    %902 = vst.msk [vmem:[#allocation2 + $0x108] sm:$0xff] %vm868, %v743
    %903 = vst.msk [vmem:[#allocation2 + $0x110] sm:$0xff] %vm868, %v745
    %904 = vst.msk [vmem:[#allocation2 + $0x118] sm:$0xff] %vm868, %v747
    %905 = vst.msk [vmem:[#allocation2 + $0x120] sm:$0xff] %vm868, %v749
    %906 = vst.msk [vmem:[#allocation2 + $0x128] sm:$0xff] %vm868, %v751
    %907 = vst.msk [vmem:[#allocation2 + $0x130] sm:$0xff] %vm868, %v753
    %908 = vst.msk [vmem:[#allocation2 + $0x138] sm:$0xff] %vm868, %v755
    %909 = vst.msk [vmem:[#allocation2 + $0x140] sm:$0xff] %vm868, %v757
    %910 = vst.msk [vmem:[#allocation2 + $0x148] sm:$0xff] %vm868, %v759
    %911 = vst.msk [vmem:[#allocation2 + $0x150] sm:$0xff] %vm868, %v761
    %912 = vst.msk [vmem:[#allocation2 + $0x158] sm:$0xff] %vm868, %v763
    %913 = vst.msk [vmem:[#allocation2 + $0x160] sm:$0xff] %vm868, %v765
    %914 = vst.msk [vmem:[#allocation2 + $0x168] sm:$0xff] %vm868, %v767
    %915 = vst.msk [vmem:[#allocation2 + $0x170] sm:$0xff] %vm868, %v769
    %916 = vst.msk [vmem:[#allocation2 + $0x178] sm:$0xff] %vm868, %v771
    %917 = vst.msk [vmem:[#allocation2 + $0x180] sm:$0xff] %vm868, %v773
    %918 = vst.msk [vmem:[#allocation2 + $0x188] sm:$0xff] %vm868, %v775
    %919 = vst.msk [vmem:[#allocation2 + $0x190] sm:$0xff] %vm868, %v777
    %920 = vst.msk [vmem:[#allocation2 + $0x198] sm:$0xff] %vm868, %v779
    %921 = vst.msk [vmem:[#allocation2 + $0x1a0] sm:$0xff] %vm868, %v781
    %922 = vst.msk [vmem:[#allocation2 + $0x1a8] sm:$0xff] %vm868, %v783
    %923 = vst.msk [vmem:[#allocation2 + $0x1b0] sm:$0xff] %vm868, %v785
    %924 = vst.msk [vmem:[#allocation2 + $0x1b8] sm:$0xff] %vm868, %v787
    %925 = vst.msk [vmem:[#allocation2 + $0x1c0] sm:$0xff] %vm868, %v789
    %926 = vst.msk [vmem:[#allocation2 + $0x1c8] sm:$0xff] %vm868, %v791
    %927 = vst.msk [vmem:[#allocation2 + $0x1d0] sm:$0xff] %vm868, %v793
    %928 = vst.msk [vmem:[#allocation2 + $0x1d8] sm:$0xff] %vm868, %v795
    %929 = vst.msk [vmem:[#allocation2 + $0x1e0] sm:$0xff] %vm868, %v797
    %930 = vst.msk [vmem:[#allocation2 + $0x1e8] sm:$0xff] %vm868, %v799
    %931 = vst.msk [vmem:[#allocation2 + $0x1f0] sm:$0xff] %vm868, %v801
    %vm932 = vcmask 95296
    %933 = vst.msk [vmem:[#allocation2 + $0x1f8] sm:$0x3f] %vm932, %v803
    %v934 = vld [vmem:[%s1] sm:$0xff]
    %v935 = vld [vmem:[%s1 + $0x8] sm:$0xf]
    %s936 = scalar_lea.vmem %s1, 16
    %v937 = vld [vmem:[%s936] sm:$0xff]
    %v938 = vld [vmem:[%s936 + $0x8] sm:$0xf]
    %s939 = scalar_lea.vmem %s1, 32
    %v940 = vld [vmem:[%s939] sm:$0xff]
    %v941 = vld [vmem:[%s939 + $0x8] sm:$0xf]
    %v942 = vld [vmem:[%s2] sm:$0x1]
    %v943 = vld [vmem:[#allocation2] sm:$0xff]
    %v944 = vld [vmem:[#allocation2 + $0x8] sm:$0xff]
    %v945 = vld [vmem:[#allocation2 + $0x10] sm:$0xff]
    %v946 = vld [vmem:[#allocation2 + $0x18] sm:$0xff]
    %v947 = vld [vmem:[#allocation2 + $0x20] sm:$0xff]
    %v948 = vld [vmem:[#allocation2 + $0x28] sm:$0xff]
    %v949 = vld [vmem:[#allocation2 + $0x30] sm:$0xff]
    %v950 = vld [vmem:[#allocation2 + $0x38] sm:$0xff]
    %v951 = vld [vmem:[#allocation2 + $0x40] sm:$0xff]
    %v952 = vld [vmem:[#allocation2 + $0x48] sm:$0xff]
    %v953 = vld [vmem:[#allocation2 + $0x50] sm:$0xff]
    %v954 = vld [vmem:[#allocation2 + $0x58] sm:$0xff]
    %v955 = vld [vmem:[#allocation2 + $0x60] sm:$0xff]
    %v956 = vld [vmem:[#allocation2 + $0x68] sm:$0xff]
    %v957 = vld [vmem:[#allocation2 + $0x70] sm:$0xff]
    %v958 = vld [vmem:[#allocation2 + $0x78] sm:$0xff]
    %v959 = vld [vmem:[#allocation2 + $0x80] sm:$0xff]
    %v960 = vld [vmem:[#allocation2 + $0x88] sm:$0xff]
    %v962 = vsel %vm27, %v945, 0
    %v965 = vsel %vm27, %v946, 0
    %v968 = vsel %vm27, %v947, 0
    %v971 = vsel %vm27, %v948, 0
    %v974 = vsel %vm27, %v949, 0
    %v977 = vsel %vm27, %v950, 0
    %v980 = vsel %vm27, %v951, 0
    %v983 = vsel %vm27, %v952, 0
    %v986 = vsel %vm27, %v953, 0
    %v989 = vsel %vm27, %v954, 0
    %v992 = vsel %vm27, %v955, 0
    %v995 = vsel %vm27, %v956, 0
    %v998 = vsel %vm27, %v957, 0
    %v1001 = vsel %vm27, %v958, 0
    %v1004 = vsel %vm27, %v959, 0
    %v1007 = vsel %vm27, %v960, 0
    %vm1009 = vcmask 1043456
    %v1011 = vsel %vm1009, %v938, 0
    %1013 = vmatprep.subr.mxu0 0.0
    %1014 = vmatpush1.msra.mxu0 %v937
    %1015 = vmatprep.subr.mxu0 0.0
    %1016 = vmatpush1.msra.mxu0 %v1011
    %1017 = vmatprep.subr.mxu0 0.0
    %1018 = vmatpush1.msra.mxu0 0.0
    %1019 = vmatprep.subr.mxu0 0.0
    %1020 = vmatpush1.msra.mxu0 0.0
    %1021 = vmatprep.subr.mxu0 0.0
    %1022 = vmatpush1.msra.mxu0 0.0
    %1023 = vmatprep.subr.mxu0 0.0
    %1024 = vmatpush1.msra.mxu0 0.0
    %1025 = vmatprep.subr.mxu0 0.0
    %1026 = vmatpush1.msra.mxu0 0.0
    %1027 = vmatprep.subr.mxu0 0.0
    %1028 = vmatpush1.msra.mxu0 0.0
    %1029 = vmatprep.subr.mxu0 0.0
    %1030 = vmatpush1.msra.mxu0 0.0
    %1031 = vmatprep.subr.mxu0 0.0
    %1032 = vmatpush1.msra.mxu0 0.0
    %1033 = vmatprep.subr.mxu0 0.0
    %1034 = vmatpush1.msra.mxu0 0.0
    %1035 = vmatprep.subr.mxu0 0.0
    %1036 = vmatpush1.msra.mxu0 0.0
    %1037 = vmatprep.subr.mxu0 0.0
    %1038 = vmatpush1.msra.mxu0 0.0
    %1039 = vmatprep.subr.mxu0 0.0
    %1040 = vmatpush1.msra.mxu0 0.0
    %1041 = vmatprep.subr.mxu0 0.0
    %1042 = vmatpush1.msra.mxu0 0.0
    %1043 = vmatprep.subr.mxu0 0.0
    %1044 = vmatpush1.msra.mxu0 0.0
    %1045 = vmatprep.subr.mxu0 0.0
    %1046 = vmatpush1.msra.mxu0 0.0
    %1047 = vmatprep.subr.mxu0 0.0
    %1048 = vmatpush1.msra.mxu0 0.0
    %1049 = vmatprep.subr.mxu0 0.0
    %1050 = vmatpush1.msra.mxu0 0.0
    %1051 = vmatprep.subr.mxu0 0.0
    %1052 = vmatpush1.msra.mxu0 0.0
    %1053 = vmatprep.subr.mxu0 0.0
    %1054 = vmatpush1.msra.mxu0 0.0
    %1055 = vmatprep.subr.mxu0 0.0
    %1056 = vmatpush1.msra.mxu0 0.0
    %1057 = vmatprep.subr.mxu0 0.0
    %1058 = vmatpush1.msra.mxu0 0.0
    %1059 = vmatprep.subr.mxu0 0.0
    %1060 = vmatpush1.msra.mxu0 0.0
    %1061 = vmatprep.subr.mxu0 0.0
    %1062 = vmatpush1.msra.mxu0 0.0
    %1063 = vmatprep.subr.mxu0 0.0
    %1064 = vmatpush1.msra.mxu0 0.0
    %1065 = vmatprep.subr.mxu0 0.0
    %1066 = vmatpush1.msra.mxu0 0.0
    %1067 = vmatprep.subr.mxu0 0.0
    %1068 = vmatpush1.msra.mxu0 0.0
    %1069 = vmatprep.subr.mxu0 0.0
    %1070 = vmatpush1.msra.mxu0 0.0
    %1071 = vmatprep.subr.mxu0 0.0
    %1072 = vmatpush1.msra.mxu0 0.0
    %1073 = vmatprep.subr.mxu0 0.0
    %1074 = vmatpush1.msra.mxu0 0.0
    %1075 = vmatprep.subr.mxu0 0.0
    %1076 = vmatpush1.msra.mxu0 0.0
    %1077 = vmatprep.mubr.f32.mxu0 0.0
    %1078 = vmatmul.mubr.f32.gmra.mrb[0].mxu0 %v962
    %v1079 = vpop.f32.mrb[0].mxu0
    %v1080 = vadd.f32 0.0, %v1079
    %v1081 = vpop.f32.mrb[0].mxu0
    %1082 = vmatprep.mubr.f32.mxu0 0.0
    %1083 = vmatmul.mubr.f32.gmra.mrb[0].mxu0 %v965
    %v1084 = vpop.f32.mrb[0].mxu0
    %v1085 = vadd.f32 0.0, %v1084
    %v1086 = vpop.f32.mrb[0].mxu0
    %1087 = vmatprep.mubr.f32.mxu0 0.0
    %1088 = vmatmul.mubr.f32.gmra.mrb[0].mxu0 %v968
    %v1089 = vpop.f32.mrb[0].mxu0
    %v1090 = vadd.f32 0.0, %v1089
    %v1091 = vpop.f32.mrb[0].mxu0
    %1092 = vmatprep.mubr.f32.mxu0 0.0
    %1093 = vmatmul.mubr.f32.gmra.mrb[0].mxu0 %v971
    %v1094 = vpop.f32.mrb[0].mxu0
    %v1095 = vadd.f32 0.0, %v1094
    %v1096 = vpop.f32.mrb[0].mxu0
    %1097 = vmatprep.mubr.f32.mxu0 0.0
    %1098 = vmatmul.mubr.f32.gmra.mrb[0].mxu0 %v974
    %v1099 = vpop.f32.mrb[0].mxu0
    %v1100 = vadd.f32 0.0, %v1099
    %v1101 = vpop.f32.mrb[0].mxu0
    %1102 = vmatprep.mubr.f32.mxu0 0.0
    %1103 = vmatmul.mubr.f32.gmra.mrb[0].mxu0 %v977
    %v1104 = vpop.f32.mrb[0].mxu0
    %v1105 = vadd.f32 0.0, %v1104
    %v1106 = vpop.f32.mrb[0].mxu0
    %1107 = vmatprep.mubr.f32.mxu0 0.0
    %1108 = vmatmul.mubr.f32.gmra.mrb[0].mxu0 %v980
    %v1109 = vpop.f32.mrb[0].mxu0
    %v1110 = vadd.f32 0.0, %v1109
    %v1111 = vpop.f32.mrb[0].mxu0
    %1112 = vmatprep.mubr.f32.mxu0 0.0
    %1113 = vmatmul.mubr.f32.gmra.mrb[0].mxu0 %v983
    %v1114 = vpop.f32.mrb[0].mxu0
    %v1115 = vadd.f32 0.0, %v1114
    %v1116 = vpop.f32.mrb[0].mxu0
    %1117 = vmatprep.mubr.f32.mxu0 0.0
    %1118 = vmatmul.mubr.f32.gmra.mrb[0].mxu0 %v986
    %v1119 = vpop.f32.mrb[0].mxu0
    %v1120 = vadd.f32 0.0, %v1119
    %v1121 = vpop.f32.mrb[0].mxu0
    %1122 = vmatprep.mubr.f32.mxu0 0.0
    %1123 = vmatmul.mubr.f32.gmra.mrb[0].mxu0 %v989
    %v1124 = vpop.f32.mrb[0].mxu0
    %v1125 = vadd.f32 0.0, %v1124
    %v1126 = vpop.f32.mrb[0].mxu0
    %1127 = vmatprep.mubr.f32.mxu0 0.0
    %1128 = vmatmul.mubr.f32.gmra.mrb[0].mxu0 %v992
    %v1129 = vpop.f32.mrb[0].mxu0
    %v1130 = vadd.f32 0.0, %v1129
    %v1131 = vpop.f32.mrb[0].mxu0
    %1132 = vmatprep.mubr.f32.mxu0 0.0
    %1133 = vmatmul.mubr.f32.gmra.mrb[0].mxu0 %v995
    %v1134 = vpop.f32.mrb[0].mxu0
    %v1135 = vadd.f32 0.0, %v1134
    %v1136 = vpop.f32.mrb[0].mxu0
    %1137 = vmatprep.mubr.f32.mxu0 0.0
    %1138 = vmatmul.mubr.f32.gmra.mrb[0].mxu0 %v998
    %v1139 = vpop.f32.mrb[0].mxu0
    %v1140 = vadd.f32 0.0, %v1139
    %v1141 = vpop.f32.mrb[0].mxu0
    %1142 = vmatprep.mubr.f32.mxu0 0.0
    %1143 = vmatmul.mubr.f32.gmra.mrb[0].mxu0 %v1001
    %v1144 = vpop.f32.mrb[0].mxu0
    %v1145 = vadd.f32 0.0, %v1144
    %v1146 = vpop.f32.mrb[0].mxu0
    %1147 = vmatprep.mubr.f32.mxu0 0.0
    %1148 = vmatmul.mubr.f32.gmra.mrb[0].mxu0 %v1004
    %v1149 = vpop.f32.mrb[0].mxu0
    %v1150 = vadd.f32 0.0, %v1149
    %v1151 = vpop.f32.mrb[0].mxu0
    %1152 = vmatprep.mubr.f32.mxu0 0.0
    %1153 = vmatmul.mubr.f32.gmra.mrb[0].mxu0 %v1007
    %v1154 = vpop.f32.mrb[0].mxu0
    %v1155 = vadd.f32 0.0, %v1154
    %v1156 = vpop.f32.mrb[0].mxu0
    %1157 = vdwg.mxu0
    %v1159 = vsel %vm27, %v943, 0
    %v1162 = vsel %vm27, %v944, 0
    %v1165 = vsel %vm1009, %v935, 0
    %1167 = vmatprep.subr.mxu0 0.0
    %1168 = vmatpush1.msra.mxu0 %v934
    %1169 = vmatprep.subr.mxu0 0.0
    %1170 = vmatpush1.msra.mxu0 %v1165
    %1171 = vmatprep.subr.mxu0 0.0
    %1172 = vmatpush1.msra.mxu0 0.0
    %1173 = vmatprep.subr.mxu0 0.0
    %1174 = vmatpush1.msra.mxu0 0.0
    %1175 = vmatprep.subr.mxu0 0.0
    %1176 = vmatpush1.msra.mxu0 0.0
    %1177 = vmatprep.subr.mxu0 0.0
    %1178 = vmatpush1.msra.mxu0 0.0
    %1179 = vmatprep.subr.mxu0 0.0
    %1180 = vmatpush1.msra.mxu0 0.0
    %1181 = vmatprep.subr.mxu0 0.0
    %1182 = vmatpush1.msra.mxu0 0.0
    %1183 = vmatprep.subr.mxu0 0.0
    %1184 = vmatpush1.msra.mxu0 0.0
    %1185 = vmatprep.subr.mxu0 0.0
    %1186 = vmatpush1.msra.mxu0 0.0
    %1187 = vmatprep.subr.mxu0 0.0
    %1188 = vmatpush1.msra.mxu0 0.0
    %1189 = vmatprep.subr.mxu0 0.0
    %1190 = vmatpush1.msra.mxu0 0.0
    %1191 = vmatprep.subr.mxu0 0.0
    %1192 = vmatpush1.msra.mxu0 0.0
    %1193 = vmatprep.subr.mxu0 0.0
    %1194 = vmatpush1.msra.mxu0 0.0
    %1195 = vmatprep.subr.mxu0 0.0
    %1196 = vmatpush1.msra.mxu0 0.0
    %1197 = vmatprep.subr.mxu0 0.0
    %1198 = vmatpush1.msra.mxu0 0.0
    %1199 = vmatprep.subr.mxu0 0.0
    %1200 = vmatpush1.msra.mxu0 0.0
    %1201 = vmatprep.subr.mxu0 0.0
    %1202 = vmatpush1.msra.mxu0 0.0
    %1203 = vmatprep.subr.mxu0 0.0
    %1204 = vmatpush1.msra.mxu0 0.0
    %1205 = vmatprep.subr.mxu0 0.0
    %1206 = vmatpush1.msra.mxu0 0.0
    %1207 = vmatprep.subr.mxu0 0.0
    %1208 = vmatpush1.msra.mxu0 0.0
    %1209 = vmatprep.subr.mxu0 0.0
    %1210 = vmatpush1.msra.mxu0 0.0
    %1211 = vmatprep.subr.mxu0 0.0
    %1212 = vmatpush1.msra.mxu0 0.0
    %1213 = vmatprep.subr.mxu0 0.0
    %1214 = vmatpush1.msra.mxu0 0.0
    %1215 = vmatprep.subr.mxu0 0.0
    %1216 = vmatpush1.msra.mxu0 0.0
    %1217 = vmatprep.subr.mxu0 0.0
    %1218 = vmatpush1.msra.mxu0 0.0
    %1219 = vmatprep.subr.mxu0 0.0
    %1220 = vmatpush1.msra.mxu0 0.0
    %1221 = vmatprep.subr.mxu0 0.0
    %1222 = vmatpush1.msra.mxu0 0.0
    %1223 = vmatprep.subr.mxu0 0.0
    %1224 = vmatpush1.msra.mxu0 0.0
    %1225 = vmatprep.subr.mxu0 0.0
    %1226 = vmatpush1.msra.mxu0 0.0
    %1227 = vmatprep.subr.mxu0 0.0
    %1228 = vmatpush1.msra.mxu0 0.0
    %1229 = vmatprep.subr.mxu0 0.0
    %1230 = vmatpush1.msra.mxu0 0.0
    %1231 = vmatprep.mubr.f32.mxu0 0.0
    %1232 = vmatmul.mubr.f32.gmra.mrb[0].mxu0 %v1159
    %v1233 = vpop.f32.mrb[0].mxu0
    %v1234 = vadd.f32 %v1080, %v1233
    %v1235 = vpop.f32.mrb[0].mxu0
    %1236 = vmatprep.mubr.f32.mxu0 0.0
    %1237 = vmatmul.mubr.f32.gmra.mrb[0].mxu0 %v1162
    %v1238 = vpop.f32.mrb[0].mxu0
    %v1239 = vadd.f32 %v1085, %v1238
    %v1240 = vpop.f32.mrb[0].mxu0
    %1241 = vmatprep.mubr.f32.mxu0 0.0
    %1242 = vmatmul.mubr.f32.gmra.mrb[0].mxu0 %v962
    %v1243 = vpop.f32.mrb[0].mxu0
    %v1244 = vadd.f32 %v1090, %v1243
    %v1245 = vpop.f32.mrb[0].mxu0
    %1246 = vmatprep.mubr.f32.mxu0 0.0
    %1247 = vmatmul.mubr.f32.gmra.mrb[0].mxu0 %v965
    %v1248 = vpop.f32.mrb[0].mxu0
    %v1249 = vadd.f32 %v1095, %v1248
    %v1250 = vpop.f32.mrb[0].mxu0
    %1251 = vmatprep.mubr.f32.mxu0 0.0
    %1252 = vmatmul.mubr.f32.gmra.mrb[0].mxu0 %v968
    %v1253 = vpop.f32.mrb[0].mxu0
    %v1254 = vadd.f32 %v1100, %v1253
    %v1255 = vpop.f32.mrb[0].mxu0
    %1256 = vmatprep.mubr.f32.mxu0 0.0
    %1257 = vmatmul.mubr.f32.gmra.mrb[0].mxu0 %v971
    %v1258 = vpop.f32.mrb[0].mxu0
    %v1259 = vadd.f32 %v1105, %v1258
    %v1260 = vpop.f32.mrb[0].mxu0
    %1261 = vmatprep.mubr.f32.mxu0 0.0
    %1262 = vmatmul.mubr.f32.gmra.mrb[0].mxu0 %v974
    %v1263 = vpop.f32.mrb[0].mxu0
    %v1264 = vadd.f32 %v1110, %v1263
    %v1265 = vpop.f32.mrb[0].mxu0
    %1266 = vmatprep.mubr.f32.mxu0 0.0
    %1267 = vmatmul.mubr.f32.gmra.mrb[0].mxu0 %v977
    %v1268 = vpop.f32.mrb[0].mxu0
    %v1269 = vadd.f32 %v1115, %v1268
    %v1270 = vpop.f32.mrb[0].mxu0
    %1271 = vmatprep.mubr.f32.mxu0 0.0
    %1272 = vmatmul.mubr.f32.gmra.mrb[0].mxu0 %v980
    %v1273 = vpop.f32.mrb[0].mxu0
    %v1274 = vadd.f32 %v1120, %v1273
    %v1275 = vpop.f32.mrb[0].mxu0
    %1276 = vmatprep.mubr.f32.mxu0 0.0
    %1277 = vmatmul.mubr.f32.gmra.mrb[0].mxu0 %v983
    %v1278 = vpop.f32.mrb[0].mxu0
    %v1279 = vadd.f32 %v1125, %v1278
    %v1280 = vpop.f32.mrb[0].mxu0
    %1281 = vmatprep.mubr.f32.mxu0 0.0
    %1282 = vmatmul.mubr.f32.gmra.mrb[0].mxu0 %v986
    %v1283 = vpop.f32.mrb[0].mxu0
    %v1284 = vadd.f32 %v1130, %v1283
    %v1285 = vpop.f32.mrb[0].mxu0
    %1286 = vmatprep.mubr.f32.mxu0 0.0
    %1287 = vmatmul.mubr.f32.gmra.mrb[0].mxu0 %v989
    %v1288 = vpop.f32.mrb[0].mxu0
    %v1289 = vadd.f32 %v1135, %v1288
    %v1290 = vpop.f32.mrb[0].mxu0
    %1291 = vmatprep.mubr.f32.mxu0 0.0
    %1292 = vmatmul.mubr.f32.gmra.mrb[0].mxu0 %v992
    %v1293 = vpop.f32.mrb[0].mxu0
    %v1294 = vadd.f32 %v1140, %v1293
    %v1295 = vpop.f32.mrb[0].mxu0
    %1296 = vmatprep.mubr.f32.mxu0 0.0
    %1297 = vmatmul.mubr.f32.gmra.mrb[0].mxu0 %v995
    %v1298 = vpop.f32.mrb[0].mxu0
    %v1299 = vadd.f32 %v1145, %v1298
    %v1300 = vpop.f32.mrb[0].mxu0
    %1301 = vmatprep.mubr.f32.mxu0 0.0
    %1302 = vmatmul.mubr.f32.gmra.mrb[0].mxu0 %v998
    %v1303 = vpop.f32.mrb[0].mxu0
    %v1304 = vadd.f32 %v1150, %v1303
    %v1305 = vpop.f32.mrb[0].mxu0
    %1306 = vmatprep.mubr.f32.mxu0 0.0
    %1307 = vmatmul.mubr.f32.gmra.mrb[0].mxu0 %v1001
    %v1308 = vpop.f32.mrb[0].mxu0
    %v1309 = vadd.f32 %v1155, %v1308
    %v1310 = vpop.f32.mrb[0].mxu0
    %1311 = vdwg.mxu0
    %v1312 = vld [vmem:[#allocation2 + $0x20] sm:$0xff]
    %v1313 = vld [vmem:[#allocation2 + $0x28] sm:$0xff]
    %v1314 = vld [vmem:[#allocation2 + $0x30] sm:$0xff]
    %v1315 = vld [vmem:[#allocation2 + $0x38] sm:$0xff]
    %v1316 = vld [vmem:[#allocation2 + $0x40] sm:$0xff]
    %v1317 = vld [vmem:[#allocation2 + $0x48] sm:$0xff]
    %v1318 = vld [vmem:[#allocation2 + $0x50] sm:$0xff]
    %v1319 = vld [vmem:[#allocation2 + $0x58] sm:$0xff]
    %v1320 = vld [vmem:[#allocation2 + $0x60] sm:$0xff]
    %v1321 = vld [vmem:[#allocation2 + $0x68] sm:$0xff]
    %v1322 = vld [vmem:[#allocation2 + $0x70] sm:$0xff]
    %v1323 = vld [vmem:[#allocation2 + $0x78] sm:$0xff]
    %v1324 = vld [vmem:[#allocation2 + $0x80] sm:$0xff]
    %v1325 = vld [vmem:[#allocation2 + $0x88] sm:$0xff]
    %v1326 = vld [vmem:[#allocation2 + $0x90] sm:$0xff]
    %v1327 = vld [vmem:[#allocation2 + $0x98] sm:$0xff]
    %v1329 = vsel %vm27, %v1312, 0
    %v1332 = vsel %vm27, %v1313, 0
    %v1335 = vsel %vm27, %v1314, 0
    %v1338 = vsel %vm27, %v1315, 0
    %v1341 = vsel %vm27, %v1316, 0
    %v1344 = vsel %vm27, %v1317, 0
    %v1347 = vsel %vm27, %v1318, 0
    %v1350 = vsel %vm27, %v1319, 0
    %v1353 = vsel %vm27, %v1320, 0
    %v1356 = vsel %vm27, %v1321, 0
    %v1359 = vsel %vm27, %v1322, 0
    %v1362 = vsel %vm27, %v1323, 0
    %v1365 = vsel %vm27, %v1324, 0
    %v1368 = vsel %vm27, %v1325, 0
    %v1371 = vsel %vm27, %v1326, 0
    %v1374 = vsel %vm27, %v1327, 0
    %v1377 = vsel %vm1009, %v941, 0
    %1379 = vmatprep.subr.mxu0 0.0
    %1380 = vmatpush1.msra.mxu0 %v940
    %1381 = vmatprep.subr.mxu0 0.0
    %1382 = vmatpush1.msra.mxu0 %v1377
    %1383 = vmatprep.subr.mxu0 0.0
    %1384 = vmatpush1.msra.mxu0 0.0
    %1385 = vmatprep.subr.mxu0 0.0
    %1386 = vmatpush1.msra.mxu0 0.0
    %1387 = vmatprep.subr.mxu0 0.0
    %1388 = vmatpush1.msra.mxu0 0.0
    %1389 = vmatprep.subr.mxu0 0.0
    %1390 = vmatpush1.msra.mxu0 0.0
    %1391 = vmatprep.subr.mxu0 0.0
    %1392 = vmatpush1.msra.mxu0 0.0
    %1393 = vmatprep.subr.mxu0 0.0
    %1394 = vmatpush1.msra.mxu0 0.0
    %1395 = vmatprep.subr.mxu0 0.0
    %1396 = vmatpush1.msra.mxu0 0.0
    %1397 = vmatprep.subr.mxu0 0.0
    %1398 = vmatpush1.msra.mxu0 0.0
    %1399 = vmatprep.subr.mxu0 0.0
    %1400 = vmatpush1.msra.mxu0 0.0
    %1401 = vmatprep.subr.mxu0 0.0
    %1402 = vmatpush1.msra.mxu0 0.0
    %1403 = vmatprep.subr.mxu0 0.0
    %1404 = vmatpush1.msra.mxu0 0.0
    %1405 = vmatprep.subr.mxu0 0.0
    %1406 = vmatpush1.msra.mxu0 0.0
    %1407 = vmatprep.subr.mxu0 0.0
    %1408 = vmatpush1.msra.mxu0 0.0
    %1409 = vmatprep.subr.mxu0 0.0
    %1410 = vmatpush1.msra.mxu0 0.0
    %1411 = vmatprep.subr.mxu0 0.0
    %1412 = vmatpush1.msra.mxu0 0.0
    %1413 = vmatprep.subr.mxu0 0.0
    %1414 = vmatpush1.msra.mxu0 0.0
    %1415 = vmatprep.subr.mxu0 0.0
    %1416 = vmatpush1.msra.mxu0 0.0
    %1417 = vmatprep.subr.mxu0 0.0
    %1418 = vmatpush1.msra.mxu0 0.0
    %1419 = vmatprep.subr.mxu0 0.0
    %1420 = vmatpush1.msra.mxu0 0.0
    %1421 = vmatprep.subr.mxu0 0.0
    %1422 = vmatpush1.msra.mxu0 0.0
    %1423 = vmatprep.subr.mxu0 0.0
    %1424 = vmatpush1.msra.mxu0 0.0
    %1425 = vmatprep.subr.mxu0 0.0
    %1426 = vmatpush1.msra.mxu0 0.0
    %1427 = vmatprep.subr.mxu0 0.0
    %1428 = vmatpush1.msra.mxu0 0.0
    %1429 = vmatprep.subr.mxu0 0.0
    %1430 = vmatpush1.msra.mxu0 0.0
    %1431 = vmatprep.subr.mxu0 0.0
    %1432 = vmatpush1.msra.mxu0 0.0
    %1433 = vmatprep.subr.mxu0 0.0
    %1434 = vmatpush1.msra.mxu0 0.0
    %1435 = vmatprep.subr.mxu0 0.0
    %1436 = vmatpush1.msra.mxu0 0.0
    %1437 = vmatprep.subr.mxu0 0.0
    %1438 = vmatpush1.msra.mxu0 0.0
    %1439 = vmatprep.subr.mxu0 0.0
    %1440 = vmatpush1.msra.mxu0 0.0
    %1441 = vmatprep.subr.mxu0 0.0
    %1442 = vmatpush1.msra.mxu0 0.0
    %1443 = vmatprep.mubr.f32.mxu0 0.0
    %1444 = vmatmul.mubr.f32.gmra.mrb[0].mxu0 %v1329
    %v1445 = vpop.f32.mrb[0].mxu0
    %v1446 = vadd.f32 0.0, %v1445
    %v1447 = vpop.f32.mrb[0].mxu0
    %1448 = vmatprep.mubr.f32.mxu0 0.0
    %1449 = vmatmul.mubr.f32.gmra.mrb[0].mxu0 %v1332
    %v1450 = vpop.f32.mrb[0].mxu0
    %v1451 = vadd.f32 0.0, %v1450
    %v1452 = vpop.f32.mrb[0].mxu0
    %1453 = vmatprep.mubr.f32.mxu0 0.0
    %1454 = vmatmul.mubr.f32.gmra.mrb[0].mxu0 %v1335
    %v1455 = vpop.f32.mrb[0].mxu0
    %v1456 = vadd.f32 0.0, %v1455
    %v1457 = vpop.f32.mrb[0].mxu0
    %1458 = vmatprep.mubr.f32.mxu0 0.0
    %1459 = vmatmul.mubr.f32.gmra.mrb[0].mxu0 %v1338
    %v1460 = vpop.f32.mrb[0].mxu0
    %v1461 = vadd.f32 0.0, %v1460
    %v1462 = vpop.f32.mrb[0].mxu0
    %1463 = vmatprep.mubr.f32.mxu0 0.0
    %1464 = vmatmul.mubr.f32.gmra.mrb[0].mxu0 %v1341
    %v1465 = vpop.f32.mrb[0].mxu0
    %v1466 = vadd.f32 0.0, %v1465
    %v1467 = vpop.f32.mrb[0].mxu0
    %1468 = vmatprep.mubr.f32.mxu0 0.0
    %1469 = vmatmul.mubr.f32.gmra.mrb[0].mxu0 %v1344
    %v1470 = vpop.f32.mrb[0].mxu0
    %v1471 = vadd.f32 0.0, %v1470
    %v1472 = vpop.f32.mrb[0].mxu0
    %1473 = vmatprep.mubr.f32.mxu0 0.0
    %1474 = vmatmul.mubr.f32.gmra.mrb[0].mxu0 %v1347
    %v1475 = vpop.f32.mrb[0].mxu0
    %v1476 = vadd.f32 0.0, %v1475
    %v1477 = vpop.f32.mrb[0].mxu0
    %1478 = vmatprep.mubr.f32.mxu0 0.0
    %1479 = vmatmul.mubr.f32.gmra.mrb[0].mxu0 %v1350
    %v1480 = vpop.f32.mrb[0].mxu0
    %v1481 = vadd.f32 0.0, %v1480
    %v1482 = vpop.f32.mrb[0].mxu0
    %1483 = vmatprep.mubr.f32.mxu0 0.0
    %1484 = vmatmul.mubr.f32.gmra.mrb[0].mxu0 %v1353
    %v1485 = vpop.f32.mrb[0].mxu0
    %v1486 = vadd.f32 0.0, %v1485
    %v1487 = vpop.f32.mrb[0].mxu0
    %1488 = vmatprep.mubr.f32.mxu0 0.0
    %1489 = vmatmul.mubr.f32.gmra.mrb[0].mxu0 %v1356
    %v1490 = vpop.f32.mrb[0].mxu0
    %v1491 = vadd.f32 0.0, %v1490
    %v1492 = vpop.f32.mrb[0].mxu0
    %1493 = vmatprep.mubr.f32.mxu0 0.0
    %1494 = vmatmul.mubr.f32.gmra.mrb[0].mxu0 %v1359
    %v1495 = vpop.f32.mrb[0].mxu0
    %v1496 = vadd.f32 0.0, %v1495
    %v1497 = vpop.f32.mrb[0].mxu0
    %1498 = vmatprep.mubr.f32.mxu0 0.0
    %1499 = vmatmul.mubr.f32.gmra.mrb[0].mxu0 %v1362
    %v1500 = vpop.f32.mrb[0].mxu0
    %v1501 = vadd.f32 0.0, %v1500
    %v1502 = vpop.f32.mrb[0].mxu0
    %1503 = vmatprep.mubr.f32.mxu0 0.0
    %1504 = vmatmul.mubr.f32.gmra.mrb[0].mxu0 %v1365
    %v1505 = vpop.f32.mrb[0].mxu0
    %v1506 = vadd.f32 0.0, %v1505
    %v1507 = vpop.f32.mrb[0].mxu0
    %1508 = vmatprep.mubr.f32.mxu0 0.0
    %1509 = vmatmul.mubr.f32.gmra.mrb[0].mxu0 %v1368
    %v1510 = vpop.f32.mrb[0].mxu0
    %v1511 = vadd.f32 0.0, %v1510
    %v1512 = vpop.f32.mrb[0].mxu0
    %1513 = vmatprep.mubr.f32.mxu0 0.0
    %1514 = vmatmul.mubr.f32.gmra.mrb[0].mxu0 %v1371
    %v1515 = vpop.f32.mrb[0].mxu0
    %v1516 = vadd.f32 0.0, %v1515
    %v1517 = vpop.f32.mrb[0].mxu0
    %1518 = vmatprep.mubr.f32.mxu0 0.0
    %1519 = vmatmul.mubr.f32.gmra.mrb[0].mxu0 %v1374
    %v1520 = vpop.f32.mrb[0].mxu0
    %v1521 = vadd.f32 0.0, %v1520
    %v1522 = vpop.f32.mrb[0].mxu0
    %1523 = vdwg.mxu0
    %v1524 = vadd.f32 %v1234, %v1446
    %v1525 = vadd.f32 %v1239, %v1451
    %v1526 = vadd.f32 %v1244, %v1456
    %v1527 = vadd.f32 %v1249, %v1461
    %v1528 = vadd.f32 %v1254, %v1466
    %v1529 = vadd.f32 %v1259, %v1471
    %v1530 = vadd.f32 %v1264, %v1476
    %v1531 = vadd.f32 %v1269, %v1481
    %v1532 = vadd.f32 %v1274, %v1486
    %v1533 = vadd.f32 %v1279, %v1491
    %v1534 = vadd.f32 %v1284, %v1496
    %v1535 = vadd.f32 %v1289, %v1501
    %v1536 = vadd.f32 %v1294, %v1506
    %v1537 = vadd.f32 %v1299, %v1511
    %v1538 = vadd.f32 %v1304, %v1516
    %v1539 = vadd.f32 %v1309, %v1521
    %v1541 = vlaneseq
    %v1542 = vshrl.u32 %v1541, 7
    %v1543 = vsub.s32 0, %v1542
    %v1544 = vrot.slane %v942, %v1543
    %v1546 = vadd.f32 %v1524, %v1544
    %v1547 = vadd.f32 %v1525, %v1544
    %v1548 = vadd.f32 %v1526, %v1544
    %v1549 = vadd.f32 %v1527, %v1544
    %v1550 = vadd.f32 %v1528, %v1544
    %v1551 = vadd.f32 %v1529, %v1544
    %v1552 = vadd.f32 %v1530, %v1544
    %v1553 = vadd.f32 %v1531, %v1544
    %v1554 = vadd.f32 %v1532, %v1544
    %v1555 = vadd.f32 %v1533, %v1544
    %v1556 = vadd.f32 %v1534, %v1544
    %v1557 = vadd.f32 %v1535, %v1544
    %v1558 = vadd.f32 %v1536, %v1544
    %v1559 = vadd.f32 %v1537, %v1544
    %v1560 = vadd.f32 %v1538, %v1544
    %v1561 = vadd.f32 %v1539, %v1544
    %v1562 = vmax.f32 %v1546, 0.0
    %v1563 = vmax.f32 %v1547, 0.0
    %v1564 = vmax.f32 %v1548, 0.0
    %v1565 = vmax.f32 %v1549, 0.0
    %v1566 = vmax.f32 %v1550, 0.0
    %v1567 = vmax.f32 %v1551, 0.0
    %v1568 = vmax.f32 %v1552, 0.0
    %v1569 = vmax.f32 %v1553, 0.0
    %v1570 = vmax.f32 %v1554, 0.0
    %v1571 = vmax.f32 %v1555, 0.0
    %v1572 = vmax.f32 %v1556, 0.0
    %v1573 = vmax.f32 %v1557, 0.0
    %v1574 = vmax.f32 %v1558, 0.0
    %v1575 = vmax.f32 %v1559, 0.0
    %v1576 = vmax.f32 %v1560, 0.0
    %v1577 = vmax.f32 %v1561, 0.0
    %vm1578 = vcmask 64512
    %1579 = vst.msk [vmem:[#allocation3] sm:$0xff] %vm1578, %v1562
    %1580 = vst.msk [vmem:[#allocation3 + $0x8] sm:$0xff] %vm1578, %v1563
    %1581 = vst.msk [vmem:[#allocation3 + $0x10] sm:$0xff] %vm1578, %v1564
    %1582 = vst.msk [vmem:[#allocation3 + $0x18] sm:$0xff] %vm1578, %v1565
    %1583 = vst.msk [vmem:[#allocation3 + $0x20] sm:$0xff] %vm1578, %v1566
    %1584 = vst.msk [vmem:[#allocation3 + $0x28] sm:$0xff] %vm1578, %v1567
    %1585 = vst.msk [vmem:[#allocation3 + $0x30] sm:$0xff] %vm1578, %v1568
    %1586 = vst.msk [vmem:[#allocation3 + $0x38] sm:$0xff] %vm1578, %v1569
    %1587 = vst.msk [vmem:[#allocation3 + $0x40] sm:$0xff] %vm1578, %v1570
    %1588 = vst.msk [vmem:[#allocation3 + $0x48] sm:$0xff] %vm1578, %v1571
    %1589 = vst.msk [vmem:[#allocation3 + $0x50] sm:$0xff] %vm1578, %v1572
    %1590 = vst.msk [vmem:[#allocation3 + $0x58] sm:$0xff] %vm1578, %v1573
    %1591 = vst.msk [vmem:[#allocation3 + $0x60] sm:$0xff] %vm1578, %v1574
    %1592 = vst.msk [vmem:[#allocation3 + $0x68] sm:$0xff] %vm1578, %v1575
    %1593 = vst.msk [vmem:[#allocation3 + $0x70] sm:$0xff] %vm1578, %v1576
    %1594 = vst.msk [vmem:[#allocation3 + $0x78] sm:$0xff] %vm1578, %v1577
    %v1595 = vld [vmem:[#allocation2 + $0x80] sm:$0xff]
    %v1596 = vld [vmem:[#allocation2 + $0x88] sm:$0xff]
    %v1597 = vld [vmem:[#allocation2 + $0x90] sm:$0xff]
    %v1598 = vld [vmem:[#allocation2 + $0x98] sm:$0xff]
    %v1599 = vld [vmem:[#allocation2 + $0xa0] sm:$0xff]
    %v1600 = vld [vmem:[#allocation2 + $0xa8] sm:$0xff]
    %v1601 = vld [vmem:[#allocation2 + $0xb0] sm:$0xff]
    %v1602 = vld [vmem:[#allocation2 + $0xb8] sm:$0xff]
    %v1603 = vld [vmem:[#allocation2 + $0xc0] sm:$0xff]
    %v1604 = vld [vmem:[#allocation2 + $0xc8] sm:$0xff]
    %v1605 = vld [vmem:[#allocation2 + $0xd0] sm:$0xff]
    %v1606 = vld [vmem:[#allocation2 + $0xd8] sm:$0xff]
    %v1607 = vld [vmem:[#allocation2 + $0xe0] sm:$0xff]
    %v1608 = vld [vmem:[#allocation2 + $0xe8] sm:$0xff]
    %v1609 = vld [vmem:[#allocation2 + $0xf0] sm:$0xff]
    %v1610 = vld [vmem:[#allocation2 + $0xf8] sm:$0xff]
    %v1611 = vld [vmem:[#allocation2 + $0x100] sm:$0xff]
    %v1612 = vld [vmem:[#allocation2 + $0x108] sm:$0xff]
    %v1614 = vsel %vm27, %v1597, 0
    %v1617 = vsel %vm27, %v1598, 0
    %v1620 = vsel %vm27, %v1599, 0
    %v1623 = vsel %vm27, %v1600, 0
    %v1626 = vsel %vm27, %v1601, 0
    %v1629 = vsel %vm27, %v1602, 0
    %v1632 = vsel %vm27, %v1603, 0
    %v1635 = vsel %vm27, %v1604, 0
    %v1638 = vsel %vm27, %v1605, 0
    %v1641 = vsel %vm27, %v1606, 0
    %v1644 = vsel %vm27, %v1607, 0
    %v1647 = vsel %vm27, %v1608, 0
    %v1650 = vsel %vm27, %v1609, 0
    %v1653 = vsel %vm27, %v1610, 0
    %v1656 = vsel %vm27, %v1611, 0
    %v1659 = vsel %vm27, %v1612, 0
    %1661 = vmatprep.subr.mxu0 0.0
    %1662 = vmatpush1.msra.mxu0 %v937
    %1663 = vmatprep.subr.mxu0 0.0
    %1664 = vmatpush1.msra.mxu0 %v1011
    %1665 = vmatprep.subr.mxu0 0.0
    %1666 = vmatpush1.msra.mxu0 0.0
    %1667 = vmatprep.subr.mxu0 0.0
    %1668 = vmatpush1.msra.mxu0 0.0
    %1669 = vmatprep.subr.mxu0 0.0
    %1670 = vmatpush1.msra.mxu0 0.0
    %1671 = vmatprep.subr.mxu0 0.0
    %1672 = vmatpush1.msra.mxu0 0.0
    %1673 = vmatprep.subr.mxu0 0.0
    %1674 = vmatpush1.msra.mxu0 0.0
    %1675 = vmatprep.subr.mxu0 0.0
    %1676 = vmatpush1.msra.mxu0 0.0
    %1677 = vmatprep.subr.mxu0 0.0
    %1678 = vmatpush1.msra.mxu0 0.0
    %1679 = vmatprep.subr.mxu0 0.0
    %1680 = vmatpush1.msra.mxu0 0.0
    %1681 = vmatprep.subr.mxu0 0.0
    %1682 = vmatpush1.msra.mxu0 0.0
    %1683 = vmatprep.subr.mxu0 0.0
    %1684 = vmatpush1.msra.mxu0 0.0
    %1685 = vmatprep.subr.mxu0 0.0
    %1686 = vmatpush1.msra.mxu0 0.0
    %1687 = vmatprep.subr.mxu0 0.0
    %1688 = vmatpush1.msra.mxu0 0.0
    %1689 = vmatprep.subr.mxu0 0.0
    %1690 = vmatpush1.msra.mxu0 0.0
    %1691 = vmatprep.subr.mxu0 0.0
    %1692 = vmatpush1.msra.mxu0 0.0
    %1693 = vmatprep.subr.mxu0 0.0
    %1694 = vmatpush1.msra.mxu0 0.0
    %1695 = vmatprep.subr.mxu0 0.0
    %1696 = vmatpush1.msra.mxu0 0.0
    %1697 = vmatprep.subr.mxu0 0.0
    %1698 = vmatpush1.msra.mxu0 0.0
    %1699 = vmatprep.subr.mxu0 0.0
    %1700 = vmatpush1.msra.mxu0 0.0
    %1701 = vmatprep.subr.mxu0 0.0
    %1702 = vmatpush1.msra.mxu0 0.0
    %1703 = vmatprep.subr.mxu0 0.0
    %1704 = vmatpush1.msra.mxu0 0.0
    %1705 = vmatprep.subr.mxu0 0.0
    %1706 = vmatpush1.msra.mxu0 0.0
    %1707 = vmatprep.subr.mxu0 0.0
    %1708 = vmatpush1.msra.mxu0 0.0
    %1709 = vmatprep.subr.mxu0 0.0
    %1710 = vmatpush1.msra.mxu0 0.0
    %1711 = vmatprep.subr.mxu0 0.0
    %1712 = vmatpush1.msra.mxu0 0.0
    %1713 = vmatprep.subr.mxu0 0.0
    %1714 = vmatpush1.msra.mxu0 0.0
    %1715 = vmatprep.subr.mxu0 0.0
    %1716 = vmatpush1.msra.mxu0 0.0
    %1717 = vmatprep.subr.mxu0 0.0
    %1718 = vmatpush1.msra.mxu0 0.0
    %1719 = vmatprep.subr.mxu0 0.0
    %1720 = vmatpush1.msra.mxu0 0.0
    %1721 = vmatprep.subr.mxu0 0.0
    %1722 = vmatpush1.msra.mxu0 0.0
    %1723 = vmatprep.subr.mxu0 0.0
    %1724 = vmatpush1.msra.mxu0 0.0
    %1725 = vmatprep.mubr.f32.mxu0 0.0
    %1726 = vmatmul.mubr.f32.gmra.mrb[0].mxu0 %v1614
    %v1727 = vpop.f32.mrb[0].mxu0
    %v1728 = vadd.f32 0.0, %v1727
    %v1729 = vpop.f32.mrb[0].mxu0
    %1730 = vmatprep.mubr.f32.mxu0 0.0
    %1731 = vmatmul.mubr.f32.gmra.mrb[0].mxu0 %v1617
    %v1732 = vpop.f32.mrb[0].mxu0
    %v1733 = vadd.f32 0.0, %v1732
    %v1734 = vpop.f32.mrb[0].mxu0
    %1735 = vmatprep.mubr.f32.mxu0 0.0
    %1736 = vmatmul.mubr.f32.gmra.mrb[0].mxu0 %v1620
    %v1737 = vpop.f32.mrb[0].mxu0
    %v1738 = vadd.f32 0.0, %v1737
    %v1739 = vpop.f32.mrb[0].mxu0
    %1740 = vmatprep.mubr.f32.mxu0 0.0
    %1741 = vmatmul.mubr.f32.gmra.mrb[0].mxu0 %v1623
    %v1742 = vpop.f32.mrb[0].mxu0
    %v1743 = vadd.f32 0.0, %v1742
    %v1744 = vpop.f32.mrb[0].mxu0
    %1745 = vmatprep.mubr.f32.mxu0 0.0
    %1746 = vmatmul.mubr.f32.gmra.mrb[0].mxu0 %v1626
    %v1747 = vpop.f32.mrb[0].mxu0
    %v1748 = vadd.f32 0.0, %v1747
    %v1749 = vpop.f32.mrb[0].mxu0
    %1750 = vmatprep.mubr.f32.mxu0 0.0
    %1751 = vmatmul.mubr.f32.gmra.mrb[0].mxu0 %v1629
    %v1752 = vpop.f32.mrb[0].mxu0
    %v1753 = vadd.f32 0.0, %v1752
    %v1754 = vpop.f32.mrb[0].mxu0
    %1755 = vmatprep.mubr.f32.mxu0 0.0
    %1756 = vmatmul.mubr.f32.gmra.mrb[0].mxu0 %v1632
    %v1757 = vpop.f32.mrb[0].mxu0
    %v1758 = vadd.f32 0.0, %v1757
    %v1759 = vpop.f32.mrb[0].mxu0
    %1760 = vmatprep.mubr.f32.mxu0 0.0
    %1761 = vmatmul.mubr.f32.gmra.mrb[0].mxu0 %v1635
    %v1762 = vpop.f32.mrb[0].mxu0
    %v1763 = vadd.f32 0.0, %v1762
    %v1764 = vpop.f32.mrb[0].mxu0
    %1765 = vmatprep.mubr.f32.mxu0 0.0
    %1766 = vmatmul.mubr.f32.gmra.mrb[0].mxu0 %v1638
    %v1767 = vpop.f32.mrb[0].mxu0
    %v1768 = vadd.f32 0.0, %v1767
    %v1769 = vpop.f32.mrb[0].mxu0
    %1770 = vmatprep.mubr.f32.mxu0 0.0
    %1771 = vmatmul.mubr.f32.gmra.mrb[0].mxu0 %v1641
    %v1772 = vpop.f32.mrb[0].mxu0
    %v1773 = vadd.f32 0.0, %v1772
    %v1774 = vpop.f32.mrb[0].mxu0
    %1775 = vmatprep.mubr.f32.mxu0 0.0
    %1776 = vmatmul.mubr.f32.gmra.mrb[0].mxu0 %v1644
    %v1777 = vpop.f32.mrb[0].mxu0
    %v1778 = vadd.f32 0.0, %v1777
    %v1779 = vpop.f32.mrb[0].mxu0
    %1780 = vmatprep.mubr.f32.mxu0 0.0
    %1781 = vmatmul.mubr.f32.gmra.mrb[0].mxu0 %v1647
    %v1782 = vpop.f32.mrb[0].mxu0
    %v1783 = vadd.f32 0.0, %v1782
    %v1784 = vpop.f32.mrb[0].mxu0
    %1785 = vmatprep.mubr.f32.mxu0 0.0
    %1786 = vmatmul.mubr.f32.gmra.mrb[0].mxu0 %v1650
    %v1787 = vpop.f32.mrb[0].mxu0
    %v1788 = vadd.f32 0.0, %v1787
    %v1789 = vpop.f32.mrb[0].mxu0
    %1790 = vmatprep.mubr.f32.mxu0 0.0
    %1791 = vmatmul.mubr.f32.gmra.mrb[0].mxu0 %v1653
    %v1792 = vpop.f32.mrb[0].mxu0
    %v1793 = vadd.f32 0.0, %v1792
    %v1794 = vpop.f32.mrb[0].mxu0
    %1795 = vmatprep.mubr.f32.mxu0 0.0
    %1796 = vmatmul.mubr.f32.gmra.mrb[0].mxu0 %v1656
    %v1797 = vpop.f32.mrb[0].mxu0
    %v1798 = vadd.f32 0.0, %v1797
    %v1799 = vpop.f32.mrb[0].mxu0
    %1800 = vmatprep.mubr.f32.mxu0 0.0
    %1801 = vmatmul.mubr.f32.gmra.mrb[0].mxu0 %v1659
    %v1802 = vpop.f32.mrb[0].mxu0
    %v1803 = vadd.f32 0.0, %v1802
    %v1804 = vpop.f32.mrb[0].mxu0
    %1805 = vdwg.mxu0
    %v1807 = vsel %vm27, %v1595, 0
    %v1810 = vsel %vm27, %v1596, 0
    %1812 = vmatprep.subr.mxu0 0.0
    %1813 = vmatpush1.msra.mxu0 %v934
    %1814 = vmatprep.subr.mxu0 0.0
    %1815 = vmatpush1.msra.mxu0 %v1165
    %1816 = vmatprep.subr.mxu0 0.0
    %1817 = vmatpush1.msra.mxu0 0.0
    %1818 = vmatprep.subr.mxu0 0.0
    %1819 = vmatpush1.msra.mxu0 0.0
    %1820 = vmatprep.subr.mxu0 0.0
    %1821 = vmatpush1.msra.mxu0 0.0
    %1822 = vmatprep.subr.mxu0 0.0
    %1823 = vmatpush1.msra.mxu0 0.0
    %1824 = vmatprep.subr.mxu0 0.0
    %1825 = vmatpush1.msra.mxu0 0.0
    %1826 = vmatprep.subr.mxu0 0.0
    %1827 = vmatpush1.msra.mxu0 0.0
    %1828 = vmatprep.subr.mxu0 0.0
    %1829 = vmatpush1.msra.mxu0 0.0
    %1830 = vmatprep.subr.mxu0 0.0
    %1831 = vmatpush1.msra.mxu0 0.0
    %1832 = vmatprep.subr.mxu0 0.0
    %1833 = vmatpush1.msra.mxu0 0.0
    %1834 = vmatprep.subr.mxu0 0.0
    %1835 = vmatpush1.msra.mxu0 0.0
    %1836 = vmatprep.subr.mxu0 0.0
    %1837 = vmatpush1.msra.mxu0 0.0
    %1838 = vmatprep.subr.mxu0 0.0
    %1839 = vmatpush1.msra.mxu0 0.0
    %1840 = vmatprep.subr.mxu0 0.0
    %1841 = vmatpush1.msra.mxu0 0.0
    %1842 = vmatprep.subr.mxu0 0.0
    %1843 = vmatpush1.msra.mxu0 0.0
    %1844 = vmatprep.subr.mxu0 0.0
    %1845 = vmatpush1.msra.mxu0 0.0
    %1846 = vmatprep.subr.mxu0 0.0
    %1847 = vmatpush1.msra.mxu0 0.0
    %1848 = vmatprep.subr.mxu0 0.0
    %1849 = vmatpush1.msra.mxu0 0.0
    %1850 = vmatprep.subr.mxu0 0.0
    %1851 = vmatpush1.msra.mxu0 0.0
    %1852 = vmatprep.subr.mxu0 0.0
    %1853 = vmatpush1.msra.mxu0 0.0
    %1854 = vmatprep.subr.mxu0 0.0
    %1855 = vmatpush1.msra.mxu0 0.0
    %1856 = vmatprep.subr.mxu0 0.0
    %1857 = vmatpush1.msra.mxu0 0.0
    %1858 = vmatprep.subr.mxu0 0.0
    %1859 = vmatpush1.msra.mxu0 0.0
    %1860 = vmatprep.subr.mxu0 0.0
    %1861 = vmatpush1.msra.mxu0 0.0
    %1862 = vmatprep.subr.mxu0 0.0
    %1863 = vmatpush1.msra.mxu0 0.0
    %1864 = vmatprep.subr.mxu0 0.0
    %1865 = vmatpush1.msra.mxu0 0.0
    %1866 = vmatprep.subr.mxu0 0.0
    %1867 = vmatpush1.msra.mxu0 0.0
    %1868 = vmatprep.subr.mxu0 0.0
    %1869 = vmatpush1.msra.mxu0 0.0
    %1870 = vmatprep.subr.mxu0 0.0
    %1871 = vmatpush1.msra.mxu0 0.0
    %1872 = vmatprep.subr.mxu0 0.0
    %1873 = vmatpush1.msra.mxu0 0.0
    %1874 = vmatprep.subr.mxu0 0.0
    %1875 = vmatpush1.msra.mxu0 0.0
    %1876 = vmatprep.mubr.f32.mxu0 0.0
    %1877 = vmatmul.mubr.f32.gmra.mrb[0].mxu0 %v1807
    %v1878 = vpop.f32.mrb[0].mxu0
    %v1879 = vadd.f32 %v1728, %v1878
    %v1880 = vpop.f32.mrb[0].mxu0
    %1881 = vmatprep.mubr.f32.mxu0 0.0
    %1882 = vmatmul.mubr.f32.gmra.mrb[0].mxu0 %v1810
    %v1883 = vpop.f32.mrb[0].mxu0
    %v1884 = vadd.f32 %v1733, %v1883
    %v1885 = vpop.f32.mrb[0].mxu0
    %1886 = vmatprep.mubr.f32.mxu0 0.0
    %1887 = vmatmul.mubr.f32.gmra.mrb[0].mxu0 %v1614
    %v1888 = vpop.f32.mrb[0].mxu0
    %v1889 = vadd.f32 %v1738, %v1888
    %v1890 = vpop.f32.mrb[0].mxu0
    %1891 = vmatprep.mubr.f32.mxu0 0.0
    %1892 = vmatmul.mubr.f32.gmra.mrb[0].mxu0 %v1617
    %v1893 = vpop.f32.mrb[0].mxu0
    %v1894 = vadd.f32 %v1743, %v1893
    %v1895 = vpop.f32.mrb[0].mxu0
    %1896 = vmatprep.mubr.f32.mxu0 0.0
    %1897 = vmatmul.mubr.f32.gmra.mrb[0].mxu0 %v1620
    %v1898 = vpop.f32.mrb[0].mxu0
    %v1899 = vadd.f32 %v1748, %v1898
    %v1900 = vpop.f32.mrb[0].mxu0
    %1901 = vmatprep.mubr.f32.mxu0 0.0
    %1902 = vmatmul.mubr.f32.gmra.mrb[0].mxu0 %v1623
    %v1903 = vpop.f32.mrb[0].mxu0
    %v1904 = vadd.f32 %v1753, %v1903
    %v1905 = vpop.f32.mrb[0].mxu0
    %1906 = vmatprep.mubr.f32.mxu0 0.0
    %1907 = vmatmul.mubr.f32.gmra.mrb[0].mxu0 %v1626
    %v1908 = vpop.f32.mrb[0].mxu0
    %v1909 = vadd.f32 %v1758, %v1908
    %v1910 = vpop.f32.mrb[0].mxu0
    %1911 = vmatprep.mubr.f32.mxu0 0.0
    %1912 = vmatmul.mubr.f32.gmra.mrb[0].mxu0 %v1629
    %v1913 = vpop.f32.mrb[0].mxu0
    %v1914 = vadd.f32 %v1763, %v1913
    %v1915 = vpop.f32.mrb[0].mxu0
    %1916 = vmatprep.mubr.f32.mxu0 0.0
    %1917 = vmatmul.mubr.f32.gmra.mrb[0].mxu0 %v1632
    %v1918 = vpop.f32.mrb[0].mxu0
    %v1919 = vadd.f32 %v1768, %v1918
    %v1920 = vpop.f32.mrb[0].mxu0
    %1921 = vmatprep.mubr.f32.mxu0 0.0
    %1922 = vmatmul.mubr.f32.gmra.mrb[0].mxu0 %v1635
    %v1923 = vpop.f32.mrb[0].mxu0
    %v1924 = vadd.f32 %v1773, %v1923
    %v1925 = vpop.f32.mrb[0].mxu0
    %1926 = vmatprep.mubr.f32.mxu0 0.0
    %1927 = vmatmul.mubr.f32.gmra.mrb[0].mxu0 %v1638
    %v1928 = vpop.f32.mrb[0].mxu0
    %v1929 = vadd.f32 %v1778, %v1928
    %v1930 = vpop.f32.mrb[0].mxu0
    %1931 = vmatprep.mubr.f32.mxu0 0.0
    %1932 = vmatmul.mubr.f32.gmra.mrb[0].mxu0 %v1641
    %v1933 = vpop.f32.mrb[0].mxu0
    %v1934 = vadd.f32 %v1783, %v1933
    %v1935 = vpop.f32.mrb[0].mxu0
    %1936 = vmatprep.mubr.f32.mxu0 0.0
    %1937 = vmatmul.mubr.f32.gmra.mrb[0].mxu0 %v1644
    %v1938 = vpop.f32.mrb[0].mxu0
    %v1939 = vadd.f32 %v1788, %v1938
    %v1940 = vpop.f32.mrb[0].mxu0
    %1941 = vmatprep.mubr.f32.mxu0 0.0
    %1942 = vmatmul.mubr.f32.gmra.mrb[0].mxu0 %v1647
    %v1943 = vpop.f32.mrb[0].mxu0
    %v1944 = vadd.f32 %v1793, %v1943
    %v1945 = vpop.f32.mrb[0].mxu0
    %1946 = vmatprep.mubr.f32.mxu0 0.0
    %1947 = vmatmul.mubr.f32.gmra.mrb[0].mxu0 %v1650
    %v1948 = vpop.f32.mrb[0].mxu0
    %v1949 = vadd.f32 %v1798, %v1948
    %v1950 = vpop.f32.mrb[0].mxu0
    %1951 = vmatprep.mubr.f32.mxu0 0.0
    %1952 = vmatmul.mubr.f32.gmra.mrb[0].mxu0 %v1653
    %v1953 = vpop.f32.mrb[0].mxu0
    %v1954 = vadd.f32 %v1803, %v1953
    %v1955 = vpop.f32.mrb[0].mxu0
    %1956 = vdwg.mxu0
    %v1957 = vld [vmem:[#allocation2 + $0xa0] sm:$0xff]
    %v1958 = vld [vmem:[#allocation2 + $0xa8] sm:$0xff]
    %v1959 = vld [vmem:[#allocation2 + $0xb0] sm:$0xff]
    %v1960 = vld [vmem:[#allocation2 + $0xb8] sm:$0xff]
    %v1961 = vld [vmem:[#allocation2 + $0xc0] sm:$0xff]
    %v1962 = vld [vmem:[#allocation2 + $0xc8] sm:$0xff]
    %v1963 = vld [vmem:[#allocation2 + $0xd0] sm:$0xff]
    %v1964 = vld [vmem:[#allocation2 + $0xd8] sm:$0xff]
    %v1965 = vld [vmem:[#allocation2 + $0xe0] sm:$0xff]
    %v1966 = vld [vmem:[#allocation2 + $0xe8] sm:$0xff]
    %v1967 = vld [vmem:[#allocation2 + $0xf0] sm:$0xff]
    %v1968 = vld [vmem:[#allocation2 + $0xf8] sm:$0xff]
    %v1969 = vld [vmem:[#allocation2 + $0x100] sm:$0xff]
    %v1970 = vld [vmem:[#allocation2 + $0x108] sm:$0xff]
    %v1971 = vld [vmem:[#allocation2 + $0x110] sm:$0xff]
    %v1972 = vld [vmem:[#allocation2 + $0x118] sm:$0xff]
    %v1974 = vsel %vm27, %v1957, 0
    %v1977 = vsel %vm27, %v1958, 0
    %v1980 = vsel %vm27, %v1959, 0
    %v1983 = vsel %vm27, %v1960, 0
    %v1986 = vsel %vm27, %v1961, 0
    %v1989 = vsel %vm27, %v1962, 0
    %v1992 = vsel %vm27, %v1963, 0
    %v1995 = vsel %vm27, %v1964, 0
    %v1998 = vsel %vm27, %v1965, 0
    %v2001 = vsel %vm27, %v1966, 0
    %v2004 = vsel %vm27, %v1967, 0
    %v2007 = vsel %vm27, %v1968, 0
    %v2010 = vsel %vm27, %v1969, 0
    %v2013 = vsel %vm27, %v1970, 0
    %v2016 = vsel %vm27, %v1971, 0
    %v2019 = vsel %vm27, %v1972, 0
    %2021 = vmatprep.subr.mxu0 0.0
    %2022 = vmatpush1.msra.mxu0 %v940
    %2023 = vmatprep.subr.mxu0 0.0
    %2024 = vmatpush1.msra.mxu0 %v1377
    %2025 = vmatprep.subr.mxu0 0.0
    %2026 = vmatpush1.msra.mxu0 0.0
    %2027 = vmatprep.subr.mxu0 0.0
    %2028 = vmatpush1.msra.mxu0 0.0
    %2029 = vmatprep.subr.mxu0 0.0
    %2030 = vmatpush1.msra.mxu0 0.0
    %2031 = vmatprep.subr.mxu0 0.0
    %2032 = vmatpush1.msra.mxu0 0.0
    %2033 = vmatprep.subr.mxu0 0.0
    %2034 = vmatpush1.msra.mxu0 0.0
    %2035 = vmatprep.subr.mxu0 0.0
    %2036 = vmatpush1.msra.mxu0 0.0
    %2037 = vmatprep.subr.mxu0 0.0
    %2038 = vmatpush1.msra.mxu0 0.0
    %2039 = vmatprep.subr.mxu0 0.0
    %2040 = vmatpush1.msra.mxu0 0.0
    %2041 = vmatprep.subr.mxu0 0.0
    %2042 = vmatpush1.msra.mxu0 0.0
    %2043 = vmatprep.subr.mxu0 0.0
    %2044 = vmatpush1.msra.mxu0 0.0
    %2045 = vmatprep.subr.mxu0 0.0
    %2046 = vmatpush1.msra.mxu0 0.0
    %2047 = vmatprep.subr.mxu0 0.0
    %2048 = vmatpush1.msra.mxu0 0.0
    %2049 = vmatprep.subr.mxu0 0.0
    %2050 = vmatpush1.msra.mxu0 0.0
    %2051 = vmatprep.subr.mxu0 0.0
    %2052 = vmatpush1.msra.mxu0 0.0
    %2053 = vmatprep.subr.mxu0 0.0
    %2054 = vmatpush1.msra.mxu0 0.0
    %2055 = vmatprep.subr.mxu0 0.0
    %2056 = vmatpush1.msra.mxu0 0.0
    %2057 = vmatprep.subr.mxu0 0.0
    %2058 = vmatpush1.msra.mxu0 0.0
    %2059 = vmatprep.subr.mxu0 0.0
    %2060 = vmatpush1.msra.mxu0 0.0
    %2061 = vmatprep.subr.mxu0 0.0
    %2062 = vmatpush1.msra.mxu0 0.0
    %2063 = vmatprep.subr.mxu0 0.0
    %2064 = vmatpush1.msra.mxu0 0.0
    %2065 = vmatprep.subr.mxu0 0.0
    %2066 = vmatpush1.msra.mxu0 0.0
    %2067 = vmatprep.subr.mxu0 0.0
    %2068 = vmatpush1.msra.mxu0 0.0
    %2069 = vmatprep.subr.mxu0 0.0
    %2070 = vmatpush1.msra.mxu0 0.0
    %2071 = vmatprep.subr.mxu0 0.0
    %2072 = vmatpush1.msra.mxu0 0.0
    %2073 = vmatprep.subr.mxu0 0.0
    %2074 = vmatpush1.msra.mxu0 0.0
    %2075 = vmatprep.subr.mxu0 0.0
    %2076 = vmatpush1.msra.mxu0 0.0
    %2077 = vmatprep.subr.mxu0 0.0
    %2078 = vmatpush1.msra.mxu0 0.0
    %2079 = vmatprep.subr.mxu0 0.0
    %2080 = vmatpush1.msra.mxu0 0.0
    %2081 = vmatprep.subr.mxu0 0.0
    %2082 = vmatpush1.msra.mxu0 0.0
    %2083 = vmatprep.subr.mxu0 0.0
    %2084 = vmatpush1.msra.mxu0 0.0
    %2085 = vmatprep.mubr.f32.mxu0 0.0
    %2086 = vmatmul.mubr.f32.gmra.mrb[0].mxu0 %v1974
    %v2087 = vpop.f32.mrb[0].mxu0
    %v2088 = vadd.f32 0.0, %v2087
    %v2089 = vpop.f32.mrb[0].mxu0
    %2090 = vmatprep.mubr.f32.mxu0 0.0
    %2091 = vmatmul.mubr.f32.gmra.mrb[0].mxu0 %v1977
    %v2092 = vpop.f32.mrb[0].mxu0
    %v2093 = vadd.f32 0.0, %v2092
    %v2094 = vpop.f32.mrb[0].mxu0
    %2095 = vmatprep.mubr.f32.mxu0 0.0
    %2096 = vmatmul.mubr.f32.gmra.mrb[0].mxu0 %v1980
    %v2097 = vpop.f32.mrb[0].mxu0
    %v2098 = vadd.f32 0.0, %v2097
    %v2099 = vpop.f32.mrb[0].mxu0
    %2100 = vmatprep.mubr.f32.mxu0 0.0
    %2101 = vmatmul.mubr.f32.gmra.mrb[0].mxu0 %v1983
    %v2102 = vpop.f32.mrb[0].mxu0
    %v2103 = vadd.f32 0.0, %v2102
    %v2104 = vpop.f32.mrb[0].mxu0
    %2105 = vmatprep.mubr.f32.mxu0 0.0
    %2106 = vmatmul.mubr.f32.gmra.mrb[0].mxu0 %v1986
    %v2107 = vpop.f32.mrb[0].mxu0
    %v2108 = vadd.f32 0.0, %v2107
    %v2109 = vpop.f32.mrb[0].mxu0
    %2110 = vmatprep.mubr.f32.mxu0 0.0
    %2111 = vmatmul.mubr.f32.gmra.mrb[0].mxu0 %v1989
    %v2112 = vpop.f32.mrb[0].mxu0
    %v2113 = vadd.f32 0.0, %v2112
    %v2114 = vpop.f32.mrb[0].mxu0
    %2115 = vmatprep.mubr.f32.mxu0 0.0
    %2116 = vmatmul.mubr.f32.gmra.mrb[0].mxu0 %v1992
    %v2117 = vpop.f32.mrb[0].mxu0
    %v2118 = vadd.f32 0.0, %v2117
    %v2119 = vpop.f32.mrb[0].mxu0
    %2120 = vmatprep.mubr.f32.mxu0 0.0
    %2121 = vmatmul.mubr.f32.gmra.mrb[0].mxu0 %v1995
    %v2122 = vpop.f32.mrb[0].mxu0
    %v2123 = vadd.f32 0.0, %v2122
    %v2124 = vpop.f32.mrb[0].mxu0
    %2125 = vmatprep.mubr.f32.mxu0 0.0
    %2126 = vmatmul.mubr.f32.gmra.mrb[0].mxu0 %v1998
    %v2127 = vpop.f32.mrb[0].mxu0
    %v2128 = vadd.f32 0.0, %v2127
    %v2129 = vpop.f32.mrb[0].mxu0
    %2130 = vmatprep.mubr.f32.mxu0 0.0
    %2131 = vmatmul.mubr.f32.gmra.mrb[0].mxu0 %v2001
    %v2132 = vpop.f32.mrb[0].mxu0
    %v2133 = vadd.f32 0.0, %v2132
    %v2134 = vpop.f32.mrb[0].mxu0
    %2135 = vmatprep.mubr.f32.mxu0 0.0
    %2136 = vmatmul.mubr.f32.gmra.mrb[0].mxu0 %v2004
    %v2137 = vpop.f32.mrb[0].mxu0
    %v2138 = vadd.f32 0.0, %v2137
    %v2139 = vpop.f32.mrb[0].mxu0
    %2140 = vmatprep.mubr.f32.mxu0 0.0
    %2141 = vmatmul.mubr.f32.gmra.mrb[0].mxu0 %v2007
    %v2142 = vpop.f32.mrb[0].mxu0
    %v2143 = vadd.f32 0.0, %v2142
    %v2144 = vpop.f32.mrb[0].mxu0
    %2145 = vmatprep.mubr.f32.mxu0 0.0
    %2146 = vmatmul.mubr.f32.gmra.mrb[0].mxu0 %v2010
    %v2147 = vpop.f32.mrb[0].mxu0
    %v2148 = vadd.f32 0.0, %v2147
    %v2149 = vpop.f32.mrb[0].mxu0
    %2150 = vmatprep.mubr.f32.mxu0 0.0
    %2151 = vmatmul.mubr.f32.gmra.mrb[0].mxu0 %v2013
    %v2152 = vpop.f32.mrb[0].mxu0
    %v2153 = vadd.f32 0.0, %v2152
    %v2154 = vpop.f32.mrb[0].mxu0
    %2155 = vmatprep.mubr.f32.mxu0 0.0
    %2156 = vmatmul.mubr.f32.gmra.mrb[0].mxu0 %v2016
    %v2157 = vpop.f32.mrb[0].mxu0
    %v2158 = vadd.f32 0.0, %v2157
    %v2159 = vpop.f32.mrb[0].mxu0
    %2160 = vmatprep.mubr.f32.mxu0 0.0
    %2161 = vmatmul.mubr.f32.gmra.mrb[0].mxu0 %v2019
    %v2162 = vpop.f32.mrb[0].mxu0
    %v2163 = vadd.f32 0.0, %v2162
    %v2164 = vpop.f32.mrb[0].mxu0
    %2165 = vdwg.mxu0
    %v2166 = vadd.f32 %v1879, %v2088
    %v2167 = vadd.f32 %v1884, %v2093
    %v2168 = vadd.f32 %v1889, %v2098
    %v2169 = vadd.f32 %v1894, %v2103
    %v2170 = vadd.f32 %v1899, %v2108
    %v2171 = vadd.f32 %v1904, %v2113
    %v2172 = vadd.f32 %v1909, %v2118
    %v2173 = vadd.f32 %v1914, %v2123
    %v2174 = vadd.f32 %v1919, %v2128
    %v2175 = vadd.f32 %v1924, %v2133
    %v2176 = vadd.f32 %v1929, %v2138
    %v2177 = vadd.f32 %v1934, %v2143
    %v2178 = vadd.f32 %v1939, %v2148
    %v2179 = vadd.f32 %v1944, %v2153
    %v2180 = vadd.f32 %v1949, %v2158
    %v2181 = vadd.f32 %v1954, %v2163
    %v2182 = vadd.f32 %v2166, %v1544
    %v2183 = vadd.f32 %v2167, %v1544
    %v2184 = vadd.f32 %v2168, %v1544
    %v2185 = vadd.f32 %v2169, %v1544
    %v2186 = vadd.f32 %v2170, %v1544
    %v2187 = vadd.f32 %v2171, %v1544
    %v2188 = vadd.f32 %v2172, %v1544
    %v2189 = vadd.f32 %v2173, %v1544
    %v2190 = vadd.f32 %v2174, %v1544
    %v2191 = vadd.f32 %v2175, %v1544
    %v2192 = vadd.f32 %v2176, %v1544
    %v2193 = vadd.f32 %v2177, %v1544
    %v2194 = vadd.f32 %v2178, %v1544
    %v2195 = vadd.f32 %v2179, %v1544
    %v2196 = vadd.f32 %v2180, %v1544
    %v2197 = vadd.f32 %v2181, %v1544
    %v2198 = vmax.f32 %v2182, 0.0
    %v2199 = vmax.f32 %v2183, 0.0
    %v2200 = vmax.f32 %v2184, 0.0
    %v2201 = vmax.f32 %v2185, 0.0
    %v2202 = vmax.f32 %v2186, 0.0
    %v2203 = vmax.f32 %v2187, 0.0
    %v2204 = vmax.f32 %v2188, 0.0
    %v2205 = vmax.f32 %v2189, 0.0
    %v2206 = vmax.f32 %v2190, 0.0
    %v2207 = vmax.f32 %v2191, 0.0
    %v2208 = vmax.f32 %v2192, 0.0
    %v2209 = vmax.f32 %v2193, 0.0
    %v2210 = vmax.f32 %v2194, 0.0
    %v2211 = vmax.f32 %v2195, 0.0
    %v2212 = vmax.f32 %v2196, 0.0
    %v2213 = vmax.f32 %v2197, 0.0
    %2214 = vst.msk [vmem:[#allocation3 + $0x80] sm:$0xff] %vm1578, %v2198
    %2215 = vst.msk [vmem:[#allocation3 + $0x88] sm:$0xff] %vm1578, %v2199
    %2216 = vst.msk [vmem:[#allocation3 + $0x90] sm:$0xff] %vm1578, %v2200
    %2217 = vst.msk [vmem:[#allocation3 + $0x98] sm:$0xff] %vm1578, %v2201
    %2218 = vst.msk [vmem:[#allocation3 + $0xa0] sm:$0xff] %vm1578, %v2202
    %2219 = vst.msk [vmem:[#allocation3 + $0xa8] sm:$0xff] %vm1578, %v2203
    %2220 = vst.msk [vmem:[#allocation3 + $0xb0] sm:$0xff] %vm1578, %v2204
    %2221 = vst.msk [vmem:[#allocation3 + $0xb8] sm:$0xff] %vm1578, %v2205
    %2222 = vst.msk [vmem:[#allocation3 + $0xc0] sm:$0xff] %vm1578, %v2206
    %2223 = vst.msk [vmem:[#allocation3 + $0xc8] sm:$0xff] %vm1578, %v2207
    %2224 = vst.msk [vmem:[#allocation3 + $0xd0] sm:$0xff] %vm1578, %v2208
    %2225 = vst.msk [vmem:[#allocation3 + $0xd8] sm:$0xff] %vm1578, %v2209
    %2226 = vst.msk [vmem:[#allocation3 + $0xe0] sm:$0xff] %vm1578, %v2210
    %2227 = vst.msk [vmem:[#allocation3 + $0xe8] sm:$0xff] %vm1578, %v2211
    %2228 = vst.msk [vmem:[#allocation3 + $0xf0] sm:$0xff] %vm1578, %v2212
    %2229 = vst.msk [vmem:[#allocation3 + $0xf8] sm:$0xff] %vm1578, %v2213
    %v2230 = vld [vmem:[#allocation2 + $0x100] sm:$0xff]
    %v2231 = vld [vmem:[#allocation2 + $0x108] sm:$0xff]
    %v2232 = vld [vmem:[#allocation2 + $0x110] sm:$0xff]
    %v2233 = vld [vmem:[#allocation2 + $0x118] sm:$0xff]
    %v2234 = vld [vmem:[#allocation2 + $0x120] sm:$0xff]
    %v2235 = vld [vmem:[#allocation2 + $0x128] sm:$0xff]
    %v2236 = vld [vmem:[#allocation2 + $0x130] sm:$0xff]
    %v2237 = vld [vmem:[#allocation2 + $0x138] sm:$0xff]
    %v2238 = vld [vmem:[#allocation2 + $0x140] sm:$0xff]
    %v2239 = vld [vmem:[#allocation2 + $0x148] sm:$0xff]
    %v2240 = vld [vmem:[#allocation2 + $0x150] sm:$0xff]
    %v2241 = vld [vmem:[#allocation2 + $0x158] sm:$0xff]
    %v2242 = vld [vmem:[#allocation2 + $0x160] sm:$0xff]
    %v2243 = vld [vmem:[#allocation2 + $0x168] sm:$0xff]
    %v2244 = vld [vmem:[#allocation2 + $0x170] sm:$0xff]
    %v2245 = vld [vmem:[#allocation2 + $0x178] sm:$0xff]
    %v2246 = vld [vmem:[#allocation2 + $0x180] sm:$0xff]
    %v2247 = vld [vmem:[#allocation2 + $0x188] sm:$0xff]
    %v2249 = vsel %vm27, %v2232, 0
    %v2252 = vsel %vm27, %v2233, 0
    %v2255 = vsel %vm27, %v2234, 0
    %v2258 = vsel %vm27, %v2235, 0
    %v2261 = vsel %vm27, %v2236, 0
    %v2264 = vsel %vm27, %v2237, 0
    %v2267 = vsel %vm27, %v2238, 0
    %v2270 = vsel %vm27, %v2239, 0
    %v2273 = vsel %vm27, %v2240, 0
    %v2276 = vsel %vm27, %v2241, 0
    %v2279 = vsel %vm27, %v2242, 0
    %v2282 = vsel %vm27, %v2243, 0
    %v2285 = vsel %vm27, %v2244, 0
    %v2288 = vsel %vm27, %v2245, 0
    %v2291 = vsel %vm27, %v2246, 0
    %v2294 = vsel %vm27, %v2247, 0
    %2296 = vmatprep.subr.mxu0 0.0
    %2297 = vmatpush1.msra.mxu0 %v937
    %2298 = vmatprep.subr.mxu0 0.0
    %2299 = vmatpush1.msra.mxu0 %v1011
    %2300 = vmatprep.subr.mxu0 0.0
    %2301 = vmatpush1.msra.mxu0 0.0
    %2302 = vmatprep.subr.mxu0 0.0
    %2303 = vmatpush1.msra.mxu0 0.0
    %2304 = vmatprep.subr.mxu0 0.0
    %2305 = vmatpush1.msra.mxu0 0.0
    %2306 = vmatprep.subr.mxu0 0.0
    %2307 = vmatpush1.msra.mxu0 0.0
    %2308 = vmatprep.subr.mxu0 0.0
    %2309 = vmatpush1.msra.mxu0 0.0
    %2310 = vmatprep.subr.mxu0 0.0
    %2311 = vmatpush1.msra.mxu0 0.0
    %2312 = vmatprep.subr.mxu0 0.0
    %2313 = vmatpush1.msra.mxu0 0.0
    %2314 = vmatprep.subr.mxu0 0.0
    %2315 = vmatpush1.msra.mxu0 0.0
    %2316 = vmatprep.subr.mxu0 0.0
    %2317 = vmatpush1.msra.mxu0 0.0
    %2318 = vmatprep.subr.mxu0 0.0
    %2319 = vmatpush1.msra.mxu0 0.0
    %2320 = vmatprep.subr.mxu0 0.0
    %2321 = vmatpush1.msra.mxu0 0.0
    %2322 = vmatprep.subr.mxu0 0.0
    %2323 = vmatpush1.msra.mxu0 0.0
    %2324 = vmatprep.subr.mxu0 0.0
    %2325 = vmatpush1.msra.mxu0 0.0
    %2326 = vmatprep.subr.mxu0 0.0
    %2327 = vmatpush1.msra.mxu0 0.0
    %2328 = vmatprep.subr.mxu0 0.0
    %2329 = vmatpush1.msra.mxu0 0.0
    %2330 = vmatprep.subr.mxu0 0.0
    %2331 = vmatpush1.msra.mxu0 0.0
    %2332 = vmatprep.subr.mxu0 0.0
    %2333 = vmatpush1.msra.mxu0 0.0
    %2334 = vmatprep.subr.mxu0 0.0
    %2335 = vmatpush1.msra.mxu0 0.0
    %2336 = vmatprep.subr.mxu0 0.0
    %2337 = vmatpush1.msra.mxu0 0.0
    %2338 = vmatprep.subr.mxu0 0.0
    %2339 = vmatpush1.msra.mxu0 0.0
    %2340 = vmatprep.subr.mxu0 0.0
    %2341 = vmatpush1.msra.mxu0 0.0
    %2342 = vmatprep.subr.mxu0 0.0
    %2343 = vmatpush1.msra.mxu0 0.0
    %2344 = vmatprep.subr.mxu0 0.0
    %2345 = vmatpush1.msra.mxu0 0.0
    %2346 = vmatprep.subr.mxu0 0.0
    %2347 = vmatpush1.msra.mxu0 0.0
    %2348 = vmatprep.subr.mxu0 0.0
    %2349 = vmatpush1.msra.mxu0 0.0
    %2350 = vmatprep.subr.mxu0 0.0
    %2351 = vmatpush1.msra.mxu0 0.0
    %2352 = vmatprep.subr.mxu0 0.0
    %2353 = vmatpush1.msra.mxu0 0.0
    %2354 = vmatprep.subr.mxu0 0.0
    %2355 = vmatpush1.msra.mxu0 0.0
    %2356 = vmatprep.subr.mxu0 0.0
    %2357 = vmatpush1.msra.mxu0 0.0
    %2358 = vmatprep.subr.mxu0 0.0
    %2359 = vmatpush1.msra.mxu0 0.0
    %2360 = vmatprep.mubr.f32.mxu0 0.0
    %2361 = vmatmul.mubr.f32.gmra.mrb[0].mxu0 %v2249
    %v2362 = vpop.f32.mrb[0].mxu0
    %v2363 = vadd.f32 0.0, %v2362
    %v2364 = vpop.f32.mrb[0].mxu0
    %2365 = vmatprep.mubr.f32.mxu0 0.0
    %2366 = vmatmul.mubr.f32.gmra.mrb[0].mxu0 %v2252
    %v2367 = vpop.f32.mrb[0].mxu0
    %v2368 = vadd.f32 0.0, %v2367
    %v2369 = vpop.f32.mrb[0].mxu0
    %2370 = vmatprep.mubr.f32.mxu0 0.0
    %2371 = vmatmul.mubr.f32.gmra.mrb[0].mxu0 %v2255
    %v2372 = vpop.f32.mrb[0].mxu0
    %v2373 = vadd.f32 0.0, %v2372
    %v2374 = vpop.f32.mrb[0].mxu0
    %2375 = vmatprep.mubr.f32.mxu0 0.0
    %2376 = vmatmul.mubr.f32.gmra.mrb[0].mxu0 %v2258
    %v2377 = vpop.f32.mrb[0].mxu0
    %v2378 = vadd.f32 0.0, %v2377
    %v2379 = vpop.f32.mrb[0].mxu0
    %2380 = vmatprep.mubr.f32.mxu0 0.0
    %2381 = vmatmul.mubr.f32.gmra.mrb[0].mxu0 %v2261
    %v2382 = vpop.f32.mrb[0].mxu0
    %v2383 = vadd.f32 0.0, %v2382
    %v2384 = vpop.f32.mrb[0].mxu0
    %2385 = vmatprep.mubr.f32.mxu0 0.0
    %2386 = vmatmul.mubr.f32.gmra.mrb[0].mxu0 %v2264
    %v2387 = vpop.f32.mrb[0].mxu0
    %v2388 = vadd.f32 0.0, %v2387
    %v2389 = vpop.f32.mrb[0].mxu0
    %2390 = vmatprep.mubr.f32.mxu0 0.0
    %2391 = vmatmul.mubr.f32.gmra.mrb[0].mxu0 %v2267
    %v2392 = vpop.f32.mrb[0].mxu0
    %v2393 = vadd.f32 0.0, %v2392
    %v2394 = vpop.f32.mrb[0].mxu0
    %2395 = vmatprep.mubr.f32.mxu0 0.0
    %2396 = vmatmul.mubr.f32.gmra.mrb[0].mxu0 %v2270
    %v2397 = vpop.f32.mrb[0].mxu0
    %v2398 = vadd.f32 0.0, %v2397
    %v2399 = vpop.f32.mrb[0].mxu0
    %2400 = vmatprep.mubr.f32.mxu0 0.0
    %2401 = vmatmul.mubr.f32.gmra.mrb[0].mxu0 %v2273
    %v2402 = vpop.f32.mrb[0].mxu0
    %v2403 = vadd.f32 0.0, %v2402
    %v2404 = vpop.f32.mrb[0].mxu0
    %2405 = vmatprep.mubr.f32.mxu0 0.0
    %2406 = vmatmul.mubr.f32.gmra.mrb[0].mxu0 %v2276
    %v2407 = vpop.f32.mrb[0].mxu0
    %v2408 = vadd.f32 0.0, %v2407
    %v2409 = vpop.f32.mrb[0].mxu0
    %2410 = vmatprep.mubr.f32.mxu0 0.0
    %2411 = vmatmul.mubr.f32.gmra.mrb[0].mxu0 %v2279
    %v2412 = vpop.f32.mrb[0].mxu0
    %v2413 = vadd.f32 0.0, %v2412
    %v2414 = vpop.f32.mrb[0].mxu0
    %2415 = vmatprep.mubr.f32.mxu0 0.0
    %2416 = vmatmul.mubr.f32.gmra.mrb[0].mxu0 %v2282
    %v2417 = vpop.f32.mrb[0].mxu0
    %v2418 = vadd.f32 0.0, %v2417
    %v2419 = vpop.f32.mrb[0].mxu0
    %2420 = vmatprep.mubr.f32.mxu0 0.0
    %2421 = vmatmul.mubr.f32.gmra.mrb[0].mxu0 %v2285
    %v2422 = vpop.f32.mrb[0].mxu0
    %v2423 = vadd.f32 0.0, %v2422
    %v2424 = vpop.f32.mrb[0].mxu0
    %2425 = vmatprep.mubr.f32.mxu0 0.0
    %2426 = vmatmul.mubr.f32.gmra.mrb[0].mxu0 %v2288
    %v2427 = vpop.f32.mrb[0].mxu0
    %v2428 = vadd.f32 0.0, %v2427
    %v2429 = vpop.f32.mrb[0].mxu0
    %2430 = vmatprep.mubr.f32.mxu0 0.0
    %2431 = vmatmul.mubr.f32.gmra.mrb[0].mxu0 %v2291
    %v2432 = vpop.f32.mrb[0].mxu0
    %v2433 = vadd.f32 0.0, %v2432
    %v2434 = vpop.f32.mrb[0].mxu0
    %2435 = vmatprep.mubr.f32.mxu0 0.0
    %2436 = vmatmul.mubr.f32.gmra.mrb[0].mxu0 %v2294
    %v2437 = vpop.f32.mrb[0].mxu0
    %v2438 = vadd.f32 0.0, %v2437
    %v2439 = vpop.f32.mrb[0].mxu0
    %2440 = vdwg.mxu0
    %v2442 = vsel %vm27, %v2230, 0
    %v2445 = vsel %vm27, %v2231, 0
    %2447 = vmatprep.subr.mxu0 0.0
    %2448 = vmatpush1.msra.mxu0 %v934
    %2449 = vmatprep.subr.mxu0 0.0
    %2450 = vmatpush1.msra.mxu0 %v1165
    %2451 = vmatprep.subr.mxu0 0.0
    %2452 = vmatpush1.msra.mxu0 0.0
    %2453 = vmatprep.subr.mxu0 0.0
    %2454 = vmatpush1.msra.mxu0 0.0
    %2455 = vmatprep.subr.mxu0 0.0
    %2456 = vmatpush1.msra.mxu0 0.0
    %2457 = vmatprep.subr.mxu0 0.0
    %2458 = vmatpush1.msra.mxu0 0.0
    %2459 = vmatprep.subr.mxu0 0.0
    %2460 = vmatpush1.msra.mxu0 0.0
    %2461 = vmatprep.subr.mxu0 0.0
    %2462 = vmatpush1.msra.mxu0 0.0
    %2463 = vmatprep.subr.mxu0 0.0
    %2464 = vmatpush1.msra.mxu0 0.0
    %2465 = vmatprep.subr.mxu0 0.0
    %2466 = vmatpush1.msra.mxu0 0.0
    %2467 = vmatprep.subr.mxu0 0.0
    %2468 = vmatpush1.msra.mxu0 0.0
    %2469 = vmatprep.subr.mxu0 0.0
    %2470 = vmatpush1.msra.mxu0 0.0
    %2471 = vmatprep.subr.mxu0 0.0
    %2472 = vmatpush1.msra.mxu0 0.0
    %2473 = vmatprep.subr.mxu0 0.0
    %2474 = vmatpush1.msra.mxu0 0.0
    %2475 = vmatprep.subr.mxu0 0.0
    %2476 = vmatpush1.msra.mxu0 0.0
    %2477 = vmatprep.subr.mxu0 0.0
    %2478 = vmatpush1.msra.mxu0 0.0
    %2479 = vmatprep.subr.mxu0 0.0
    %2480 = vmatpush1.msra.mxu0 0.0
    %2481 = vmatprep.subr.mxu0 0.0
    %2482 = vmatpush1.msra.mxu0 0.0
    %2483 = vmatprep.subr.mxu0 0.0
    %2484 = vmatpush1.msra.mxu0 0.0
    %2485 = vmatprep.subr.mxu0 0.0
    %2486 = vmatpush1.msra.mxu0 0.0
    %2487 = vmatprep.subr.mxu0 0.0
    %2488 = vmatpush1.msra.mxu0 0.0
    %2489 = vmatprep.subr.mxu0 0.0
    %2490 = vmatpush1.msra.mxu0 0.0
    %2491 = vmatprep.subr.mxu0 0.0
    %2492 = vmatpush1.msra.mxu0 0.0
    %2493 = vmatprep.subr.mxu0 0.0
    %2494 = vmatpush1.msra.mxu0 0.0
    %2495 = vmatprep.subr.mxu0 0.0
    %2496 = vmatpush1.msra.mxu0 0.0
    %2497 = vmatprep.subr.mxu0 0.0
    %2498 = vmatpush1.msra.mxu0 0.0
    %2499 = vmatprep.subr.mxu0 0.0
    %2500 = vmatpush1.msra.mxu0 0.0
    %2501 = vmatprep.subr.mxu0 0.0
    %2502 = vmatpush1.msra.mxu0 0.0
    %2503 = vmatprep.subr.mxu0 0.0
    %2504 = vmatpush1.msra.mxu0 0.0
    %2505 = vmatprep.subr.mxu0 0.0
    %2506 = vmatpush1.msra.mxu0 0.0
    %2507 = vmatprep.subr.mxu0 0.0
    %2508 = vmatpush1.msra.mxu0 0.0
    %2509 = vmatprep.subr.mxu0 0.0
    %2510 = vmatpush1.msra.mxu0 0.0
    %2511 = vmatprep.mubr.f32.mxu0 0.0
    %2512 = vmatmul.mubr.f32.gmra.mrb[0].mxu0 %v2442
    %v2513 = vpop.f32.mrb[0].mxu0
    %v2514 = vadd.f32 %v2363, %v2513
    %v2515 = vpop.f32.mrb[0].mxu0
    %2516 = vmatprep.mubr.f32.mxu0 0.0
    %2517 = vmatmul.mubr.f32.gmra.mrb[0].mxu0 %v2445
    %v2518 = vpop.f32.mrb[0].mxu0
    %v2519 = vadd.f32 %v2368, %v2518
    %v2520 = vpop.f32.mrb[0].mxu0
    %2521 = vmatprep.mubr.f32.mxu0 0.0
    %2522 = vmatmul.mubr.f32.gmra.mrb[0].mxu0 %v2249
    %v2523 = vpop.f32.mrb[0].mxu0
    %v2524 = vadd.f32 %v2373, %v2523
    %v2525 = vpop.f32.mrb[0].mxu0
    %2526 = vmatprep.mubr.f32.mxu0 0.0
    %2527 = vmatmul.mubr.f32.gmra.mrb[0].mxu0 %v2252
    %v2528 = vpop.f32.mrb[0].mxu0
    %v2529 = vadd.f32 %v2378, %v2528
    %v2530 = vpop.f32.mrb[0].mxu0
    %2531 = vmatprep.mubr.f32.mxu0 0.0
    %2532 = vmatmul.mubr.f32.gmra.mrb[0].mxu0 %v2255
    %v2533 = vpop.f32.mrb[0].mxu0
    %v2534 = vadd.f32 %v2383, %v2533
    %v2535 = vpop.f32.mrb[0].mxu0
    %2536 = vmatprep.mubr.f32.mxu0 0.0
    %2537 = vmatmul.mubr.f32.gmra.mrb[0].mxu0 %v2258
    %v2538 = vpop.f32.mrb[0].mxu0
    %v2539 = vadd.f32 %v2388, %v2538
    %v2540 = vpop.f32.mrb[0].mxu0
    %2541 = vmatprep.mubr.f32.mxu0 0.0
    %2542 = vmatmul.mubr.f32.gmra.mrb[0].mxu0 %v2261
    %v2543 = vpop.f32.mrb[0].mxu0
    %v2544 = vadd.f32 %v2393, %v2543
    %v2545 = vpop.f32.mrb[0].mxu0
    %2546 = vmatprep.mubr.f32.mxu0 0.0
    %2547 = vmatmul.mubr.f32.gmra.mrb[0].mxu0 %v2264
    %v2548 = vpop.f32.mrb[0].mxu0
    %v2549 = vadd.f32 %v2398, %v2548
    %v2550 = vpop.f32.mrb[0].mxu0
    %2551 = vmatprep.mubr.f32.mxu0 0.0
    %2552 = vmatmul.mubr.f32.gmra.mrb[0].mxu0 %v2267
    %v2553 = vpop.f32.mrb[0].mxu0
    %v2554 = vadd.f32 %v2403, %v2553
    %v2555 = vpop.f32.mrb[0].mxu0
    %2556 = vmatprep.mubr.f32.mxu0 0.0
    %2557 = vmatmul.mubr.f32.gmra.mrb[0].mxu0 %v2270
    %v2558 = vpop.f32.mrb[0].mxu0
    %v2559 = vadd.f32 %v2408, %v2558
    %v2560 = vpop.f32.mrb[0].mxu0
    %2561 = vmatprep.mubr.f32.mxu0 0.0
    %2562 = vmatmul.mubr.f32.gmra.mrb[0].mxu0 %v2273
    %v2563 = vpop.f32.mrb[0].mxu0
    %v2564 = vadd.f32 %v2413, %v2563
    %v2565 = vpop.f32.mrb[0].mxu0
    %2566 = vmatprep.mubr.f32.mxu0 0.0
    %2567 = vmatmul.mubr.f32.gmra.mrb[0].mxu0 %v2276
    %v2568 = vpop.f32.mrb[0].mxu0
    %v2569 = vadd.f32 %v2418, %v2568
    %v2570 = vpop.f32.mrb[0].mxu0
    %2571 = vmatprep.mubr.f32.mxu0 0.0
    %2572 = vmatmul.mubr.f32.gmra.mrb[0].mxu0 %v2279
    %v2573 = vpop.f32.mrb[0].mxu0
    %v2574 = vadd.f32 %v2423, %v2573
    %v2575 = vpop.f32.mrb[0].mxu0
    %2576 = vmatprep.mubr.f32.mxu0 0.0
    %2577 = vmatmul.mubr.f32.gmra.mrb[0].mxu0 %v2282
    %v2578 = vpop.f32.mrb[0].mxu0
    %v2579 = vadd.f32 %v2428, %v2578
    %v2580 = vpop.f32.mrb[0].mxu0
    %2581 = vmatprep.mubr.f32.mxu0 0.0
    %2582 = vmatmul.mubr.f32.gmra.mrb[0].mxu0 %v2285
    %v2583 = vpop.f32.mrb[0].mxu0
    %v2584 = vadd.f32 %v2433, %v2583
    %v2585 = vpop.f32.mrb[0].mxu0
    %2586 = vmatprep.mubr.f32.mxu0 0.0
    %2587 = vmatmul.mubr.f32.gmra.mrb[0].mxu0 %v2288
    %v2588 = vpop.f32.mrb[0].mxu0
    %v2589 = vadd.f32 %v2438, %v2588
    %v2590 = vpop.f32.mrb[0].mxu0
    %2591 = vdwg.mxu0
    %v2592 = vld [vmem:[#allocation2 + $0x120] sm:$0xff]
    %v2593 = vld [vmem:[#allocation2 + $0x128] sm:$0xff]
    %v2594 = vld [vmem:[#allocation2 + $0x130] sm:$0xff]
    %v2595 = vld [vmem:[#allocation2 + $0x138] sm:$0xff]
    %v2596 = vld [vmem:[#allocation2 + $0x140] sm:$0xff]
    %v2597 = vld [vmem:[#allocation2 + $0x148] sm:$0xff]
    %v2598 = vld [vmem:[#allocation2 + $0x150] sm:$0xff]
    %v2599 = vld [vmem:[#allocation2 + $0x158] sm:$0xff]
    %v2600 = vld [vmem:[#allocation2 + $0x160] sm:$0xff]
    %v2601 = vld [vmem:[#allocation2 + $0x168] sm:$0xff]
    %v2602 = vld [vmem:[#allocation2 + $0x170] sm:$0xff]
    %v2603 = vld [vmem:[#allocation2 + $0x178] sm:$0xff]
    %v2604 = vld [vmem:[#allocation2 + $0x180] sm:$0xff]
    %v2605 = vld [vmem:[#allocation2 + $0x188] sm:$0xff]
    %v2606 = vld [vmem:[#allocation2 + $0x190] sm:$0xff]
    %v2607 = vld [vmem:[#allocation2 + $0x198] sm:$0xff]
    %v2609 = vsel %vm27, %v2592, 0
    %v2612 = vsel %vm27, %v2593, 0
    %v2615 = vsel %vm27, %v2594, 0
    %v2618 = vsel %vm27, %v2595, 0
    %v2621 = vsel %vm27, %v2596, 0
    %v2624 = vsel %vm27, %v2597, 0
    %v2627 = vsel %vm27, %v2598, 0
    %v2630 = vsel %vm27, %v2599, 0
    %v2633 = vsel %vm27, %v2600, 0
    %v2636 = vsel %vm27, %v2601, 0
    %v2639 = vsel %vm27, %v2602, 0
    %v2642 = vsel %vm27, %v2603, 0
    %v2645 = vsel %vm27, %v2604, 0
    %v2648 = vsel %vm27, %v2605, 0
    %v2651 = vsel %vm27, %v2606, 0
    %v2654 = vsel %vm27, %v2607, 0
    %2656 = vmatprep.subr.mxu0 0.0
    %2657 = vmatpush1.msra.mxu0 %v940
    %2658 = vmatprep.subr.mxu0 0.0
    %2659 = vmatpush1.msra.mxu0 %v1377
    %2660 = vmatprep.subr.mxu0 0.0
    %2661 = vmatpush1.msra.mxu0 0.0
    %2662 = vmatprep.subr.mxu0 0.0
    %2663 = vmatpush1.msra.mxu0 0.0
    %2664 = vmatprep.subr.mxu0 0.0
    %2665 = vmatpush1.msra.mxu0 0.0
    %2666 = vmatprep.subr.mxu0 0.0
    %2667 = vmatpush1.msra.mxu0 0.0
    %2668 = vmatprep.subr.mxu0 0.0
    %2669 = vmatpush1.msra.mxu0 0.0
    %2670 = vmatprep.subr.mxu0 0.0
    %2671 = vmatpush1.msra.mxu0 0.0
    %2672 = vmatprep.subr.mxu0 0.0
    %2673 = vmatpush1.msra.mxu0 0.0
    %2674 = vmatprep.subr.mxu0 0.0
    %2675 = vmatpush1.msra.mxu0 0.0
    %2676 = vmatprep.subr.mxu0 0.0
    %2677 = vmatpush1.msra.mxu0 0.0
    %2678 = vmatprep.subr.mxu0 0.0
    %2679 = vmatpush1.msra.mxu0 0.0
    %2680 = vmatprep.subr.mxu0 0.0
    %2681 = vmatpush1.msra.mxu0 0.0
    %2682 = vmatprep.subr.mxu0 0.0
    %2683 = vmatpush1.msra.mxu0 0.0
    %2684 = vmatprep.subr.mxu0 0.0
    %2685 = vmatpush1.msra.mxu0 0.0
    %2686 = vmatprep.subr.mxu0 0.0
    %2687 = vmatpush1.msra.mxu0 0.0
    %2688 = vmatprep.subr.mxu0 0.0
    %2689 = vmatpush1.msra.mxu0 0.0
    %2690 = vmatprep.subr.mxu0 0.0
    %2691 = vmatpush1.msra.mxu0 0.0
    %2692 = vmatprep.subr.mxu0 0.0
    %2693 = vmatpush1.msra.mxu0 0.0
    %2694 = vmatprep.subr.mxu0 0.0
    %2695 = vmatpush1.msra.mxu0 0.0
    %2696 = vmatprep.subr.mxu0 0.0
    %2697 = vmatpush1.msra.mxu0 0.0
    %2698 = vmatprep.subr.mxu0 0.0
    %2699 = vmatpush1.msra.mxu0 0.0
    %2700 = vmatprep.subr.mxu0 0.0
    %2701 = vmatpush1.msra.mxu0 0.0
    %2702 = vmatprep.subr.mxu0 0.0
    %2703 = vmatpush1.msra.mxu0 0.0
    %2704 = vmatprep.subr.mxu0 0.0
    %2705 = vmatpush1.msra.mxu0 0.0
    %2706 = vmatprep.subr.mxu0 0.0
    %2707 = vmatpush1.msra.mxu0 0.0
    %2708 = vmatprep.subr.mxu0 0.0
    %2709 = vmatpush1.msra.mxu0 0.0
    %2710 = vmatprep.subr.mxu0 0.0
    %2711 = vmatpush1.msra.mxu0 0.0
    %2712 = vmatprep.subr.mxu0 0.0
    %2713 = vmatpush1.msra.mxu0 0.0
    %2714 = vmatprep.subr.mxu0 0.0
    %2715 = vmatpush1.msra.mxu0 0.0
    %2716 = vmatprep.subr.mxu0 0.0
    %2717 = vmatpush1.msra.mxu0 0.0
    %2718 = vmatprep.subr.mxu0 0.0
    %2719 = vmatpush1.msra.mxu0 0.0
    %2720 = vmatprep.mubr.f32.mxu0 0.0
    %2721 = vmatmul.mubr.f32.gmra.mrb[0].mxu0 %v2609
    %v2722 = vpop.f32.mrb[0].mxu0
    %v2723 = vadd.f32 0.0, %v2722
    %v2724 = vpop.f32.mrb[0].mxu0
    %2725 = vmatprep.mubr.f32.mxu0 0.0
    %2726 = vmatmul.mubr.f32.gmra.mrb[0].mxu0 %v2612
    %v2727 = vpop.f32.mrb[0].mxu0
    %v2728 = vadd.f32 0.0, %v2727
    %v2729 = vpop.f32.mrb[0].mxu0
    %2730 = vmatprep.mubr.f32.mxu0 0.0
    %2731 = vmatmul.mubr.f32.gmra.mrb[0].mxu0 %v2615
    %v2732 = vpop.f32.mrb[0].mxu0
    %v2733 = vadd.f32 0.0, %v2732
    %v2734 = vpop.f32.mrb[0].mxu0
    %2735 = vmatprep.mubr.f32.mxu0 0.0
    %2736 = vmatmul.mubr.f32.gmra.mrb[0].mxu0 %v2618
    %v2737 = vpop.f32.mrb[0].mxu0
    %v2738 = vadd.f32 0.0, %v2737
    %v2739 = vpop.f32.mrb[0].mxu0
    %2740 = vmatprep.mubr.f32.mxu0 0.0
    %2741 = vmatmul.mubr.f32.gmra.mrb[0].mxu0 %v2621
    %v2742 = vpop.f32.mrb[0].mxu0
    %v2743 = vadd.f32 0.0, %v2742
    %v2744 = vpop.f32.mrb[0].mxu0
    %2745 = vmatprep.mubr.f32.mxu0 0.0
    %2746 = vmatmul.mubr.f32.gmra.mrb[0].mxu0 %v2624
    %v2747 = vpop.f32.mrb[0].mxu0
    %v2748 = vadd.f32 0.0, %v2747
    %v2749 = vpop.f32.mrb[0].mxu0
    %2750 = vmatprep.mubr.f32.mxu0 0.0
    %2751 = vmatmul.mubr.f32.gmra.mrb[0].mxu0 %v2627
    %v2752 = vpop.f32.mrb[0].mxu0
    %v2753 = vadd.f32 0.0, %v2752
    %v2754 = vpop.f32.mrb[0].mxu0
    %2755 = vmatprep.mubr.f32.mxu0 0.0
    %2756 = vmatmul.mubr.f32.gmra.mrb[0].mxu0 %v2630
    %v2757 = vpop.f32.mrb[0].mxu0
    %v2758 = vadd.f32 0.0, %v2757
    %v2759 = vpop.f32.mrb[0].mxu0
    %2760 = vmatprep.mubr.f32.mxu0 0.0
    %2761 = vmatmul.mubr.f32.gmra.mrb[0].mxu0 %v2633
    %v2762 = vpop.f32.mrb[0].mxu0
    %v2763 = vadd.f32 0.0, %v2762
    %v2764 = vpop.f32.mrb[0].mxu0
    %2765 = vmatprep.mubr.f32.mxu0 0.0
    %2766 = vmatmul.mubr.f32.gmra.mrb[0].mxu0 %v2636
    %v2767 = vpop.f32.mrb[0].mxu0
    %v2768 = vadd.f32 0.0, %v2767
    %v2769 = vpop.f32.mrb[0].mxu0
    %2770 = vmatprep.mubr.f32.mxu0 0.0
    %2771 = vmatmul.mubr.f32.gmra.mrb[0].mxu0 %v2639
    %v2772 = vpop.f32.mrb[0].mxu0
    %v2773 = vadd.f32 0.0, %v2772
    %v2774 = vpop.f32.mrb[0].mxu0
    %2775 = vmatprep.mubr.f32.mxu0 0.0
    %2776 = vmatmul.mubr.f32.gmra.mrb[0].mxu0 %v2642
    %v2777 = vpop.f32.mrb[0].mxu0
    %v2778 = vadd.f32 0.0, %v2777
    %v2779 = vpop.f32.mrb[0].mxu0
    %2780 = vmatprep.mubr.f32.mxu0 0.0
    %2781 = vmatmul.mubr.f32.gmra.mrb[0].mxu0 %v2645
    %v2782 = vpop.f32.mrb[0].mxu0
    %v2783 = vadd.f32 0.0, %v2782
    %v2784 = vpop.f32.mrb[0].mxu0
    %2785 = vmatprep.mubr.f32.mxu0 0.0
    %2786 = vmatmul.mubr.f32.gmra.mrb[0].mxu0 %v2648
    %v2787 = vpop.f32.mrb[0].mxu0
    %v2788 = vadd.f32 0.0, %v2787
    %v2789 = vpop.f32.mrb[0].mxu0
    %2790 = vmatprep.mubr.f32.mxu0 0.0
    %2791 = vmatmul.mubr.f32.gmra.mrb[0].mxu0 %v2651
    %v2792 = vpop.f32.mrb[0].mxu0
    %v2793 = vadd.f32 0.0, %v2792
    %v2794 = vpop.f32.mrb[0].mxu0
    %2795 = vmatprep.mubr.f32.mxu0 0.0
    %2796 = vmatmul.mubr.f32.gmra.mrb[0].mxu0 %v2654
    %v2797 = vpop.f32.mrb[0].mxu0
    %v2798 = vadd.f32 0.0, %v2797
    %v2799 = vpop.f32.mrb[0].mxu0
    %2800 = vdwg.mxu0
    %v2801 = vadd.f32 %v2514, %v2723
    %v2802 = vadd.f32 %v2519, %v2728
    %v2803 = vadd.f32 %v2524, %v2733
    %v2804 = vadd.f32 %v2529, %v2738
    %v2805 = vadd.f32 %v2534, %v2743
    %v2806 = vadd.f32 %v2539, %v2748
    %v2807 = vadd.f32 %v2544, %v2753
    %v2808 = vadd.f32 %v2549, %v2758
    %v2809 = vadd.f32 %v2554, %v2763
    %v2810 = vadd.f32 %v2559, %v2768
    %v2811 = vadd.f32 %v2564, %v2773
    %v2812 = vadd.f32 %v2569, %v2778
    %v2813 = vadd.f32 %v2574, %v2783
    %v2814 = vadd.f32 %v2579, %v2788
    %v2815 = vadd.f32 %v2584, %v2793
    %v2816 = vadd.f32 %v2589, %v2798
    %v2817 = vadd.f32 %v2801, %v1544
    %v2818 = vadd.f32 %v2802, %v1544
    %v2819 = vadd.f32 %v2803, %v1544
    %v2820 = vadd.f32 %v2804, %v1544
    %v2821 = vadd.f32 %v2805, %v1544
    %v2822 = vadd.f32 %v2806, %v1544
    %v2823 = vadd.f32 %v2807, %v1544
    %v2824 = vadd.f32 %v2808, %v1544
    %v2825 = vadd.f32 %v2809, %v1544
    %v2826 = vadd.f32 %v2810, %v1544
    %v2827 = vadd.f32 %v2811, %v1544
    %v2828 = vadd.f32 %v2812, %v1544
    %v2829 = vadd.f32 %v2813, %v1544
    %v2830 = vadd.f32 %v2814, %v1544
    %v2831 = vadd.f32 %v2815, %v1544
    %v2832 = vadd.f32 %v2816, %v1544
    %v2833 = vmax.f32 %v2817, 0.0
    %v2834 = vmax.f32 %v2818, 0.0
    %v2835 = vmax.f32 %v2819, 0.0
    %v2836 = vmax.f32 %v2820, 0.0
    %v2837 = vmax.f32 %v2821, 0.0
    %v2838 = vmax.f32 %v2822, 0.0
    %v2839 = vmax.f32 %v2823, 0.0
    %v2840 = vmax.f32 %v2824, 0.0
    %v2841 = vmax.f32 %v2825, 0.0
    %v2842 = vmax.f32 %v2826, 0.0
    %v2843 = vmax.f32 %v2827, 0.0
    %v2844 = vmax.f32 %v2828, 0.0
    %v2845 = vmax.f32 %v2829, 0.0
    %v2846 = vmax.f32 %v2830, 0.0
    %v2847 = vmax.f32 %v2831, 0.0
    %v2848 = vmax.f32 %v2832, 0.0
    %2849 = vst.msk [vmem:[#allocation3 + $0x100] sm:$0xff] %vm1578, %v2833
    %2850 = vst.msk [vmem:[#allocation3 + $0x108] sm:$0xff] %vm1578, %v2834
    %2851 = vst.msk [vmem:[#allocation3 + $0x110] sm:$0xff] %vm1578, %v2835
    %2852 = vst.msk [vmem:[#allocation3 + $0x118] sm:$0xff] %vm1578, %v2836
    %2853 = vst.msk [vmem:[#allocation3 + $0x120] sm:$0xff] %vm1578, %v2837
    %2854 = vst.msk [vmem:[#allocation3 + $0x128] sm:$0xff] %vm1578, %v2838
    %2855 = vst.msk [vmem:[#allocation3 + $0x130] sm:$0xff] %vm1578, %v2839
    %2856 = vst.msk [vmem:[#allocation3 + $0x138] sm:$0xff] %vm1578, %v2840
    %2857 = vst.msk [vmem:[#allocation3 + $0x140] sm:$0xff] %vm1578, %v2841
    %2858 = vst.msk [vmem:[#allocation3 + $0x148] sm:$0xff] %vm1578, %v2842
    %2859 = vst.msk [vmem:[#allocation3 + $0x150] sm:$0xff] %vm1578, %v2843
    %2860 = vst.msk [vmem:[#allocation3 + $0x158] sm:$0xff] %vm1578, %v2844
    %2861 = vst.msk [vmem:[#allocation3 + $0x160] sm:$0xff] %vm1578, %v2845
    %2862 = vst.msk [vmem:[#allocation3 + $0x168] sm:$0xff] %vm1578, %v2846
    %2863 = vst.msk [vmem:[#allocation3 + $0x170] sm:$0xff] %vm1578, %v2847
    %2864 = vst.msk [vmem:[#allocation3 + $0x178] sm:$0xff] %vm1578, %v2848
    %v2865 = vld [vmem:[#allocation2 + $0x180] sm:$0xff]
    %v2866 = vld [vmem:[#allocation2 + $0x188] sm:$0xff]
    %v2867 = vld [vmem:[#allocation2 + $0x190] sm:$0xff]
    %v2868 = vld [vmem:[#allocation2 + $0x198] sm:$0xff]
    %v2869 = vld [vmem:[#allocation2 + $0x1a0] sm:$0xff]
    %v2870 = vld [vmem:[#allocation2 + $0x1a8] sm:$0xff]
    %v2871 = vld [vmem:[#allocation2 + $0x1b0] sm:$0xff]
    %v2872 = vld [vmem:[#allocation2 + $0x1b8] sm:$0xff]
    %v2873 = vld [vmem:[#allocation2 + $0x1c0] sm:$0xff]
    %v2874 = vld [vmem:[#allocation2 + $0x1c8] sm:$0xff]
    %v2875 = vld [vmem:[#allocation2 + $0x1d0] sm:$0xff]
    %v2876 = vld [vmem:[#allocation2 + $0x1d8] sm:$0xff]
    %v2877 = vld [vmem:[#allocation2 + $0x1e0] sm:$0xff]
    %v2878 = vld [vmem:[#allocation2 + $0x1e8] sm:$0xff]
    %v2879 = vld [vmem:[#allocation2 + $0x1f0] sm:$0xff]
    %v2880 = vld [vmem:[#allocation2 + $0x1f8] sm:$0xff]
    %v2881 = vld [vmem:[#allocation2 + $0x200] sm:$0xff]
    %v2882 = vld [vmem:[#allocation2 + $0x208] sm:$0xff]
    %v2884 = vsel %vm27, %v2867, 0
    %v2887 = vsel %vm27, %v2868, 0
    %v2890 = vsel %vm27, %v2869, 0
    %v2893 = vsel %vm27, %v2870, 0
    %v2896 = vsel %vm27, %v2871, 0
    %v2899 = vsel %vm27, %v2872, 0
    %v2902 = vsel %vm27, %v2873, 0
    %v2905 = vsel %vm27, %v2874, 0
    %v2908 = vsel %vm27, %v2875, 0
    %v2911 = vsel %vm27, %v2876, 0
    %v2914 = vsel %vm27, %v2877, 0
    %v2917 = vsel %vm27, %v2878, 0
    %v2920 = vsel %vm27, %v2879, 0
    %v2923 = vsel %vm27, %v2880, 0
    %v2926 = vsel %vm27, %v2881, 0
    %v2929 = vsel %vm27, %v2882, 0
    %2931 = vmatprep.subr.mxu0 0.0
    %2932 = vmatpush1.msra.mxu0 %v937
    %2933 = vmatprep.subr.mxu0 0.0
    %2934 = vmatpush1.msra.mxu0 %v1011
    %2935 = vmatprep.subr.mxu0 0.0
    %2936 = vmatpush1.msra.mxu0 0.0
    %2937 = vmatprep.subr.mxu0 0.0
    %2938 = vmatpush1.msra.mxu0 0.0
    %2939 = vmatprep.subr.mxu0 0.0
    %2940 = vmatpush1.msra.mxu0 0.0
    %2941 = vmatprep.subr.mxu0 0.0
    %2942 = vmatpush1.msra.mxu0 0.0
    %2943 = vmatprep.subr.mxu0 0.0
    %2944 = vmatpush1.msra.mxu0 0.0
    %2945 = vmatprep.subr.mxu0 0.0
    %2946 = vmatpush1.msra.mxu0 0.0
    %2947 = vmatprep.subr.mxu0 0.0
    %2948 = vmatpush1.msra.mxu0 0.0
    %2949 = vmatprep.subr.mxu0 0.0
    %2950 = vmatpush1.msra.mxu0 0.0
    %2951 = vmatprep.subr.mxu0 0.0
    %2952 = vmatpush1.msra.mxu0 0.0
    %2953 = vmatprep.subr.mxu0 0.0
    %2954 = vmatpush1.msra.mxu0 0.0
    %2955 = vmatprep.subr.mxu0 0.0
    %2956 = vmatpush1.msra.mxu0 0.0
    %2957 = vmatprep.subr.mxu0 0.0
    %2958 = vmatpush1.msra.mxu0 0.0
    %2959 = vmatprep.subr.mxu0 0.0
    %2960 = vmatpush1.msra.mxu0 0.0
    %2961 = vmatprep.subr.mxu0 0.0
    %2962 = vmatpush1.msra.mxu0 0.0
    %2963 = vmatprep.subr.mxu0 0.0
    %2964 = vmatpush1.msra.mxu0 0.0
    %2965 = vmatprep.subr.mxu0 0.0
    %2966 = vmatpush1.msra.mxu0 0.0
    %2967 = vmatprep.subr.mxu0 0.0
    %2968 = vmatpush1.msra.mxu0 0.0
    %2969 = vmatprep.subr.mxu0 0.0
    %2970 = vmatpush1.msra.mxu0 0.0
    %2971 = vmatprep.subr.mxu0 0.0
    %2972 = vmatpush1.msra.mxu0 0.0
    %2973 = vmatprep.subr.mxu0 0.0
    %2974 = vmatpush1.msra.mxu0 0.0
    %2975 = vmatprep.subr.mxu0 0.0
    %2976 = vmatpush1.msra.mxu0 0.0
    %2977 = vmatprep.subr.mxu0 0.0
    %2978 = vmatpush1.msra.mxu0 0.0
    %2979 = vmatprep.subr.mxu0 0.0
    %2980 = vmatpush1.msra.mxu0 0.0
    %2981 = vmatprep.subr.mxu0 0.0
    %2982 = vmatpush1.msra.mxu0 0.0
    %2983 = vmatprep.subr.mxu0 0.0
    %2984 = vmatpush1.msra.mxu0 0.0
    %2985 = vmatprep.subr.mxu0 0.0
    %2986 = vmatpush1.msra.mxu0 0.0
    %2987 = vmatprep.subr.mxu0 0.0
    %2988 = vmatpush1.msra.mxu0 0.0
    %2989 = vmatprep.subr.mxu0 0.0
    %2990 = vmatpush1.msra.mxu0 0.0
    %2991 = vmatprep.subr.mxu0 0.0
    %2992 = vmatpush1.msra.mxu0 0.0
    %2993 = vmatprep.subr.mxu0 0.0
    %2994 = vmatpush1.msra.mxu0 0.0
    %2995 = vmatprep.mubr.f32.mxu0 0.0
    %2996 = vmatmul.mubr.f32.gmra.mrb[0].mxu0 %v2884
    %v2997 = vpop.f32.mrb[0].mxu0
    %v2998 = vadd.f32 0.0, %v2997
    %v2999 = vpop.f32.mrb[0].mxu0
    %3000 = vmatprep.mubr.f32.mxu0 0.0
    %3001 = vmatmul.mubr.f32.gmra.mrb[0].mxu0 %v2887
    %v3002 = vpop.f32.mrb[0].mxu0
    %v3003 = vadd.f32 0.0, %v3002
    %v3004 = vpop.f32.mrb[0].mxu0
    %3005 = vmatprep.mubr.f32.mxu0 0.0
    %3006 = vmatmul.mubr.f32.gmra.mrb[0].mxu0 %v2890
    %v3007 = vpop.f32.mrb[0].mxu0
    %v3008 = vadd.f32 0.0, %v3007
    %v3009 = vpop.f32.mrb[0].mxu0
    %3010 = vmatprep.mubr.f32.mxu0 0.0
    %3011 = vmatmul.mubr.f32.gmra.mrb[0].mxu0 %v2893
    %v3012 = vpop.f32.mrb[0].mxu0
    %v3013 = vadd.f32 0.0, %v3012
    %v3014 = vpop.f32.mrb[0].mxu0
    %3015 = vmatprep.mubr.f32.mxu0 0.0
    %3016 = vmatmul.mubr.f32.gmra.mrb[0].mxu0 %v2896
    %v3017 = vpop.f32.mrb[0].mxu0
    %v3018 = vadd.f32 0.0, %v3017
    %v3019 = vpop.f32.mrb[0].mxu0
    %3020 = vmatprep.mubr.f32.mxu0 0.0
    %3021 = vmatmul.mubr.f32.gmra.mrb[0].mxu0 %v2899
    %v3022 = vpop.f32.mrb[0].mxu0
    %v3023 = vadd.f32 0.0, %v3022
    %v3024 = vpop.f32.mrb[0].mxu0
    %3025 = vmatprep.mubr.f32.mxu0 0.0
    %3026 = vmatmul.mubr.f32.gmra.mrb[0].mxu0 %v2902
    %v3027 = vpop.f32.mrb[0].mxu0
    %v3028 = vadd.f32 0.0, %v3027
    %v3029 = vpop.f32.mrb[0].mxu0
    %3030 = vmatprep.mubr.f32.mxu0 0.0
    %3031 = vmatmul.mubr.f32.gmra.mrb[0].mxu0 %v2905
    %v3032 = vpop.f32.mrb[0].mxu0
    %v3033 = vadd.f32 0.0, %v3032
    %v3034 = vpop.f32.mrb[0].mxu0
    %3035 = vmatprep.mubr.f32.mxu0 0.0
    %3036 = vmatmul.mubr.f32.gmra.mrb[0].mxu0 %v2908
    %v3037 = vpop.f32.mrb[0].mxu0
    %v3038 = vadd.f32 0.0, %v3037
    %v3039 = vpop.f32.mrb[0].mxu0
    %3040 = vmatprep.mubr.f32.mxu0 0.0
    %3041 = vmatmul.mubr.f32.gmra.mrb[0].mxu0 %v2911
    %v3042 = vpop.f32.mrb[0].mxu0
    %v3043 = vadd.f32 0.0, %v3042
    %v3044 = vpop.f32.mrb[0].mxu0
    %3045 = vmatprep.mubr.f32.mxu0 0.0
    %3046 = vmatmul.mubr.f32.gmra.mrb[0].mxu0 %v2914
    %v3047 = vpop.f32.mrb[0].mxu0
    %v3048 = vadd.f32 0.0, %v3047
    %v3049 = vpop.f32.mrb[0].mxu0
    %3050 = vmatprep.mubr.f32.mxu0 0.0
    %3051 = vmatmul.mubr.f32.gmra.mrb[0].mxu0 %v2917
    %v3052 = vpop.f32.mrb[0].mxu0
    %v3053 = vadd.f32 0.0, %v3052
    %v3054 = vpop.f32.mrb[0].mxu0
    %3055 = vmatprep.mubr.f32.mxu0 0.0
    %3056 = vmatmul.mubr.f32.gmra.mrb[0].mxu0 %v2920
    %v3057 = vpop.f32.mrb[0].mxu0
    %v3058 = vadd.f32 0.0, %v3057
    %v3059 = vpop.f32.mrb[0].mxu0
    %3060 = vmatprep.mubr.f32.mxu0 0.0
    %3061 = vmatmul.mubr.f32.gmra.mrb[0].mxu0 %v2923
    %v3062 = vpop.f32.mrb[0].mxu0
    %v3063 = vadd.f32 0.0, %v3062
    %v3064 = vpop.f32.mrb[0].mxu0
    %3065 = vmatprep.mubr.f32.mxu0 0.0
    %3066 = vmatmul.mubr.f32.gmra.mrb[0].mxu0 %v2926
    %v3067 = vpop.f32.mrb[0].mxu0
    %v3068 = vadd.f32 0.0, %v3067
    %v3069 = vpop.f32.mrb[0].mxu0
    %3070 = vmatprep.mubr.f32.mxu0 0.0
    %3071 = vmatmul.mubr.f32.gmra.mrb[0].mxu0 %v2929
    %v3072 = vpop.f32.mrb[0].mxu0
    %v3073 = vadd.f32 0.0, %v3072
    %v3074 = vpop.f32.mrb[0].mxu0
    %3075 = vdwg.mxu0
    %v3077 = vsel %vm27, %v2865, 0
    %v3080 = vsel %vm27, %v2866, 0
    %3082 = vmatprep.subr.mxu0 0.0
    %3083 = vmatpush1.msra.mxu0 %v934
    %3084 = vmatprep.subr.mxu0 0.0
    %3085 = vmatpush1.msra.mxu0 %v1165
    %3086 = vmatprep.subr.mxu0 0.0
    %3087 = vmatpush1.msra.mxu0 0.0
    %3088 = vmatprep.subr.mxu0 0.0
    %3089 = vmatpush1.msra.mxu0 0.0
    %3090 = vmatprep.subr.mxu0 0.0
    %3091 = vmatpush1.msra.mxu0 0.0
    %3092 = vmatprep.subr.mxu0 0.0
    %3093 = vmatpush1.msra.mxu0 0.0
    %3094 = vmatprep.subr.mxu0 0.0
    %3095 = vmatpush1.msra.mxu0 0.0
    %3096 = vmatprep.subr.mxu0 0.0
    %3097 = vmatpush1.msra.mxu0 0.0
    %3098 = vmatprep.subr.mxu0 0.0
    %3099 = vmatpush1.msra.mxu0 0.0
    %3100 = vmatprep.subr.mxu0 0.0
    %3101 = vmatpush1.msra.mxu0 0.0
    %3102 = vmatprep.subr.mxu0 0.0
    %3103 = vmatpush1.msra.mxu0 0.0
    %3104 = vmatprep.subr.mxu0 0.0
    %3105 = vmatpush1.msra.mxu0 0.0
    %3106 = vmatprep.subr.mxu0 0.0
    %3107 = vmatpush1.msra.mxu0 0.0
    %3108 = vmatprep.subr.mxu0 0.0
    %3109 = vmatpush1.msra.mxu0 0.0
    %3110 = vmatprep.subr.mxu0 0.0
    %3111 = vmatpush1.msra.mxu0 0.0
    %3112 = vmatprep.subr.mxu0 0.0
    %3113 = vmatpush1.msra.mxu0 0.0
    %3114 = vmatprep.subr.mxu0 0.0
    %3115 = vmatpush1.msra.mxu0 0.0
    %3116 = vmatprep.subr.mxu0 0.0
    %3117 = vmatpush1.msra.mxu0 0.0
    %3118 = vmatprep.subr.mxu0 0.0
    %3119 = vmatpush1.msra.mxu0 0.0
    %3120 = vmatprep.subr.mxu0 0.0
    %3121 = vmatpush1.msra.mxu0 0.0
    %3122 = vmatprep.subr.mxu0 0.0
    %3123 = vmatpush1.msra.mxu0 0.0
    %3124 = vmatprep.subr.mxu0 0.0
    %3125 = vmatpush1.msra.mxu0 0.0
    %3126 = vmatprep.subr.mxu0 0.0
    %3127 = vmatpush1.msra.mxu0 0.0
    %3128 = vmatprep.subr.mxu0 0.0
    %3129 = vmatpush1.msra.mxu0 0.0
    %3130 = vmatprep.subr.mxu0 0.0
    %3131 = vmatpush1.msra.mxu0 0.0
    %3132 = vmatprep.subr.mxu0 0.0
    %3133 = vmatpush1.msra.mxu0 0.0
    %3134 = vmatprep.subr.mxu0 0.0
    %3135 = vmatpush1.msra.mxu0 0.0
    %3136 = vmatprep.subr.mxu0 0.0
    %3137 = vmatpush1.msra.mxu0 0.0
    %3138 = vmatprep.subr.mxu0 0.0
    %3139 = vmatpush1.msra.mxu0 0.0
    %3140 = vmatprep.subr.mxu0 0.0
    %3141 = vmatpush1.msra.mxu0 0.0
    %3142 = vmatprep.subr.mxu0 0.0
    %3143 = vmatpush1.msra.mxu0 0.0
    %3144 = vmatprep.subr.mxu0 0.0
    %3145 = vmatpush1.msra.mxu0 0.0
    %3146 = vmatprep.mubr.f32.mxu0 0.0
    %3147 = vmatmul.mubr.f32.gmra.mrb[0].mxu0 %v3077
    %v3148 = vpop.f32.mrb[0].mxu0
    %v3149 = vadd.f32 %v2998, %v3148
    %v3150 = vpop.f32.mrb[0].mxu0
    %3151 = vmatprep.mubr.f32.mxu0 0.0
    %3152 = vmatmul.mubr.f32.gmra.mrb[0].mxu0 %v3080
    %v3153 = vpop.f32.mrb[0].mxu0
    %v3154 = vadd.f32 %v3003, %v3153
    %v3155 = vpop.f32.mrb[0].mxu0
    %3156 = vmatprep.mubr.f32.mxu0 0.0
    %3157 = vmatmul.mubr.f32.gmra.mrb[0].mxu0 %v2884
    %v3158 = vpop.f32.mrb[0].mxu0
    %v3159 = vadd.f32 %v3008, %v3158
    %v3160 = vpop.f32.mrb[0].mxu0
    %3161 = vmatprep.mubr.f32.mxu0 0.0
    %3162 = vmatmul.mubr.f32.gmra.mrb[0].mxu0 %v2887
    %v3163 = vpop.f32.mrb[0].mxu0
    %v3164 = vadd.f32 %v3013, %v3163
    %v3165 = vpop.f32.mrb[0].mxu0
    %3166 = vmatprep.mubr.f32.mxu0 0.0
    %3167 = vmatmul.mubr.f32.gmra.mrb[0].mxu0 %v2890
    %v3168 = vpop.f32.mrb[0].mxu0
    %v3169 = vadd.f32 %v3018, %v3168
    %v3170 = vpop.f32.mrb[0].mxu0
    %3171 = vmatprep.mubr.f32.mxu0 0.0
    %3172 = vmatmul.mubr.f32.gmra.mrb[0].mxu0 %v2893
    %v3173 = vpop.f32.mrb[0].mxu0
    %v3174 = vadd.f32 %v3023, %v3173
    %v3175 = vpop.f32.mrb[0].mxu0
    %3176 = vmatprep.mubr.f32.mxu0 0.0
    %3177 = vmatmul.mubr.f32.gmra.mrb[0].mxu0 %v2896
    %v3178 = vpop.f32.mrb[0].mxu0
    %v3179 = vadd.f32 %v3028, %v3178
    %v3180 = vpop.f32.mrb[0].mxu0
    %3181 = vmatprep.mubr.f32.mxu0 0.0
    %3182 = vmatmul.mubr.f32.gmra.mrb[0].mxu0 %v2899
    %v3183 = vpop.f32.mrb[0].mxu0
    %v3184 = vadd.f32 %v3033, %v3183
    %v3185 = vpop.f32.mrb[0].mxu0
    %3186 = vmatprep.mubr.f32.mxu0 0.0
    %3187 = vmatmul.mubr.f32.gmra.mrb[0].mxu0 %v2902
    %v3188 = vpop.f32.mrb[0].mxu0
    %v3189 = vadd.f32 %v3038, %v3188
    %v3190 = vpop.f32.mrb[0].mxu0
    %3191 = vmatprep.mubr.f32.mxu0 0.0
    %3192 = vmatmul.mubr.f32.gmra.mrb[0].mxu0 %v2905
    %v3193 = vpop.f32.mrb[0].mxu0
    %v3194 = vadd.f32 %v3043, %v3193
    %v3195 = vpop.f32.mrb[0].mxu0
    %3196 = vmatprep.mubr.f32.mxu0 0.0
    %3197 = vmatmul.mubr.f32.gmra.mrb[0].mxu0 %v2908
    %v3198 = vpop.f32.mrb[0].mxu0
    %v3199 = vadd.f32 %v3048, %v3198
    %v3200 = vpop.f32.mrb[0].mxu0
    %3201 = vmatprep.mubr.f32.mxu0 0.0
    %3202 = vmatmul.mubr.f32.gmra.mrb[0].mxu0 %v2911
    %v3203 = vpop.f32.mrb[0].mxu0
    %v3204 = vadd.f32 %v3053, %v3203
    %v3205 = vpop.f32.mrb[0].mxu0
    %3206 = vmatprep.mubr.f32.mxu0 0.0
    %3207 = vmatmul.mubr.f32.gmra.mrb[0].mxu0 %v2914
    %v3208 = vpop.f32.mrb[0].mxu0
    %v3209 = vadd.f32 %v3058, %v3208
    %v3210 = vpop.f32.mrb[0].mxu0
    %3211 = vmatprep.mubr.f32.mxu0 0.0
    %3212 = vmatmul.mubr.f32.gmra.mrb[0].mxu0 %v2917
    %v3213 = vpop.f32.mrb[0].mxu0
    %v3214 = vadd.f32 %v3063, %v3213
    %v3215 = vpop.f32.mrb[0].mxu0
    %3216 = vmatprep.mubr.f32.mxu0 0.0
    %3217 = vmatmul.mubr.f32.gmra.mrb[0].mxu0 %v2920
    %v3218 = vpop.f32.mrb[0].mxu0
    %v3219 = vadd.f32 %v3068, %v3218
    %v3220 = vpop.f32.mrb[0].mxu0
    %3221 = vmatprep.mubr.f32.mxu0 0.0
    %3222 = vmatmul.mubr.f32.gmra.mrb[0].mxu0 %v2923
    %v3223 = vpop.f32.mrb[0].mxu0
    %v3224 = vadd.f32 %v3073, %v3223
    %v3225 = vpop.f32.mrb[0].mxu0
    %3226 = vdwg.mxu0
    %v3227 = vld [vmem:[#allocation2 + $0x1a0] sm:$0xff]
    %v3228 = vld [vmem:[#allocation2 + $0x1a8] sm:$0xff]
    %v3229 = vld [vmem:[#allocation2 + $0x1b0] sm:$0xff]
    %v3230 = vld [vmem:[#allocation2 + $0x1b8] sm:$0xff]
    %v3231 = vld [vmem:[#allocation2 + $0x1c0] sm:$0xff]
    %v3232 = vld [vmem:[#allocation2 + $0x1c8] sm:$0xff]
    %v3233 = vld [vmem:[#allocation2 + $0x1d0] sm:$0xff]
    %v3234 = vld [vmem:[#allocation2 + $0x1d8] sm:$0xff]
    %v3235 = vld [vmem:[#allocation2 + $0x1e0] sm:$0xff]
    %v3236 = vld [vmem:[#allocation2 + $0x1e8] sm:$0xff]
    %v3237 = vld [vmem:[#allocation2 + $0x1f0] sm:$0xff]
    %v3238 = vld [vmem:[#allocation2 + $0x1f8] sm:$0xff]
    %v3239 = vld [vmem:[#allocation2 + $0x200] sm:$0xff]
    %v3240 = vld [vmem:[#allocation2 + $0x208] sm:$0xff]
    %v3241 = vld [vmem:[#allocation2 + $0x210] sm:$0xff]
    %v3242 = vld [vmem:[#allocation2 + $0x218] sm:$0xff]
    %v3244 = vsel %vm27, %v3227, 0
    %v3247 = vsel %vm27, %v3228, 0
    %v3250 = vsel %vm27, %v3229, 0
    %v3253 = vsel %vm27, %v3230, 0
    %v3256 = vsel %vm27, %v3231, 0
    %v3259 = vsel %vm27, %v3232, 0
    %v3262 = vsel %vm27, %v3233, 0
    %v3265 = vsel %vm27, %v3234, 0
    %v3268 = vsel %vm27, %v3235, 0
    %v3271 = vsel %vm27, %v3236, 0
    %v3274 = vsel %vm27, %v3237, 0
    %v3277 = vsel %vm27, %v3238, 0
    %v3280 = vsel %vm27, %v3239, 0
    %v3283 = vsel %vm27, %v3240, 0
    %v3286 = vsel %vm27, %v3241, 0
    %v3289 = vsel %vm27, %v3242, 0
    %3291 = vmatprep.subr.mxu0 0.0
    %3292 = vmatpush1.msra.mxu0 %v940
    %3293 = vmatprep.subr.mxu0 0.0
    %3294 = vmatpush1.msra.mxu0 %v1377
    %3295 = vmatprep.subr.mxu0 0.0
    %3296 = vmatpush1.msra.mxu0 0.0
    %3297 = vmatprep.subr.mxu0 0.0
    %3298 = vmatpush1.msra.mxu0 0.0
    %3299 = vmatprep.subr.mxu0 0.0
    %3300 = vmatpush1.msra.mxu0 0.0
    %3301 = vmatprep.subr.mxu0 0.0
    %3302 = vmatpush1.msra.mxu0 0.0
    %3303 = vmatprep.subr.mxu0 0.0
    %3304 = vmatpush1.msra.mxu0 0.0
    %3305 = vmatprep.subr.mxu0 0.0
    %3306 = vmatpush1.msra.mxu0 0.0
    %3307 = vmatprep.subr.mxu0 0.0
    %3308 = vmatpush1.msra.mxu0 0.0
    %3309 = vmatprep.subr.mxu0 0.0
    %3310 = vmatpush1.msra.mxu0 0.0
    %3311 = vmatprep.subr.mxu0 0.0
    %3312 = vmatpush1.msra.mxu0 0.0
    %3313 = vmatprep.subr.mxu0 0.0
    %3314 = vmatpush1.msra.mxu0 0.0
    %3315 = vmatprep.subr.mxu0 0.0
    %3316 = vmatpush1.msra.mxu0 0.0
    %3317 = vmatprep.subr.mxu0 0.0
    %3318 = vmatpush1.msra.mxu0 0.0
    %3319 = vmatprep.subr.mxu0 0.0
    %3320 = vmatpush1.msra.mxu0 0.0
    %3321 = vmatprep.subr.mxu0 0.0
    %3322 = vmatpush1.msra.mxu0 0.0
    %3323 = vmatprep.subr.mxu0 0.0
    %3324 = vmatpush1.msra.mxu0 0.0
    %3325 = vmatprep.subr.mxu0 0.0
    %3326 = vmatpush1.msra.mxu0 0.0
    %3327 = vmatprep.subr.mxu0 0.0
    %3328 = vmatpush1.msra.mxu0 0.0
    %3329 = vmatprep.subr.mxu0 0.0
    %3330 = vmatpush1.msra.mxu0 0.0
    %3331 = vmatprep.subr.mxu0 0.0
    %3332 = vmatpush1.msra.mxu0 0.0
    %3333 = vmatprep.subr.mxu0 0.0
    %3334 = vmatpush1.msra.mxu0 0.0
    %3335 = vmatprep.subr.mxu0 0.0
    %3336 = vmatpush1.msra.mxu0 0.0
    %3337 = vmatprep.subr.mxu0 0.0
    %3338 = vmatpush1.msra.mxu0 0.0
    %3339 = vmatprep.subr.mxu0 0.0
    %3340 = vmatpush1.msra.mxu0 0.0
    %3341 = vmatprep.subr.mxu0 0.0
    %3342 = vmatpush1.msra.mxu0 0.0
    %3343 = vmatprep.subr.mxu0 0.0
    %3344 = vmatpush1.msra.mxu0 0.0
    %3345 = vmatprep.subr.mxu0 0.0
    %3346 = vmatpush1.msra.mxu0 0.0
    %3347 = vmatprep.subr.mxu0 0.0
    %3348 = vmatpush1.msra.mxu0 0.0
    %3349 = vmatprep.subr.mxu0 0.0
    %3350 = vmatpush1.msra.mxu0 0.0
    %3351 = vmatprep.subr.mxu0 0.0
    %3352 = vmatpush1.msra.mxu0 0.0
    %3353 = vmatprep.subr.mxu0 0.0
    %3354 = vmatpush1.msra.mxu0 0.0
    %3355 = vmatprep.mubr.f32.mxu0 0.0
    %3356 = vmatmul.mubr.f32.gmra.mrb[0].mxu0 %v3244
    %v3357 = vpop.f32.mrb[0].mxu0
    %v3358 = vadd.f32 0.0, %v3357
    %v3359 = vpop.f32.mrb[0].mxu0
    %3360 = vmatprep.mubr.f32.mxu0 0.0
    %3361 = vmatmul.mubr.f32.gmra.mrb[0].mxu0 %v3247
    %v3362 = vpop.f32.mrb[0].mxu0
    %v3363 = vadd.f32 0.0, %v3362
    %v3364 = vpop.f32.mrb[0].mxu0
    %3365 = vmatprep.mubr.f32.mxu0 0.0
    %3366 = vmatmul.mubr.f32.gmra.mrb[0].mxu0 %v3250
    %v3367 = vpop.f32.mrb[0].mxu0
    %v3368 = vadd.f32 0.0, %v3367
    %v3369 = vpop.f32.mrb[0].mxu0
    %3370 = vmatprep.mubr.f32.mxu0 0.0
    %3371 = vmatmul.mubr.f32.gmra.mrb[0].mxu0 %v3253
    %v3372 = vpop.f32.mrb[0].mxu0
    %v3373 = vadd.f32 0.0, %v3372
    %v3374 = vpop.f32.mrb[0].mxu0
    %3375 = vmatprep.mubr.f32.mxu0 0.0
    %3376 = vmatmul.mubr.f32.gmra.mrb[0].mxu0 %v3256
    %v3377 = vpop.f32.mrb[0].mxu0
    %v3378 = vadd.f32 0.0, %v3377
    %v3379 = vpop.f32.mrb[0].mxu0
    %3380 = vmatprep.mubr.f32.mxu0 0.0
    %3381 = vmatmul.mubr.f32.gmra.mrb[0].mxu0 %v3259
    %v3382 = vpop.f32.mrb[0].mxu0
    %v3383 = vadd.f32 0.0, %v3382
    %v3384 = vpop.f32.mrb[0].mxu0
    %3385 = vmatprep.mubr.f32.mxu0 0.0
    %3386 = vmatmul.mubr.f32.gmra.mrb[0].mxu0 %v3262
    %v3387 = vpop.f32.mrb[0].mxu0
    %v3388 = vadd.f32 0.0, %v3387
    %v3389 = vpop.f32.mrb[0].mxu0
    %3390 = vmatprep.mubr.f32.mxu0 0.0
    %3391 = vmatmul.mubr.f32.gmra.mrb[0].mxu0 %v3265
    %v3392 = vpop.f32.mrb[0].mxu0
    %v3393 = vadd.f32 0.0, %v3392
    %v3394 = vpop.f32.mrb[0].mxu0
    %3395 = vmatprep.mubr.f32.mxu0 0.0
    %3396 = vmatmul.mubr.f32.gmra.mrb[0].mxu0 %v3268
    %v3397 = vpop.f32.mrb[0].mxu0
    %v3398 = vadd.f32 0.0, %v3397
    %v3399 = vpop.f32.mrb[0].mxu0
    %3400 = vmatprep.mubr.f32.mxu0 0.0
    %3401 = vmatmul.mubr.f32.gmra.mrb[0].mxu0 %v3271
    %v3402 = vpop.f32.mrb[0].mxu0
    %v3403 = vadd.f32 0.0, %v3402
    %v3404 = vpop.f32.mrb[0].mxu0
    %3405 = vmatprep.mubr.f32.mxu0 0.0
    %3406 = vmatmul.mubr.f32.gmra.mrb[0].mxu0 %v3274
    %v3407 = vpop.f32.mrb[0].mxu0
    %v3408 = vadd.f32 0.0, %v3407
    %v3409 = vpop.f32.mrb[0].mxu0
    %3410 = vmatprep.mubr.f32.mxu0 0.0
    %3411 = vmatmul.mubr.f32.gmra.mrb[0].mxu0 %v3277
    %v3412 = vpop.f32.mrb[0].mxu0
    %v3413 = vadd.f32 0.0, %v3412
    %v3414 = vpop.f32.mrb[0].mxu0
    %3415 = vmatprep.mubr.f32.mxu0 0.0
    %3416 = vmatmul.mubr.f32.gmra.mrb[0].mxu0 %v3280
    %v3417 = vpop.f32.mrb[0].mxu0
    %v3418 = vadd.f32 0.0, %v3417
    %v3419 = vpop.f32.mrb[0].mxu0
    %3420 = vmatprep.mubr.f32.mxu0 0.0
    %3421 = vmatmul.mubr.f32.gmra.mrb[0].mxu0 %v3283
    %v3422 = vpop.f32.mrb[0].mxu0
    %v3423 = vadd.f32 0.0, %v3422
    %v3424 = vpop.f32.mrb[0].mxu0
    %3425 = vmatprep.mubr.f32.mxu0 0.0
    %3426 = vmatmul.mubr.f32.gmra.mrb[0].mxu0 %v3286
    %v3427 = vpop.f32.mrb[0].mxu0
    %v3428 = vadd.f32 0.0, %v3427
    %v3429 = vpop.f32.mrb[0].mxu0
    %3430 = vmatprep.mubr.f32.mxu0 0.0
    %3431 = vmatmul.mubr.f32.gmra.mrb[0].mxu0 %v3289
    %v3432 = vpop.f32.mrb[0].mxu0
    %v3433 = vadd.f32 0.0, %v3432
    %v3434 = vpop.f32.mrb[0].mxu0
    %3435 = vdwg.mxu0
    %v3436 = vadd.f32 %v3149, %v3358
    %v3437 = vadd.f32 %v3154, %v3363
    %v3438 = vadd.f32 %v3159, %v3368
    %v3439 = vadd.f32 %v3164, %v3373
    %v3440 = vadd.f32 %v3169, %v3378
    %v3441 = vadd.f32 %v3174, %v3383
    %v3442 = vadd.f32 %v3179, %v3388
    %v3443 = vadd.f32 %v3184, %v3393
    %v3444 = vadd.f32 %v3189, %v3398
    %v3445 = vadd.f32 %v3194, %v3403
    %v3446 = vadd.f32 %v3199, %v3408
    %v3447 = vadd.f32 %v3204, %v3413
    %v3448 = vadd.f32 %v3209, %v3418
    %v3449 = vadd.f32 %v3214, %v3423
    %v3450 = vadd.f32 %v3219, %v3428
    %v3451 = vadd.f32 %v3224, %v3433
    %v3452 = vadd.f32 %v3436, %v1544
    %v3453 = vadd.f32 %v3437, %v1544
    %v3454 = vadd.f32 %v3438, %v1544
    %v3455 = vadd.f32 %v3439, %v1544
    %v3456 = vadd.f32 %v3440, %v1544
    %v3457 = vadd.f32 %v3441, %v1544
    %v3458 = vadd.f32 %v3442, %v1544
    %v3459 = vadd.f32 %v3443, %v1544
    %v3460 = vadd.f32 %v3444, %v1544
    %v3461 = vadd.f32 %v3445, %v1544
    %v3462 = vadd.f32 %v3446, %v1544
    %v3463 = vadd.f32 %v3447, %v1544
    %v3464 = vadd.f32 %v3448, %v1544
    %v3465 = vadd.f32 %v3449, %v1544
    %v3466 = vadd.f32 %v3450, %v1544
    %v3467 = vadd.f32 %v3451, %v1544
    %v3468 = vmax.f32 %v3452, 0.0
    %v3469 = vmax.f32 %v3453, 0.0
    %v3470 = vmax.f32 %v3454, 0.0
    %v3471 = vmax.f32 %v3455, 0.0
    %v3472 = vmax.f32 %v3456, 0.0
    %v3473 = vmax.f32 %v3457, 0.0
    %v3474 = vmax.f32 %v3458, 0.0
    %v3475 = vmax.f32 %v3459, 0.0
    %v3476 = vmax.f32 %v3460, 0.0
    %v3477 = vmax.f32 %v3461, 0.0
    %v3478 = vmax.f32 %v3462, 0.0
    %v3479 = vmax.f32 %v3463, 0.0
    %v3480 = vmax.f32 %v3464, 0.0
    %v3481 = vmax.f32 %v3465, 0.0
    %v3482 = vmax.f32 %v3466, 0.0
    %v3483 = vmax.f32 %v3467, 0.0
    %3484 = vst.msk [vmem:[#allocation3 + $0x180] sm:$0xff] %vm1578, %v3468
    %3485 = vst.msk [vmem:[#allocation3 + $0x188] sm:$0xff] %vm1578, %v3469
    %3486 = vst.msk [vmem:[#allocation3 + $0x190] sm:$0xff] %vm1578, %v3470
    %3487 = vst.msk [vmem:[#allocation3 + $0x198] sm:$0xff] %vm1578, %v3471
    %3488 = vst.msk [vmem:[#allocation3 + $0x1a0] sm:$0xff] %vm1578, %v3472
    %3489 = vst.msk [vmem:[#allocation3 + $0x1a8] sm:$0xff] %vm1578, %v3473
    %3490 = vst.msk [vmem:[#allocation3 + $0x1b0] sm:$0xff] %vm1578, %v3474
    %3491 = vst.msk [vmem:[#allocation3 + $0x1b8] sm:$0xff] %vm1578, %v3475
    %3492 = vst.msk [vmem:[#allocation3 + $0x1c0] sm:$0xff] %vm1578, %v3476
    %3493 = vst.msk [vmem:[#allocation3 + $0x1c8] sm:$0xff] %vm1578, %v3477
    %3494 = vst.msk [vmem:[#allocation3 + $0x1d0] sm:$0xff] %vm1578, %v3478
    %3495 = vst.msk [vmem:[#allocation3 + $0x1d8] sm:$0xff] %vm1578, %v3479
    %3496 = vst.msk [vmem:[#allocation3 + $0x1e0] sm:$0xff] %vm1578, %v3480
    %3497 = vst.msk [vmem:[#allocation3 + $0x1e8] sm:$0xff] %vm1578, %v3481
    %3498 = vst.msk [vmem:[#allocation3 + $0x1f0] sm:$0xff] %vm1578, %v3482
    %3499 = vst.msk [vmem:[#allocation3 + $0x1f8] sm:$0xff] %vm1578, %v3483
    %3500 = vst.msk [vmem:[#allocation4] sm:$0xff] %vm1578, 0.0
    %3501 = vst.msk [vmem:[#allocation4 + $0x8] sm:$0xff] %vm1578, 0.0
    %3502 = vst.msk [vmem:[#allocation4 + $0x10] sm:$0xff] %vm1578, 0.0
    %3503 = vst.msk [vmem:[#allocation4 + $0x18] sm:$0xff] %vm1578, 0.0
    %3504 = vst.msk [vmem:[#allocation4 + $0x20] sm:$0xff] %vm1578, 0.0
    %3505 = vst.msk [vmem:[#allocation4 + $0x28] sm:$0xff] %vm1578, 0.0
    %3506 = vst.msk [vmem:[#allocation4 + $0x30] sm:$0xff] %vm1578, 0.0
    %3507 = vst.msk [vmem:[#allocation4 + $0x38] sm:$0xff] %vm1578, 0.0
    %3508 = vst.msk [vmem:[#allocation4 + $0x40] sm:$0xff] %vm1578, 0.0
    %3509 = vst.msk [vmem:[#allocation4 + $0x48] sm:$0xff] %vm1578, 0.0
    %3510 = vst.msk [vmem:[#allocation4 + $0x50] sm:$0xff] %vm1578, 0.0
    %3511 = vst.msk [vmem:[#allocation4 + $0x58] sm:$0xff] %vm1578, 0.0
    %3512 = vst.msk [vmem:[#allocation4 + $0x60] sm:$0xff] %vm1578, 0.0
    %3513 = vst.msk [vmem:[#allocation4 + $0x68] sm:$0xff] %vm1578, 0.0
    %3514 = vst.msk [vmem:[#allocation4 + $0x70] sm:$0xff] %vm1578, 0.0
    %3515 = vst.msk [vmem:[#allocation4 + $0x78] sm:$0xff] %vm1578, 0.0
    %3516 = vst.msk [vmem:[#allocation4 + $0x80] sm:$0xff] %vm1578, 0.0
    %v3517 = vld [vmem:[#allocation3] ss:$2 sm:$0x7f]
    %s3518 = scalar_lea.vmem [#allocation3], 1
    %v3519 = vld [vmem:[%s3518] ss:$2 sm:$0x7f]
    %s3520 = scalar_lea.vmem [#allocation3], 16
    %v3521 = vld [vmem:[%s3520] ss:$2 sm:$0x7f]
    %s3522 = scalar_lea.vmem [#allocation3], 17
    %v3523 = vld [vmem:[%s3522] ss:$2 sm:$0x7f]
    %v3524 = vmax.f32 %v3517, %v3519
    %v3525 = vmax.f32 %v3521, %v3523
    %v3526 = vmax.f32 %v3524, %v3525
    %vm3527 = vcmask 63488
    %3528 = vst.msk [vmem:[#allocation4] sm:$0x7f] %vm3527, %v3526
    %s3529 = scalar_lea.vmem [#allocation3], 32
    %v3530 = vld [vmem:[%s3529] ss:$2 sm:$0x7f]
    %s3531 = scalar_lea.vmem [#allocation3], 33
    %v3532 = vld [vmem:[%s3531] ss:$2 sm:$0x7f]
    %s3533 = scalar_lea.vmem [#allocation3], 48
    %v3534 = vld [vmem:[%s3533] ss:$2 sm:$0x7f]
    %s3535 = scalar_lea.vmem [#allocation3], 49
    %v3536 = vld [vmem:[%s3535] ss:$2 sm:$0x7f]
    %v3537 = vmax.f32 %v3530, %v3532
    %v3538 = vmax.f32 %v3534, %v3536
    %v3539 = vmax.f32 %v3537, %v3538
    %3540 = vst.msk [vmem:[#allocation4 + $0x8] sm:$0x7f] %vm3527, %v3539
    %s3541 = scalar_lea.vmem [#allocation3], 64
    %v3542 = vld [vmem:[%s3541] ss:$2 sm:$0x7f]
    %s3543 = scalar_lea.vmem [#allocation3], 65
    %v3544 = vld [vmem:[%s3543] ss:$2 sm:$0x7f]
    %s3545 = scalar_lea.vmem [#allocation3], 80
    %v3546 = vld [vmem:[%s3545] ss:$2 sm:$0x7f]
    %s3547 = scalar_lea.vmem [#allocation3], 81
    %v3548 = vld [vmem:[%s3547] ss:$2 sm:$0x7f]
    %v3549 = vmax.f32 %v3542, %v3544
    %v3550 = vmax.f32 %v3546, %v3548
    %v3551 = vmax.f32 %v3549, %v3550
    %3552 = vst.msk [vmem:[#allocation4 + $0x10] sm:$0x7f] %vm3527, %v3551
    %s3553 = scalar_lea.vmem [#allocation3], 96
    %v3554 = vld [vmem:[%s3553] ss:$2 sm:$0x7f]
    %s3555 = scalar_lea.vmem [#allocation3], 97
    %v3556 = vld [vmem:[%s3555] ss:$2 sm:$0x7f]
    %s3557 = scalar_lea.vmem [#allocation3], 112
    %v3558 = vld [vmem:[%s3557] ss:$2 sm:$0x7f]
    %s3559 = scalar_lea.vmem [#allocation3], 113
    %v3560 = vld [vmem:[%s3559] ss:$2 sm:$0x7f]
    %v3561 = vmax.f32 %v3554, %v3556
    %v3562 = vmax.f32 %v3558, %v3560
    %v3563 = vmax.f32 %v3561, %v3562
    %3564 = vst.msk [vmem:[#allocation4 + $0x18] sm:$0x7f] %vm3527, %v3563
    %s3565 = scalar_lea.vmem [#allocation3], 128
    %v3566 = vld [vmem:[%s3565] ss:$2 sm:$0x7f]
    %s3567 = scalar_lea.vmem [#allocation3], 129
    %v3568 = vld [vmem:[%s3567] ss:$2 sm:$0x7f]
    %s3569 = scalar_lea.vmem [#allocation3], 144
    %v3570 = vld [vmem:[%s3569] ss:$2 sm:$0x7f]
    %s3571 = scalar_lea.vmem [#allocation3], 145
    %v3572 = vld [vmem:[%s3571] ss:$2 sm:$0x7f]
    %v3573 = vmax.f32 %v3566, %v3568
    %v3574 = vmax.f32 %v3570, %v3572
    %v3575 = vmax.f32 %v3573, %v3574
    %3576 = vst.msk [vmem:[#allocation4 + $0x20] sm:$0x7f] %vm3527, %v3575
    %s3577 = scalar_lea.vmem [#allocation3], 160
    %v3578 = vld [vmem:[%s3577] ss:$2 sm:$0x7f]
    %s3579 = scalar_lea.vmem [#allocation3], 161
    %v3580 = vld [vmem:[%s3579] ss:$2 sm:$0x7f]
    %s3581 = scalar_lea.vmem [#allocation3], 176
    %v3582 = vld [vmem:[%s3581] ss:$2 sm:$0x7f]
    %s3583 = scalar_lea.vmem [#allocation3], 177
    %v3584 = vld [vmem:[%s3583] ss:$2 sm:$0x7f]
    %v3585 = vmax.f32 %v3578, %v3580
    %v3586 = vmax.f32 %v3582, %v3584
    %v3587 = vmax.f32 %v3585, %v3586
    %3588 = vst.msk [vmem:[#allocation4 + $0x28] sm:$0x7f] %vm3527, %v3587
    %s3589 = scalar_lea.vmem [#allocation3], 192
    %v3590 = vld [vmem:[%s3589] ss:$2 sm:$0x7f]
    %s3591 = scalar_lea.vmem [#allocation3], 193
    %v3592 = vld [vmem:[%s3591] ss:$2 sm:$0x7f]
    %s3593 = scalar_lea.vmem [#allocation3], 208
    %v3594 = vld [vmem:[%s3593] ss:$2 sm:$0x7f]
    %s3595 = scalar_lea.vmem [#allocation3], 209
    %v3596 = vld [vmem:[%s3595] ss:$2 sm:$0x7f]
    %v3597 = vmax.f32 %v3590, %v3592
    %v3598 = vmax.f32 %v3594, %v3596
    %v3599 = vmax.f32 %v3597, %v3598
    %3600 = vst.msk [vmem:[#allocation4 + $0x30] sm:$0x7f] %vm3527, %v3599
    %s3601 = scalar_lea.vmem [#allocation3], 256
    %v3602 = vld [vmem:[%s3601] ss:$2 sm:$0x7f]
    %s3603 = scalar_lea.vmem [#allocation3], 257
    %v3604 = vld [vmem:[%s3603] ss:$2 sm:$0x7f]
    %s3605 = scalar_lea.vmem [#allocation3], 272
    %v3606 = vld [vmem:[%s3605] ss:$2 sm:$0x7f]
    %s3607 = scalar_lea.vmem [#allocation3], 273
    %v3608 = vld [vmem:[%s3607] ss:$2 sm:$0x7f]
    %v3609 = vmax.f32 %v3602, %v3604
    %v3610 = vmax.f32 %v3606, %v3608
    %v3611 = vmax.f32 %v3609, %v3610
    %3612 = vst.msk [vmem:[#allocation4 + $0x38] sm:$0x7f] %vm3527, %v3611
    %s3613 = scalar_lea.vmem [#allocation3], 288
    %v3614 = vld [vmem:[%s3613] ss:$2 sm:$0x7f]
    %s3615 = scalar_lea.vmem [#allocation3], 289
    %v3616 = vld [vmem:[%s3615] ss:$2 sm:$0x7f]
    %s3617 = scalar_lea.vmem [#allocation3], 304
    %v3618 = vld [vmem:[%s3617] ss:$2 sm:$0x7f]
    %s3619 = scalar_lea.vmem [#allocation3], 305
    %v3620 = vld [vmem:[%s3619] ss:$2 sm:$0x7f]
    %v3621 = vmax.f32 %v3614, %v3616
    %v3622 = vmax.f32 %v3618, %v3620
    %v3623 = vmax.f32 %v3621, %v3622
    %3624 = vst.msk [vmem:[#allocation4 + $0x40] sm:$0x7f] %vm3527, %v3623
    %s3625 = scalar_lea.vmem [#allocation3], 320
    %v3626 = vld [vmem:[%s3625] ss:$2 sm:$0x7f]
    %s3627 = scalar_lea.vmem [#allocation3], 321
    %v3628 = vld [vmem:[%s3627] ss:$2 sm:$0x7f]
    %s3629 = scalar_lea.vmem [#allocation3], 336
    %v3630 = vld [vmem:[%s3629] ss:$2 sm:$0x7f]
    %s3631 = scalar_lea.vmem [#allocation3], 337
    %v3632 = vld [vmem:[%s3631] ss:$2 sm:$0x7f]
    %v3633 = vmax.f32 %v3626, %v3628
    %v3634 = vmax.f32 %v3630, %v3632
    %v3635 = vmax.f32 %v3633, %v3634
    %3636 = vst.msk [vmem:[#allocation4 + $0x48] sm:$0x7f] %vm3527, %v3635
    %s3637 = scalar_lea.vmem [#allocation3], 352
    %v3638 = vld [vmem:[%s3637] ss:$2 sm:$0x7f]
    %s3639 = scalar_lea.vmem [#allocation3], 353
    %v3640 = vld [vmem:[%s3639] ss:$2 sm:$0x7f]
    %s3641 = scalar_lea.vmem [#allocation3], 368
    %v3642 = vld [vmem:[%s3641] ss:$2 sm:$0x7f]
    %s3643 = scalar_lea.vmem [#allocation3], 369
    %v3644 = vld [vmem:[%s3643] ss:$2 sm:$0x7f]
    %v3645 = vmax.f32 %v3638, %v3640
    %v3646 = vmax.f32 %v3642, %v3644
    %v3647 = vmax.f32 %v3645, %v3646
    %3648 = vst.msk [vmem:[#allocation4 + $0x50] sm:$0x7f] %vm3527, %v3647
    %s3649 = scalar_lea.vmem [#allocation3], 384
    %v3650 = vld [vmem:[%s3649] ss:$2 sm:$0x7f]
    %s3651 = scalar_lea.vmem [#allocation3], 385
    %v3652 = vld [vmem:[%s3651] ss:$2 sm:$0x7f]
    %s3653 = scalar_lea.vmem [#allocation3], 400
    %v3654 = vld [vmem:[%s3653] ss:$2 sm:$0x7f]
    %s3655 = scalar_lea.vmem [#allocation3], 401
    %v3656 = vld [vmem:[%s3655] ss:$2 sm:$0x7f]
    %v3657 = vmax.f32 %v3650, %v3652
    %v3658 = vmax.f32 %v3654, %v3656
    %v3659 = vmax.f32 %v3657, %v3658
    %3660 = vst.msk [vmem:[#allocation4 + $0x58] sm:$0x7f] %vm3527, %v3659
    %s3661 = scalar_lea.vmem [#allocation3], 416
    %v3662 = vld [vmem:[%s3661] ss:$2 sm:$0x7f]
    %s3663 = scalar_lea.vmem [#allocation3], 417
    %v3664 = vld [vmem:[%s3663] ss:$2 sm:$0x7f]
    %s3665 = scalar_lea.vmem [#allocation3], 432
    %v3666 = vld [vmem:[%s3665] ss:$2 sm:$0x7f]
    %s3667 = scalar_lea.vmem [#allocation3], 433
    %v3668 = vld [vmem:[%s3667] ss:$2 sm:$0x7f]
    %v3669 = vmax.f32 %v3662, %v3664
    %v3670 = vmax.f32 %v3666, %v3668
    %v3671 = vmax.f32 %v3669, %v3670
    %3672 = vst.msk [vmem:[#allocation4 + $0x60] sm:$0x7f] %vm3527, %v3671
    %s3673 = scalar_lea.vmem [#allocation3], 448
    %v3674 = vld [vmem:[%s3673] ss:$2 sm:$0x7f]
    %s3675 = scalar_lea.vmem [#allocation3], 449
    %v3676 = vld [vmem:[%s3675] ss:$2 sm:$0x7f]
    %s3677 = scalar_lea.vmem [#allocation3], 464
    %v3678 = vld [vmem:[%s3677] ss:$2 sm:$0x7f]
    %s3679 = scalar_lea.vmem [#allocation3], 465
    %v3680 = vld [vmem:[%s3679] ss:$2 sm:$0x7f]
    %v3681 = vmax.f32 %v3674, %v3676
    %v3682 = vmax.f32 %v3678, %v3680
    %v3683 = vmax.f32 %v3681, %v3682
    %3684 = vst.msk [vmem:[#allocation4 + $0x68] sm:$0x7f] %vm3527, %v3683
    %v3685 = vld [vmem:[#allocation4] sm:$0xff]
    %v3686 = vld [vmem:[#allocation4 + $0x8] sm:$0xff]
    %v3687 = vld [vmem:[#allocation4 + $0x10] sm:$0xff]
    %v3688 = vld [vmem:[#allocation4 + $0x18] sm:$0xff]
    %v3689 = vld [vmem:[#allocation4 + $0x20] sm:$0xff]
    %v3690 = vld [vmem:[#allocation4 + $0x28] sm:$0xff]
    %v3691 = vld [vmem:[#allocation4 + $0x30] sm:$0xff]
    %v3692 = vld [vmem:[#allocation4 + $0x38] sm:$0xff]
    %v3693 = vld [vmem:[#allocation4 + $0x40] sm:$0xff]
    %v3694 = vld [vmem:[#allocation4 + $0x48] sm:$0xff]
    %v3695 = vld [vmem:[#allocation4 + $0x50] sm:$0xff]
    %v3696 = vld [vmem:[#allocation4 + $0x58] sm:$0xff]
    %v3697 = vld [vmem:[#allocation4 + $0x60] sm:$0xff]
    %v3698 = vld [vmem:[#allocation4 + $0x68] sm:$0xff]
    %v3699 = vld [vmem:[#allocation4 + $0x70] sm:$0xff]
    %v3700 = vld [vmem:[#allocation4 + $0x78] sm:$0xff]
    %3701 = vst.msk [vmem:[#allocation5] sm:$0xff] %vm1578, %v3685
    %3702 = vst.msk [vmem:[#allocation5 + $0x8] sm:$0xff] %vm1578, %v3686
    %3703 = vst.msk [vmem:[#allocation5 + $0x10] sm:$0xff] %vm1578, %v3687
    %3704 = vst.msk [vmem:[#allocation5 + $0x18] sm:$0xff] %vm1578, %v3688
    %3705 = vst.msk [vmem:[#allocation5 + $0x20] sm:$0xff] %vm1578, %v3689
    %3706 = vst.msk [vmem:[#allocation5 + $0x28] sm:$0xff] %vm1578, %v3690
    %3707 = vst.msk [vmem:[#allocation5 + $0x30] sm:$0xff] %vm1578, %v3691
    %3708 = vst.msk [vmem:[#allocation5 + $0x38] sm:$0xff] %vm1578, %v3692
    %3709 = vst.msk [vmem:[#allocation5 + $0x40] sm:$0xff] %vm1578, %v3693
    %3710 = vst.msk [vmem:[#allocation5 + $0x48] sm:$0xff] %vm1578, %v3694
    %3711 = vst.msk [vmem:[#allocation5 + $0x50] sm:$0xff] %vm1578, %v3695
    %3712 = vst.msk [vmem:[#allocation5 + $0x58] sm:$0xff] %vm1578, %v3696
    %3713 = vst.msk [vmem:[#allocation5 + $0x60] sm:$0xff] %vm1578, %v3697
    %3714 = vst.msk [vmem:[#allocation5 + $0x68] sm:$0xff] %vm1578, %v3698
    %3715 = vst.msk [vmem:[#allocation5 + $0x70] sm:$0xff] %vm1578, %v3699
    %3716 = vst.msk [vmem:[#allocation5 + $0x78] sm:$0xff] %vm1578, %v3700
    %v3717 = vld [vmem:[#allocation4 + $0x1] sm:$0xff]
    %v3718 = vld [vmem:[#allocation4 + $0x9] sm:$0xff]
    %v3719 = vld [vmem:[#allocation4 + $0x11] sm:$0xff]
    %v3720 = vld [vmem:[#allocation4 + $0x19] sm:$0xff]
    %v3721 = vld [vmem:[#allocation4 + $0x21] sm:$0xff]
    %v3722 = vld [vmem:[#allocation4 + $0x29] sm:$0xff]
    %v3723 = vld [vmem:[#allocation4 + $0x31] sm:$0xff]
    %v3724 = vld [vmem:[#allocation4 + $0x39] sm:$0xff]
    %v3725 = vld [vmem:[#allocation4 + $0x41] sm:$0xff]
    %v3726 = vld [vmem:[#allocation4 + $0x49] sm:$0xff]
    %v3727 = vld [vmem:[#allocation4 + $0x51] sm:$0xff]
    %v3728 = vld [vmem:[#allocation4 + $0x59] sm:$0xff]
    %v3729 = vld [vmem:[#allocation4 + $0x61] sm:$0xff]
    %v3730 = vld [vmem:[#allocation4 + $0x69] sm:$0xff]
    %v3731 = vld [vmem:[#allocation4 + $0x71] sm:$0xff]
    %v3732 = vld [vmem:[#allocation4 + $0x79] sm:$0xff]
    %3749 = vrot.lane.b32.xlu0 %v3717, 8
    %v3750 = vpop.permute.xlu0 %3749
    %3751 = vrot.lane.b32.xlu0 %v3718, 8
    %v3752 = vpop.permute.xlu0 %3751
    %3753 = vrot.lane.b32.xlu0 %v3719, 8
    %v3754 = vpop.permute.xlu0 %3753
    %3755 = vrot.lane.b32.xlu0 %v3720, 8
    %v3756 = vpop.permute.xlu0 %3755
    %3757 = vrot.lane.b32.xlu0 %v3721, 8
    %v3758 = vpop.permute.xlu0 %3757
    %3759 = vrot.lane.b32.xlu0 %v3722, 8
    %v3760 = vpop.permute.xlu0 %3759
    %3761 = vrot.lane.b32.xlu0 %v3723, 8
    %v3762 = vpop.permute.xlu0 %3761
    %3763 = vrot.lane.b32.xlu0 %v3724, 8
    %v3764 = vpop.permute.xlu0 %3763
    %3765 = vrot.lane.b32.xlu0 %v3725, 8
    %v3766 = vpop.permute.xlu0 %3765
    %3767 = vrot.lane.b32.xlu0 %v3726, 8
    %v3768 = vpop.permute.xlu0 %3767
    %3769 = vrot.lane.b32.xlu0 %v3727, 8
    %v3770 = vpop.permute.xlu0 %3769
    %3771 = vrot.lane.b32.xlu0 %v3728, 8
    %v3772 = vpop.permute.xlu0 %3771
    %3773 = vrot.lane.b32.xlu0 %v3729, 8
    %v3774 = vpop.permute.xlu0 %3773
    %3775 = vrot.lane.b32.xlu0 %v3730, 8
    %v3776 = vpop.permute.xlu0 %3775
    %3777 = vrot.lane.b32.xlu0 %v3731, 8
    %v3778 = vpop.permute.xlu0 %3777
    %3779 = vrot.lane.b32.xlu0 %v3732, 8
    %v3780 = vpop.permute.xlu0 %3779
    %vm3797 = vcmask 130112
    %3798 = vst.msk [vmem:[#allocation5] sm:$0xff] %vm3797, %v3750
    %3799 = vst.msk [vmem:[#allocation5 + $0x8] sm:$0xff] %vm3797, %v3752
    %3800 = vst.msk [vmem:[#allocation5 + $0x10] sm:$0xff] %vm3797, %v3754
    %3801 = vst.msk [vmem:[#allocation5 + $0x18] sm:$0xff] %vm3797, %v3756
    %3802 = vst.msk [vmem:[#allocation5 + $0x20] sm:$0xff] %vm3797, %v3758
    %3803 = vst.msk [vmem:[#allocation5 + $0x28] sm:$0xff] %vm3797, %v3760
    %3804 = vst.msk [vmem:[#allocation5 + $0x30] sm:$0xff] %vm3797, %v3762
    %3805 = vst.msk [vmem:[#allocation5 + $0x38] sm:$0xff] %vm3797, %v3764
    %3806 = vst.msk [vmem:[#allocation5 + $0x40] sm:$0xff] %vm3797, %v3766
    %3807 = vst.msk [vmem:[#allocation5 + $0x48] sm:$0xff] %vm3797, %v3768
    %3808 = vst.msk [vmem:[#allocation5 + $0x50] sm:$0xff] %vm3797, %v3770
    %3809 = vst.msk [vmem:[#allocation5 + $0x58] sm:$0xff] %vm3797, %v3772
    %3810 = vst.msk [vmem:[#allocation5 + $0x60] sm:$0xff] %vm3797, %v3774
    %3811 = vst.msk [vmem:[#allocation5 + $0x68] sm:$0xff] %vm3797, %v3776
    %3812 = vst.msk [vmem:[#allocation5 + $0x70] sm:$0xff] %vm3797, %v3778
    %3813 = vst.msk [vmem:[#allocation5 + $0x78] sm:$0xff] %vm3797, %v3780
    %v3814 = vld [vmem:[#allocation4 + $0x2] sm:$0xff]
    %v3815 = vld [vmem:[#allocation4 + $0xa] sm:$0xff]
    %v3816 = vld [vmem:[#allocation4 + $0x12] sm:$0xff]
    %v3817 = vld [vmem:[#allocation4 + $0x1a] sm:$0xff]
    %v3818 = vld [vmem:[#allocation4 + $0x22] sm:$0xff]
    %v3819 = vld [vmem:[#allocation4 + $0x2a] sm:$0xff]
    %v3820 = vld [vmem:[#allocation4 + $0x32] sm:$0xff]
    %v3821 = vld [vmem:[#allocation4 + $0x3a] sm:$0xff]
    %v3822 = vld [vmem:[#allocation4 + $0x42] sm:$0xff]
    %v3823 = vld [vmem:[#allocation4 + $0x4a] sm:$0xff]
    %v3824 = vld [vmem:[#allocation4 + $0x52] sm:$0xff]
    %v3825 = vld [vmem:[#allocation4 + $0x5a] sm:$0xff]
    %v3826 = vld [vmem:[#allocation4 + $0x62] sm:$0xff]
    %v3827 = vld [vmem:[#allocation4 + $0x6a] sm:$0xff]
    %v3828 = vld [vmem:[#allocation4 + $0x72] sm:$0xff]
    %v3829 = vld [vmem:[#allocation4 + $0x7a] sm:$0xff]
    %3846 = vrot.lane.b32.xlu0 %v3814, 16
    %v3847 = vpop.permute.xlu0 %3846
    %3848 = vrot.lane.b32.xlu0 %v3815, 16
    %v3849 = vpop.permute.xlu0 %3848
    %3850 = vrot.lane.b32.xlu0 %v3816, 16
    %v3851 = vpop.permute.xlu0 %3850
    %3852 = vrot.lane.b32.xlu0 %v3817, 16
    %v3853 = vpop.permute.xlu0 %3852
    %3854 = vrot.lane.b32.xlu0 %v3818, 16
    %v3855 = vpop.permute.xlu0 %3854
    %3856 = vrot.lane.b32.xlu0 %v3819, 16
    %v3857 = vpop.permute.xlu0 %3856
    %3858 = vrot.lane.b32.xlu0 %v3820, 16
    %v3859 = vpop.permute.xlu0 %3858
    %3860 = vrot.lane.b32.xlu0 %v3821, 16
    %v3861 = vpop.permute.xlu0 %3860
    %3862 = vrot.lane.b32.xlu0 %v3822, 16
    %v3863 = vpop.permute.xlu0 %3862
    %3864 = vrot.lane.b32.xlu0 %v3823, 16
    %v3865 = vpop.permute.xlu0 %3864
    %3866 = vrot.lane.b32.xlu0 %v3824, 16
    %v3867 = vpop.permute.xlu0 %3866
    %3868 = vrot.lane.b32.xlu0 %v3825, 16
    %v3869 = vpop.permute.xlu0 %3868
    %3870 = vrot.lane.b32.xlu0 %v3826, 16
    %v3871 = vpop.permute.xlu0 %3870
    %3872 = vrot.lane.b32.xlu0 %v3827, 16
    %v3873 = vpop.permute.xlu0 %3872
    %3874 = vrot.lane.b32.xlu0 %v3828, 16
    %v3875 = vpop.permute.xlu0 %3874
    %3876 = vrot.lane.b32.xlu0 %v3829, 16
    %v3877 = vpop.permute.xlu0 %3876
    %vm3894 = vcmask 195712
    %3895 = vst.msk [vmem:[#allocation5] sm:$0xff] %vm3894, %v3847
    %3896 = vst.msk [vmem:[#allocation5 + $0x8] sm:$0xff] %vm3894, %v3849
    %3897 = vst.msk [vmem:[#allocation5 + $0x10] sm:$0xff] %vm3894, %v3851
    %3898 = vst.msk [vmem:[#allocation5 + $0x18] sm:$0xff] %vm3894, %v3853
    %3899 = vst.msk [vmem:[#allocation5 + $0x20] sm:$0xff] %vm3894, %v3855
    %3900 = vst.msk [vmem:[#allocation5 + $0x28] sm:$0xff] %vm3894, %v3857
    %3901 = vst.msk [vmem:[#allocation5 + $0x30] sm:$0xff] %vm3894, %v3859
    %3902 = vst.msk [vmem:[#allocation5 + $0x38] sm:$0xff] %vm3894, %v3861
    %3903 = vst.msk [vmem:[#allocation5 + $0x40] sm:$0xff] %vm3894, %v3863
    %3904 = vst.msk [vmem:[#allocation5 + $0x48] sm:$0xff] %vm3894, %v3865
    %3905 = vst.msk [vmem:[#allocation5 + $0x50] sm:$0xff] %vm3894, %v3867
    %3906 = vst.msk [vmem:[#allocation5 + $0x58] sm:$0xff] %vm3894, %v3869
    %3907 = vst.msk [vmem:[#allocation5 + $0x60] sm:$0xff] %vm3894, %v3871
    %3908 = vst.msk [vmem:[#allocation5 + $0x68] sm:$0xff] %vm3894, %v3873
    %3909 = vst.msk [vmem:[#allocation5 + $0x70] sm:$0xff] %vm3894, %v3875
    %3910 = vst.msk [vmem:[#allocation5 + $0x78] sm:$0xff] %vm3894, %v3877
    %v3911 = vld [vmem:[%s3] sm:$0xff]
    %v3912 = vld [vmem:[%s3 + $0x8] sm:$0xff]
    %v3913 = vld [vmem:[%s3 + $0x10] sm:$0xff]
    %s3914 = scalar_lea.vmem %s3, 24
    %v3915 = vld [vmem:[%s3914] sm:$0xff]
    %v3916 = vld [vmem:[%s3914 + $0x8] sm:$0xff]
    %v3917 = vld [vmem:[%s3914 + $0x10] sm:$0xff]
    %s3918 = scalar_lea.vmem %s3, 48
    %v3919 = vld [vmem:[%s3918] sm:$0xff]
    %v3920 = vld [vmem:[%s3918 + $0x8] sm:$0xff]
    %v3921 = vld [vmem:[%s3918 + $0x10] sm:$0xff]
    %v3922 = vld [vmem:[#allocation5] sm:$0xff]
    %v3923 = vld [vmem:[#allocation5 + $0x8] sm:$0xff]
    %v3924 = vld [vmem:[#allocation5 + $0x10] sm:$0xff]
    %v3925 = vld [vmem:[#allocation5 + $0x18] sm:$0xff]
    %v3926 = vld [vmem:[#allocation5 + $0x20] sm:$0xff]
    %v3927 = vld [vmem:[#allocation5 + $0x28] sm:$0xff]
    %v3928 = vld [vmem:[#allocation5 + $0x30] sm:$0xff]
    %v3929 = vld [vmem:[#allocation5 + $0x38] sm:$0xff]
    %v3930 = vld [vmem:[#allocation5 + $0x40] sm:$0xff]
    %v3931 = vld [vmem:[#allocation5 + $0x48] sm:$0xff]
    %v3932 = vld [vmem:[#allocation5 + $0x50] sm:$0xff]
    %v3933 = vld [vmem:[#allocation5 + $0x58] sm:$0xff]
    %v3934 = vld [vmem:[#allocation5 + $0x60] sm:$0xff]
    %v3935 = vld [vmem:[#allocation5 + $0x68] sm:$0xff]
    %v3936 = vld [vmem:[#allocation5 + $0x70] sm:$0xff]
    %vm3937 = vcmask 195584
    %v3939 = vsel %vm3937, %v3923, 0
    %v3942 = vsel %vm3937, %v3924, 0
    %v3945 = vsel %vm3937, %v3925, 0
    %v3948 = vsel %vm3937, %v3926, 0
    %v3951 = vsel %vm3937, %v3927, 0
    %v3954 = vsel %vm3937, %v3928, 0
    %v3957 = vsel %vm3937, %v3929, 0
    %v3960 = vsel %vm3937, %v3930, 0
    %v3963 = vsel %vm3937, %v3931, 0
    %v3966 = vsel %vm3937, %v3932, 0
    %v3969 = vsel %vm3937, %v3933, 0
    %v3972 = vsel %vm3937, %v3934, 0
    %v3975 = vsel %vm3937, %v3935, 0
    %v3978 = vsel %vm3937, %v3936, 0
    %3980 = vmatprep.subr.mxu0 0.0
    %3981 = vmatpush1.msra.mxu0 %v3915
    %3982 = vmatprep.subr.mxu0 0.0
    %3983 = vmatpush1.msra.mxu0 %v3916
    %3984 = vmatprep.subr.mxu0 0.0
    %3985 = vmatpush1.msra.mxu0 %v3917
    %3986 = vmatprep.subr.mxu0 0.0
    %3987 = vmatpush1.msra.mxu0 0.0
    %3988 = vmatprep.subr.mxu0 0.0
    %3989 = vmatpush1.msra.mxu0 0.0
    %3990 = vmatprep.subr.mxu0 0.0
    %3991 = vmatpush1.msra.mxu0 0.0
    %3992 = vmatprep.subr.mxu0 0.0
    %3993 = vmatpush1.msra.mxu0 0.0
    %3994 = vmatprep.subr.mxu0 0.0
    %3995 = vmatpush1.msra.mxu0 0.0
    %3996 = vmatprep.subr.mxu0 0.0
    %3997 = vmatpush1.msra.mxu0 0.0
    %3998 = vmatprep.subr.mxu0 0.0
    %3999 = vmatpush1.msra.mxu0 0.0
    %4000 = vmatprep.subr.mxu0 0.0
    %4001 = vmatpush1.msra.mxu0 0.0
    %4002 = vmatprep.subr.mxu0 0.0
    %4003 = vmatpush1.msra.mxu0 0.0
    %4004 = vmatprep.subr.mxu0 0.0
    %4005 = vmatpush1.msra.mxu0 0.0
    %4006 = vmatprep.subr.mxu0 0.0
    %4007 = vmatpush1.msra.mxu0 0.0
    %4008 = vmatprep.subr.mxu0 0.0
    %4009 = vmatpush1.msra.mxu0 0.0
    %4010 = vmatprep.subr.mxu0 0.0
    %4011 = vmatpush1.msra.mxu0 0.0
    %4012 = vmatprep.subr.mxu0 0.0
    %4013 = vmatpush1.msra.mxu0 0.0
    %4014 = vmatprep.subr.mxu0 0.0
    %4015 = vmatpush1.msra.mxu0 0.0
    %4016 = vmatprep.subr.mxu0 0.0
    %4017 = vmatpush1.msra.mxu0 0.0
    %4018 = vmatprep.subr.mxu0 0.0
    %4019 = vmatpush1.msra.mxu0 0.0
    %4020 = vmatprep.subr.mxu0 0.0
    %4021 = vmatpush1.msra.mxu0 0.0
    %4022 = vmatprep.subr.mxu0 0.0
    %4023 = vmatpush1.msra.mxu0 0.0
    %4024 = vmatprep.subr.mxu0 0.0
    %4025 = vmatpush1.msra.mxu0 0.0
    %4026 = vmatprep.subr.mxu0 0.0
    %4027 = vmatpush1.msra.mxu0 0.0
    %4028 = vmatprep.subr.mxu0 0.0
    %4029 = vmatpush1.msra.mxu0 0.0
    %4030 = vmatprep.subr.mxu0 0.0
    %4031 = vmatpush1.msra.mxu0 0.0
    %4032 = vmatprep.subr.mxu0 0.0
    %4033 = vmatpush1.msra.mxu0 0.0
    %4034 = vmatprep.subr.mxu0 0.0
    %4035 = vmatpush1.msra.mxu0 0.0
    %4036 = vmatprep.subr.mxu0 0.0
    %4037 = vmatpush1.msra.mxu0 0.0
    %4038 = vmatprep.subr.mxu0 0.0
    %4039 = vmatpush1.msra.mxu0 0.0
    %4040 = vmatprep.subr.mxu0 0.0
    %4041 = vmatpush1.msra.mxu0 0.0
    %4042 = vmatprep.subr.mxu0 0.0
    %4043 = vmatpush1.msra.mxu0 0.0
    %4044 = vmatprep.mubr.f32.mxu0 0.0
    %4045 = vmatmul.mubr.f32.gmra.mrb[0].mxu0 %v3939
    %v4046 = vpop.f32.mrb[0].mxu0
    %v4047 = vadd.f32 0.0, %v4046
    %v4048 = vpop.f32.mrb[0].mxu0
    %4049 = vmatprep.mubr.f32.mxu0 0.0
    %4050 = vmatmul.mubr.f32.gmra.mrb[0].mxu0 %v3942
    %v4051 = vpop.f32.mrb[0].mxu0
    %v4052 = vadd.f32 0.0, %v4051
    %v4053 = vpop.f32.mrb[0].mxu0
    %4054 = vmatprep.mubr.f32.mxu0 0.0
    %4055 = vmatmul.mubr.f32.gmra.mrb[0].mxu0 %v3945
    %v4056 = vpop.f32.mrb[0].mxu0
    %v4057 = vadd.f32 0.0, %v4056
    %v4058 = vpop.f32.mrb[0].mxu0
    %4059 = vmatprep.mubr.f32.mxu0 0.0
    %4060 = vmatmul.mubr.f32.gmra.mrb[0].mxu0 %v3948
    %v4061 = vpop.f32.mrb[0].mxu0
    %v4062 = vadd.f32 0.0, %v4061
    %v4063 = vpop.f32.mrb[0].mxu0
    %4064 = vmatprep.mubr.f32.mxu0 0.0
    %4065 = vmatmul.mubr.f32.gmra.mrb[0].mxu0 %v3951
    %v4066 = vpop.f32.mrb[0].mxu0
    %v4067 = vadd.f32 0.0, %v4066
    %v4068 = vpop.f32.mrb[0].mxu0
    %4069 = vmatprep.mubr.f32.mxu0 0.0
    %4070 = vmatmul.mubr.f32.gmra.mrb[0].mxu0 %v3954
    %v4071 = vpop.f32.mrb[0].mxu0
    %v4072 = vadd.f32 0.0, %v4071
    %v4073 = vpop.f32.mrb[0].mxu0
    %4074 = vmatprep.mubr.f32.mxu0 0.0
    %4075 = vmatmul.mubr.f32.gmra.mrb[0].mxu0 %v3957
    %v4076 = vpop.f32.mrb[0].mxu0
    %v4077 = vadd.f32 0.0, %v4076
    %v4078 = vpop.f32.mrb[0].mxu0
    %4079 = vmatprep.mubr.f32.mxu0 0.0
    %4080 = vmatmul.mubr.f32.gmra.mrb[0].mxu0 %v3960
    %v4081 = vpop.f32.mrb[0].mxu0
    %v4082 = vadd.f32 0.0, %v4081
    %v4083 = vpop.f32.mrb[0].mxu0
    %4084 = vmatprep.mubr.f32.mxu0 0.0
    %4085 = vmatmul.mubr.f32.gmra.mrb[0].mxu0 %v3963
    %v4086 = vpop.f32.mrb[0].mxu0
    %v4087 = vadd.f32 0.0, %v4086
    %v4088 = vpop.f32.mrb[0].mxu0
    %4089 = vmatprep.mubr.f32.mxu0 0.0
    %4090 = vmatmul.mubr.f32.gmra.mrb[0].mxu0 %v3966
    %v4091 = vpop.f32.mrb[0].mxu0
    %v4092 = vadd.f32 0.0, %v4091
    %v4093 = vpop.f32.mrb[0].mxu0
    %4094 = vmatprep.mubr.f32.mxu0 0.0
    %4095 = vmatmul.mubr.f32.gmra.mrb[0].mxu0 %v3969
    %v4096 = vpop.f32.mrb[0].mxu0
    %v4097 = vadd.f32 0.0, %v4096
    %v4098 = vpop.f32.mrb[0].mxu0
    %4099 = vmatprep.mubr.f32.mxu0 0.0
    %4100 = vmatmul.mubr.f32.gmra.mrb[0].mxu0 %v3972
    %v4101 = vpop.f32.mrb[0].mxu0
    %v4102 = vadd.f32 0.0, %v4101
    %v4103 = vpop.f32.mrb[0].mxu0
    %4104 = vmatprep.mubr.f32.mxu0 0.0
    %4105 = vmatmul.mubr.f32.gmra.mrb[0].mxu0 %v3975
    %v4106 = vpop.f32.mrb[0].mxu0
    %v4107 = vadd.f32 0.0, %v4106
    %v4108 = vpop.f32.mrb[0].mxu0
    %4109 = vmatprep.mubr.f32.mxu0 0.0
    %4110 = vmatmul.mubr.f32.gmra.mrb[0].mxu0 %v3978
    %v4111 = vpop.f32.mrb[0].mxu0
    %v4112 = vadd.f32 0.0, %v4111
    %v4113 = vpop.f32.mrb[0].mxu0
    %4114 = vdwg.mxu0
    %v4116 = vsel %vm3937, %v3922, 0
    %4118 = vmatprep.subr.mxu0 0.0
    %4119 = vmatpush1.msra.mxu0 %v3911
    %4120 = vmatprep.subr.mxu0 0.0
    %4121 = vmatpush1.msra.mxu0 %v3912
    %4122 = vmatprep.subr.mxu0 0.0
    %4123 = vmatpush1.msra.mxu0 %v3913
    %4124 = vmatprep.subr.mxu0 0.0
    %4125 = vmatpush1.msra.mxu0 0.0
    %4126 = vmatprep.subr.mxu0 0.0
    %4127 = vmatpush1.msra.mxu0 0.0
    %4128 = vmatprep.subr.mxu0 0.0
    %4129 = vmatpush1.msra.mxu0 0.0
    %4130 = vmatprep.subr.mxu0 0.0
    %4131 = vmatpush1.msra.mxu0 0.0
    %4132 = vmatprep.subr.mxu0 0.0
    %4133 = vmatpush1.msra.mxu0 0.0
    %4134 = vmatprep.subr.mxu0 0.0
    %4135 = vmatpush1.msra.mxu0 0.0
    %4136 = vmatprep.subr.mxu0 0.0
    %4137 = vmatpush1.msra.mxu0 0.0
    %4138 = vmatprep.subr.mxu0 0.0
    %4139 = vmatpush1.msra.mxu0 0.0
    %4140 = vmatprep.subr.mxu0 0.0
    %4141 = vmatpush1.msra.mxu0 0.0
    %4142 = vmatprep.subr.mxu0 0.0
    %4143 = vmatpush1.msra.mxu0 0.0
    %4144 = vmatprep.subr.mxu0 0.0
    %4145 = vmatpush1.msra.mxu0 0.0
    %4146 = vmatprep.subr.mxu0 0.0
    %4147 = vmatpush1.msra.mxu0 0.0
    %4148 = vmatprep.subr.mxu0 0.0
    %4149 = vmatpush1.msra.mxu0 0.0
    %4150 = vmatprep.subr.mxu0 0.0
    %4151 = vmatpush1.msra.mxu0 0.0
    %4152 = vmatprep.subr.mxu0 0.0
    %4153 = vmatpush1.msra.mxu0 0.0
    %4154 = vmatprep.subr.mxu0 0.0
    %4155 = vmatpush1.msra.mxu0 0.0
    %4156 = vmatprep.subr.mxu0 0.0
    %4157 = vmatpush1.msra.mxu0 0.0
    %4158 = vmatprep.subr.mxu0 0.0
    %4159 = vmatpush1.msra.mxu0 0.0
    %4160 = vmatprep.subr.mxu0 0.0
    %4161 = vmatpush1.msra.mxu0 0.0
    %4162 = vmatprep.subr.mxu0 0.0
    %4163 = vmatpush1.msra.mxu0 0.0
    %4164 = vmatprep.subr.mxu0 0.0
    %4165 = vmatpush1.msra.mxu0 0.0
    %4166 = vmatprep.subr.mxu0 0.0
    %4167 = vmatpush1.msra.mxu0 0.0
    %4168 = vmatprep.subr.mxu0 0.0
    %4169 = vmatpush1.msra.mxu0 0.0
    %4170 = vmatprep.subr.mxu0 0.0
    %4171 = vmatpush1.msra.mxu0 0.0
    %4172 = vmatprep.subr.mxu0 0.0
    %4173 = vmatpush1.msra.mxu0 0.0
    %4174 = vmatprep.subr.mxu0 0.0
    %4175 = vmatpush1.msra.mxu0 0.0
    %4176 = vmatprep.subr.mxu0 0.0
    %4177 = vmatpush1.msra.mxu0 0.0
    %4178 = vmatprep.subr.mxu0 0.0
    %4179 = vmatpush1.msra.mxu0 0.0
    %4180 = vmatprep.subr.mxu0 0.0
    %4181 = vmatpush1.msra.mxu0 0.0
    %4182 = vmatprep.mubr.f32.mxu0 0.0
    %4183 = vmatmul.mubr.f32.gmra.mrb[0].mxu0 %v4116
    %v4184 = vpop.f32.mrb[0].mxu0
    %v4185 = vadd.f32 %v4047, %v4184
    %v4186 = vpop.f32.mrb[0].mxu0
    %4187 = vmatprep.mubr.f32.mxu0 0.0
    %4188 = vmatmul.mubr.f32.gmra.mrb[0].mxu0 %v3939
    %v4189 = vpop.f32.mrb[0].mxu0
    %v4190 = vadd.f32 %v4052, %v4189
    %v4191 = vpop.f32.mrb[0].mxu0
    %4192 = vmatprep.mubr.f32.mxu0 0.0
    %4193 = vmatmul.mubr.f32.gmra.mrb[0].mxu0 %v3942
    %v4194 = vpop.f32.mrb[0].mxu0
    %v4195 = vadd.f32 %v4057, %v4194
    %v4196 = vpop.f32.mrb[0].mxu0
    %4197 = vmatprep.mubr.f32.mxu0 0.0
    %4198 = vmatmul.mubr.f32.gmra.mrb[0].mxu0 %v3945
    %v4199 = vpop.f32.mrb[0].mxu0
    %v4200 = vadd.f32 %v4062, %v4199
    %v4201 = vpop.f32.mrb[0].mxu0
    %4202 = vmatprep.mubr.f32.mxu0 0.0
    %4203 = vmatmul.mubr.f32.gmra.mrb[0].mxu0 %v3948
    %v4204 = vpop.f32.mrb[0].mxu0
    %v4205 = vadd.f32 %v4067, %v4204
    %v4206 = vpop.f32.mrb[0].mxu0
    %4207 = vmatprep.mubr.f32.mxu0 0.0
    %4208 = vmatmul.mubr.f32.gmra.mrb[0].mxu0 %v3951
    %v4209 = vpop.f32.mrb[0].mxu0
    %v4210 = vadd.f32 %v4072, %v4209
    %v4211 = vpop.f32.mrb[0].mxu0
    %4212 = vmatprep.mubr.f32.mxu0 0.0
    %4213 = vmatmul.mubr.f32.gmra.mrb[0].mxu0 %v3954
    %v4214 = vpop.f32.mrb[0].mxu0
    %v4215 = vadd.f32 %v4077, %v4214
    %v4216 = vpop.f32.mrb[0].mxu0
    %4217 = vmatprep.mubr.f32.mxu0 0.0
    %4218 = vmatmul.mubr.f32.gmra.mrb[0].mxu0 %v3957
    %v4219 = vpop.f32.mrb[0].mxu0
    %v4220 = vadd.f32 %v4082, %v4219
    %v4221 = vpop.f32.mrb[0].mxu0
    %4222 = vmatprep.mubr.f32.mxu0 0.0
    %4223 = vmatmul.mubr.f32.gmra.mrb[0].mxu0 %v3960
    %v4224 = vpop.f32.mrb[0].mxu0
    %v4225 = vadd.f32 %v4087, %v4224
    %v4226 = vpop.f32.mrb[0].mxu0
    %4227 = vmatprep.mubr.f32.mxu0 0.0
    %4228 = vmatmul.mubr.f32.gmra.mrb[0].mxu0 %v3963
    %v4229 = vpop.f32.mrb[0].mxu0
    %v4230 = vadd.f32 %v4092, %v4229
    %v4231 = vpop.f32.mrb[0].mxu0
    %4232 = vmatprep.mubr.f32.mxu0 0.0
    %4233 = vmatmul.mubr.f32.gmra.mrb[0].mxu0 %v3966
    %v4234 = vpop.f32.mrb[0].mxu0
    %v4235 = vadd.f32 %v4097, %v4234
    %v4236 = vpop.f32.mrb[0].mxu0
    %4237 = vmatprep.mubr.f32.mxu0 0.0
    %4238 = vmatmul.mubr.f32.gmra.mrb[0].mxu0 %v3969
    %v4239 = vpop.f32.mrb[0].mxu0
    %v4240 = vadd.f32 %v4102, %v4239
    %v4241 = vpop.f32.mrb[0].mxu0
    %4242 = vmatprep.mubr.f32.mxu0 0.0
    %4243 = vmatmul.mubr.f32.gmra.mrb[0].mxu0 %v3972
    %v4244 = vpop.f32.mrb[0].mxu0
    %v4245 = vadd.f32 %v4107, %v4244
    %v4246 = vpop.f32.mrb[0].mxu0
    %4247 = vmatprep.mubr.f32.mxu0 0.0
    %4248 = vmatmul.mubr.f32.gmra.mrb[0].mxu0 %v3975
    %v4249 = vpop.f32.mrb[0].mxu0
    %v4250 = vadd.f32 %v4112, %v4249
    %v4251 = vpop.f32.mrb[0].mxu0
    %4252 = vdwg.mxu0
    %v4253 = vld [vmem:[#allocation5 + $0x10] sm:$0xff]
    %v4254 = vld [vmem:[#allocation5 + $0x18] sm:$0xff]
    %v4255 = vld [vmem:[#allocation5 + $0x20] sm:$0xff]
    %v4256 = vld [vmem:[#allocation5 + $0x28] sm:$0xff]
    %v4257 = vld [vmem:[#allocation5 + $0x30] sm:$0xff]
    %v4258 = vld [vmem:[#allocation5 + $0x38] sm:$0xff]
    %v4259 = vld [vmem:[#allocation5 + $0x40] sm:$0xff]
    %v4260 = vld [vmem:[#allocation5 + $0x48] sm:$0xff]
    %v4261 = vld [vmem:[#allocation5 + $0x50] sm:$0xff]
    %v4262 = vld [vmem:[#allocation5 + $0x58] sm:$0xff]
    %v4263 = vld [vmem:[#allocation5 + $0x60] sm:$0xff]
    %v4264 = vld [vmem:[#allocation5 + $0x68] sm:$0xff]
    %v4265 = vld [vmem:[#allocation5 + $0x70] sm:$0xff]
    %v4266 = vld [vmem:[#allocation5 + $0x78] sm:$0xff]
    %v4268 = vsel %vm3937, %v4253, 0
    %v4271 = vsel %vm3937, %v4254, 0
    %v4274 = vsel %vm3937, %v4255, 0
    %v4277 = vsel %vm3937, %v4256, 0
    %v4280 = vsel %vm3937, %v4257, 0
    %v4283 = vsel %vm3937, %v4258, 0
    %v4286 = vsel %vm3937, %v4259, 0
    %v4289 = vsel %vm3937, %v4260, 0
    %v4292 = vsel %vm3937, %v4261, 0
    %v4295 = vsel %vm3937, %v4262, 0
    %v4298 = vsel %vm3937, %v4263, 0
    %v4301 = vsel %vm3937, %v4264, 0
    %v4304 = vsel %vm3937, %v4265, 0
    %v4307 = vsel %vm3937, %v4266, 0
    %4309 = vmatprep.subr.mxu0 0.0
    %4310 = vmatpush1.msra.mxu0 %v3919
    %4311 = vmatprep.subr.mxu0 0.0
    %4312 = vmatpush1.msra.mxu0 %v3920
    %4313 = vmatprep.subr.mxu0 0.0
    %4314 = vmatpush1.msra.mxu0 %v3921
    %4315 = vmatprep.subr.mxu0 0.0
    %4316 = vmatpush1.msra.mxu0 0.0
    %4317 = vmatprep.subr.mxu0 0.0
    %4318 = vmatpush1.msra.mxu0 0.0
    %4319 = vmatprep.subr.mxu0 0.0
    %4320 = vmatpush1.msra.mxu0 0.0
    %4321 = vmatprep.subr.mxu0 0.0
    %4322 = vmatpush1.msra.mxu0 0.0
    %4323 = vmatprep.subr.mxu0 0.0
    %4324 = vmatpush1.msra.mxu0 0.0
    %4325 = vmatprep.subr.mxu0 0.0
    %4326 = vmatpush1.msra.mxu0 0.0
    %4327 = vmatprep.subr.mxu0 0.0
    %4328 = vmatpush1.msra.mxu0 0.0
    %4329 = vmatprep.subr.mxu0 0.0
    %4330 = vmatpush1.msra.mxu0 0.0
    %4331 = vmatprep.subr.mxu0 0.0
    %4332 = vmatpush1.msra.mxu0 0.0
    %4333 = vmatprep.subr.mxu0 0.0
    %4334 = vmatpush1.msra.mxu0 0.0
    %4335 = vmatprep.subr.mxu0 0.0
    %4336 = vmatpush1.msra.mxu0 0.0
    %4337 = vmatprep.subr.mxu0 0.0
    %4338 = vmatpush1.msra.mxu0 0.0
    %4339 = vmatprep.subr.mxu0 0.0
    %4340 = vmatpush1.msra.mxu0 0.0
    %4341 = vmatprep.subr.mxu0 0.0
    %4342 = vmatpush1.msra.mxu0 0.0
    %4343 = vmatprep.subr.mxu0 0.0
    %4344 = vmatpush1.msra.mxu0 0.0
    %4345 = vmatprep.subr.mxu0 0.0
    %4346 = vmatpush1.msra.mxu0 0.0
    %4347 = vmatprep.subr.mxu0 0.0
    %4348 = vmatpush1.msra.mxu0 0.0
    %4349 = vmatprep.subr.mxu0 0.0
    %4350 = vmatpush1.msra.mxu0 0.0
    %4351 = vmatprep.subr.mxu0 0.0
    %4352 = vmatpush1.msra.mxu0 0.0
    %4353 = vmatprep.subr.mxu0 0.0
    %4354 = vmatpush1.msra.mxu0 0.0
    %4355 = vmatprep.subr.mxu0 0.0
    %4356 = vmatpush1.msra.mxu0 0.0
    %4357 = vmatprep.subr.mxu0 0.0
    %4358 = vmatpush1.msra.mxu0 0.0
    %4359 = vmatprep.subr.mxu0 0.0
    %4360 = vmatpush1.msra.mxu0 0.0
    %4361 = vmatprep.subr.mxu0 0.0
    %4362 = vmatpush1.msra.mxu0 0.0
    %4363 = vmatprep.subr.mxu0 0.0
    %4364 = vmatpush1.msra.mxu0 0.0
    %4365 = vmatprep.subr.mxu0 0.0
    %4366 = vmatpush1.msra.mxu0 0.0
    %4367 = vmatprep.subr.mxu0 0.0
    %4368 = vmatpush1.msra.mxu0 0.0
    %4369 = vmatprep.subr.mxu0 0.0
    %4370 = vmatpush1.msra.mxu0 0.0
    %4371 = vmatprep.subr.mxu0 0.0
    %4372 = vmatpush1.msra.mxu0 0.0
    %4373 = vmatprep.mubr.f32.mxu0 0.0
    %4374 = vmatmul.mubr.f32.gmra.mrb[0].mxu0 %v4268
    %v4375 = vpop.f32.mrb[0].mxu0
    %v4376 = vadd.f32 0.0, %v4375
    %v4377 = vpop.f32.mrb[0].mxu0
    %4378 = vmatprep.mubr.f32.mxu0 0.0
    %4379 = vmatmul.mubr.f32.gmra.mrb[0].mxu0 %v4271
    %v4380 = vpop.f32.mrb[0].mxu0
    %v4381 = vadd.f32 0.0, %v4380
    %v4382 = vpop.f32.mrb[0].mxu0
    %4383 = vmatprep.mubr.f32.mxu0 0.0
    %4384 = vmatmul.mubr.f32.gmra.mrb[0].mxu0 %v4274
    %v4385 = vpop.f32.mrb[0].mxu0
    %v4386 = vadd.f32 0.0, %v4385
    %v4387 = vpop.f32.mrb[0].mxu0
    %4388 = vmatprep.mubr.f32.mxu0 0.0
    %4389 = vmatmul.mubr.f32.gmra.mrb[0].mxu0 %v4277
    %v4390 = vpop.f32.mrb[0].mxu0
    %v4391 = vadd.f32 0.0, %v4390
    %v4392 = vpop.f32.mrb[0].mxu0
    %4393 = vmatprep.mubr.f32.mxu0 0.0
    %4394 = vmatmul.mubr.f32.gmra.mrb[0].mxu0 %v4280
    %v4395 = vpop.f32.mrb[0].mxu0
    %v4396 = vadd.f32 0.0, %v4395
    %v4397 = vpop.f32.mrb[0].mxu0
    %4398 = vmatprep.mubr.f32.mxu0 0.0
    %4399 = vmatmul.mubr.f32.gmra.mrb[0].mxu0 %v4283
    %v4400 = vpop.f32.mrb[0].mxu0
    %v4401 = vadd.f32 0.0, %v4400
    %v4402 = vpop.f32.mrb[0].mxu0
    %4403 = vmatprep.mubr.f32.mxu0 0.0
    %4404 = vmatmul.mubr.f32.gmra.mrb[0].mxu0 %v4286
    %v4405 = vpop.f32.mrb[0].mxu0
    %v4406 = vadd.f32 0.0, %v4405
    %v4407 = vpop.f32.mrb[0].mxu0
    %4408 = vmatprep.mubr.f32.mxu0 0.0
    %4409 = vmatmul.mubr.f32.gmra.mrb[0].mxu0 %v4289
    %v4410 = vpop.f32.mrb[0].mxu0
    %v4411 = vadd.f32 0.0, %v4410
    %v4412 = vpop.f32.mrb[0].mxu0
    %4413 = vmatprep.mubr.f32.mxu0 0.0
    %4414 = vmatmul.mubr.f32.gmra.mrb[0].mxu0 %v4292
    %v4415 = vpop.f32.mrb[0].mxu0
    %v4416 = vadd.f32 0.0, %v4415
    %v4417 = vpop.f32.mrb[0].mxu0
    %4418 = vmatprep.mubr.f32.mxu0 0.0
    %4419 = vmatmul.mubr.f32.gmra.mrb[0].mxu0 %v4295
    %v4420 = vpop.f32.mrb[0].mxu0
    %v4421 = vadd.f32 0.0, %v4420
    %v4422 = vpop.f32.mrb[0].mxu0
    %4423 = vmatprep.mubr.f32.mxu0 0.0
    %4424 = vmatmul.mubr.f32.gmra.mrb[0].mxu0 %v4298
    %v4425 = vpop.f32.mrb[0].mxu0
    %v4426 = vadd.f32 0.0, %v4425
    %v4427 = vpop.f32.mrb[0].mxu0
    %4428 = vmatprep.mubr.f32.mxu0 0.0
    %4429 = vmatmul.mubr.f32.gmra.mrb[0].mxu0 %v4301
    %v4430 = vpop.f32.mrb[0].mxu0
    %v4431 = vadd.f32 0.0, %v4430
    %v4432 = vpop.f32.mrb[0].mxu0
    %4433 = vmatprep.mubr.f32.mxu0 0.0
    %4434 = vmatmul.mubr.f32.gmra.mrb[0].mxu0 %v4304
    %v4435 = vpop.f32.mrb[0].mxu0
    %v4436 = vadd.f32 0.0, %v4435
    %v4437 = vpop.f32.mrb[0].mxu0
    %4438 = vmatprep.mubr.f32.mxu0 0.0
    %4439 = vmatmul.mubr.f32.gmra.mrb[0].mxu0 %v4307
    %v4440 = vpop.f32.mrb[0].mxu0
    %v4441 = vadd.f32 0.0, %v4440
    %v4442 = vpop.f32.mrb[0].mxu0
    %4443 = vdwg.mxu0
    %v4444 = vadd.f32 %v4185, %v4376
    %v4445 = vadd.f32 %v4190, %v4381
    %v4446 = vadd.f32 %v4195, %v4386
    %v4447 = vadd.f32 %v4200, %v4391
    %v4448 = vadd.f32 %v4205, %v4396
    %v4449 = vadd.f32 %v4210, %v4401
    %v4450 = vadd.f32 %v4215, %v4406
    %v4451 = vadd.f32 %v4220, %v4411
    %v4452 = vadd.f32 %v4225, %v4416
    %v4453 = vadd.f32 %v4230, %v4421
    %v4454 = vadd.f32 %v4235, %v4426
    %v4455 = vadd.f32 %v4240, %v4431
    %v4456 = vadd.f32 %v4245, %v4436
    %v4457 = vadd.f32 %v4250, %v4441
    %v4458 = vld [vmem:[%s4] sm:$0x1]
    %v4460 = vlaneseq
    %v4461 = vshrl.u32 %v4460, 7
    %v4462 = vsub.s32 0, %v4461
    %v4463 = vrot.slane %v4458, %v4462
    %v4465 = vadd.f32 %v4444, %v4463
    %v4466 = vadd.f32 %v4445, %v4463
    %v4467 = vadd.f32 %v4446, %v4463
    %v4468 = vadd.f32 %v4447, %v4463
    %v4469 = vadd.f32 %v4448, %v4463
    %v4470 = vadd.f32 %v4449, %v4463
    %v4471 = vadd.f32 %v4450, %v4463
    %v4472 = vadd.f32 %v4451, %v4463
    %v4473 = vadd.f32 %v4452, %v4463
    %v4474 = vadd.f32 %v4453, %v4463
    %v4475 = vadd.f32 %v4454, %v4463
    %v4476 = vadd.f32 %v4455, %v4463
    %v4477 = vadd.f32 %v4456, %v4463
    %v4478 = vadd.f32 %v4457, %v4463
    %v4479 = vmax.f32 %v4465, 0.0
    %v4480 = vmax.f32 %v4466, 0.0
    %v4481 = vmax.f32 %v4467, 0.0
    %v4482 = vmax.f32 %v4468, 0.0
    %v4483 = vmax.f32 %v4469, 0.0
    %v4484 = vmax.f32 %v4470, 0.0
    %v4485 = vmax.f32 %v4471, 0.0
    %v4486 = vmax.f32 %v4472, 0.0
    %v4487 = vmax.f32 %v4473, 0.0
    %v4488 = vmax.f32 %v4474, 0.0
    %v4489 = vmax.f32 %v4475, 0.0
    %v4490 = vmax.f32 %v4476, 0.0
    %v4491 = vmax.f32 %v4477, 0.0
    %v4492 = vmax.f32 %v4478, 0.0
    %vm4493 = vcmask 130048
    %4494 = vst.msk [vmem:[#allocation6] sm:$0xff] %vm4493, %v4479
    %4495 = vst.msk [vmem:[#allocation6 + $0x8] sm:$0xff] %vm4493, %v4480
    %4496 = vst.msk [vmem:[#allocation6 + $0x10] sm:$0xff] %vm4493, %v4481
    %4497 = vst.msk [vmem:[#allocation6 + $0x18] sm:$0xff] %vm4493, %v4482
    %4498 = vst.msk [vmem:[#allocation6 + $0x20] sm:$0xff] %vm4493, %v4483
    %4499 = vst.msk [vmem:[#allocation6 + $0x28] sm:$0xff] %vm4493, %v4484
    %4500 = vst.msk [vmem:[#allocation6 + $0x30] sm:$0xff] %vm4493, %v4485
    %4501 = vst.msk [vmem:[#allocation6 + $0x38] sm:$0xff] %vm4493, %v4486
    %4502 = vst.msk [vmem:[#allocation6 + $0x40] sm:$0xff] %vm4493, %v4487
    %4503 = vst.msk [vmem:[#allocation6 + $0x48] sm:$0xff] %vm4493, %v4488
    %4504 = vst.msk [vmem:[#allocation6 + $0x50] sm:$0xff] %vm4493, %v4489
    %4505 = vst.msk [vmem:[#allocation6 + $0x58] sm:$0xff] %vm4493, %v4490
    %4506 = vst.msk [vmem:[#allocation6 + $0x60] sm:$0xff] %vm4493, %v4491
    %4507 = vst.msk [vmem:[#allocation6 + $0x68] sm:$0xff] %vm4493, %v4492
    %v4508 = vld [vmem:[#allocation6] sm:$0x3]
    %v4509 = vld [vmem:[#allocation6 + $0x8] sm:$0x3]
    %v4510 = vmax.f32 %v4508, %v4509
    %vm4511 = vcmask 123904
    %v4512 = vsel %vm4511, %v4510, -inf
    %v4513 = vrot.slane %v4512, 4
    %v4514 = vmax.f32 %v4512, %v4513
    %v4515 = vrot.slane %v4514, 2
    %v4516 = vmax.f32 %v4514, %v4515
    %v4517 = vrot.slane %v4516, 1
    %v4518 = vmax.f32 %v4516, %v4517
    %vm4519 = vcmask 122880
    %4520 = vst.msk [vmem:[#allocation7] sm:$0x1] %vm4519, %v4518
    %v4521 = vld [vmem:[#allocation6 + $0x2] sm:$0x3]
    %v4522 = vld [vmem:[#allocation6 + $0xa] sm:$0x3]
    %v4523 = vmax.f32 %v4521, %v4522
    %v4524 = vsel %vm4511, %v4523, -inf
    %v4525 = vrot.slane %v4524, 4
    %v4526 = vmax.f32 %v4524, %v4525
    %v4527 = vrot.slane %v4526, 2
    %v4528 = vmax.f32 %v4526, %v4527
    %v4529 = vrot.slane %v4528, 1
    %v4530 = vmax.f32 %v4528, %v4529
    %4532 = vrot.lane.b32.xlu0 %v4530, 16
    %v4533 = vpop.permute.xlu0 %4532
    %vm4535 = vcmask 254080
    %4536 = vst.msk [vmem:[#allocation7] sm:$0x1] %vm4535, %v4533
    %v4537 = vld [vmem:[#allocation6 + $0x10] sm:$0x3]
    %v4538 = vld [vmem:[#allocation6 + $0x18] sm:$0x3]
    %v4539 = vmax.f32 %v4537, %v4538
    %v4540 = vsel %vm4511, %v4539, -inf
    %v4541 = vrot.slane %v4540, 4
    %v4542 = vmax.f32 %v4540, %v4541
    %v4543 = vrot.slane %v4542, 2
    %v4544 = vmax.f32 %v4542, %v4543
    %v4545 = vrot.slane %v4544, 1
    %v4546 = vmax.f32 %v4544, %v4545
    %4548 = vrot.lane.b32.xlu0 %v4546, 32
    %v4549 = vpop.permute.xlu0 %4548
    %vm4551 = vcmask 385280
    %4552 = vst.msk [vmem:[#allocation7] sm:$0x1] %vm4551, %v4549
    %v4553 = vld [vmem:[#allocation6 + $0x12] sm:$0x3]
    %v4554 = vld [vmem:[#allocation6 + $0x1a] sm:$0x3]
    %v4555 = vmax.f32 %v4553, %v4554
    %v4556 = vsel %vm4511, %v4555, -inf
    %v4557 = vrot.slane %v4556, 4
    %v4558 = vmax.f32 %v4556, %v4557
    %v4559 = vrot.slane %v4558, 2
    %v4560 = vmax.f32 %v4558, %v4559
    %v4561 = vrot.slane %v4560, 1
    %v4562 = vmax.f32 %v4560, %v4561
    %4564 = vrot.lane.b32.xlu0 %v4562, 48
    %v4565 = vpop.permute.xlu0 %4564
    %vm4567 = vcmask 516480
    %4568 = vst.msk [vmem:[#allocation7] sm:$0x1] %vm4567, %v4565
    %v4569 = vld [vmem:[#allocation6 + $0x38] sm:$0x3]
    %v4570 = vld [vmem:[#allocation6 + $0x40] sm:$0x3]
    %v4571 = vmax.f32 %v4569, %v4570
    %v4572 = vsel %vm4511, %v4571, -inf
    %v4573 = vrot.slane %v4572, 4
    %v4574 = vmax.f32 %v4572, %v4573
    %v4575 = vrot.slane %v4574, 2
    %v4576 = vmax.f32 %v4574, %v4575
    %v4577 = vrot.slane %v4576, 1
    %v4578 = vmax.f32 %v4576, %v4577
    %4579 = vst.msk [vmem:[#allocation7 + $0x1] sm:$0x1] %vm4519, %v4578
    %v4580 = vld [vmem:[#allocation6 + $0x3a] sm:$0x3]
    %v4581 = vld [vmem:[#allocation6 + $0x42] sm:$0x3]
    %v4582 = vmax.f32 %v4580, %v4581
    %v4583 = vsel %vm4511, %v4582, -inf
    %v4584 = vrot.slane %v4583, 4
    %v4585 = vmax.f32 %v4583, %v4584
    %v4586 = vrot.slane %v4585, 2
    %v4587 = vmax.f32 %v4585, %v4586
    %v4588 = vrot.slane %v4587, 1
    %v4589 = vmax.f32 %v4587, %v4588
    %4591 = vrot.lane.b32.xlu0 %v4589, 16
    %v4592 = vpop.permute.xlu0 %4591
    %4594 = vst.msk [vmem:[#allocation7 + $0x1] sm:$0x1] %vm4535, %v4592
    %v4595 = vld [vmem:[#allocation6 + $0x48] sm:$0x3]
    %v4596 = vld [vmem:[#allocation6 + $0x50] sm:$0x3]
    %v4597 = vmax.f32 %v4595, %v4596
    %v4598 = vsel %vm4511, %v4597, -inf
    %v4599 = vrot.slane %v4598, 4
    %v4600 = vmax.f32 %v4598, %v4599
    %v4601 = vrot.slane %v4600, 2
    %v4602 = vmax.f32 %v4600, %v4601
    %v4603 = vrot.slane %v4602, 1
    %v4604 = vmax.f32 %v4602, %v4603
    %4606 = vrot.lane.b32.xlu0 %v4604, 32
    %v4607 = vpop.permute.xlu0 %4606
    %4609 = vst.msk [vmem:[#allocation7 + $0x1] sm:$0x1] %vm4551, %v4607
    %v4610 = vld [vmem:[#allocation6 + $0x4a] sm:$0x3]
    %v4611 = vld [vmem:[#allocation6 + $0x52] sm:$0x3]
    %v4612 = vmax.f32 %v4610, %v4611
    %v4613 = vsel %vm4511, %v4612, -inf
    %v4614 = vrot.slane %v4613, 4
    %v4615 = vmax.f32 %v4613, %v4614
    %v4616 = vrot.slane %v4615, 2
    %v4617 = vmax.f32 %v4615, %v4616
    %v4618 = vrot.slane %v4617, 1
    %v4619 = vmax.f32 %v4617, %v4618
    %4621 = vrot.lane.b32.xlu0 %v4619, 48
    %v4622 = vpop.permute.xlu0 %4621
    %4624 = vst.msk [vmem:[#allocation7 + $0x1] sm:$0x1] %vm4567, %v4622
    %v4625 = vld [vmem:[#allocation7] sm:$0x3]
    %v4626 = vld [vmem:[%s5] sm:$0xff]
    %v4627 = vld [vmem:[%s5 + $0x8] sm:$0xff]
    %v4628 = vld [vmem:[%s5 + $0x10] sm:$0xff]
    %v4629 = vld [vmem:[%s5 + $0x18] sm:$0xff]
    %v4630 = vld [vmem:[%s5 + $0x20] sm:$0xff]
    %v4631 = vld [vmem:[%s5 + $0x28] sm:$0xff]
    %v4632 = vld [vmem:[%s5 + $0x30] sm:$0xff]
    %v4633 = vld [vmem:[%s5 + $0x38] sm:$0xff]
    %v4634 = vld [vmem:[%s6] sm:$0x1]
    %v4636 = vlaneseq
    %v4637 = vshrl.u32 %v4636, 7
    %v4638 = vsub.s32 0, %v4637
    %v4639 = vrot.slane %v4634, %v4638
    %vm4641 = vcmask 523264
    %v4643 = vsel %vm4641, %v4625, 0
    %4645 = vmatprep.subr.mxu0 0.0
    %4646 = vmatpush1.msra.mxu0 %v4626
    %4647 = vmatprep.subr.mxu0 0.0
    %4648 = vmatpush1.msra.mxu0 %v4627
    %4649 = vmatprep.subr.mxu0 0.0
    %4650 = vmatpush1.msra.mxu0 %v4628
    %4651 = vmatprep.subr.mxu0 0.0
    %4652 = vmatpush1.msra.mxu0 %v4629
    %4653 = vmatprep.subr.mxu0 0.0
    %4654 = vmatpush1.msra.mxu0 %v4630
    %4655 = vmatprep.subr.mxu0 0.0
    %4656 = vmatpush1.msra.mxu0 %v4631
    %4657 = vmatprep.subr.mxu0 0.0
    %4658 = vmatpush1.msra.mxu0 %v4632
    %4659 = vmatprep.subr.mxu0 0.0
    %4660 = vmatpush1.msra.mxu0 %v4633
    %4661 = vmatprep.subr.mxu0 0.0
    %4662 = vmatpush1.msra.mxu0 0.0
    %4663 = vmatprep.subr.mxu0 0.0
    %4664 = vmatpush1.msra.mxu0 0.0
    %4665 = vmatprep.subr.mxu0 0.0
    %4666 = vmatpush1.msra.mxu0 0.0
    %4667 = vmatprep.subr.mxu0 0.0
    %4668 = vmatpush1.msra.mxu0 0.0
    %4669 = vmatprep.subr.mxu0 0.0
    %4670 = vmatpush1.msra.mxu0 0.0
    %4671 = vmatprep.subr.mxu0 0.0
    %4672 = vmatpush1.msra.mxu0 0.0
    %4673 = vmatprep.subr.mxu0 0.0
    %4674 = vmatpush1.msra.mxu0 0.0
    %4675 = vmatprep.subr.mxu0 0.0
    %4676 = vmatpush1.msra.mxu0 0.0
    %4677 = vmatprep.subr.mxu0 0.0
    %4678 = vmatpush1.msra.mxu0 0.0
    %4679 = vmatprep.subr.mxu0 0.0
    %4680 = vmatpush1.msra.mxu0 0.0
    %4681 = vmatprep.subr.mxu0 0.0
    %4682 = vmatpush1.msra.mxu0 0.0
    %4683 = vmatprep.subr.mxu0 0.0
    %4684 = vmatpush1.msra.mxu0 0.0
    %4685 = vmatprep.subr.mxu0 0.0
    %4686 = vmatpush1.msra.mxu0 0.0
    %4687 = vmatprep.subr.mxu0 0.0
    %4688 = vmatpush1.msra.mxu0 0.0
    %4689 = vmatprep.subr.mxu0 0.0
    %4690 = vmatpush1.msra.mxu0 0.0
    %4691 = vmatprep.subr.mxu0 0.0
    %4692 = vmatpush1.msra.mxu0 0.0
    %4693 = vmatprep.subr.mxu0 0.0
    %4694 = vmatpush1.msra.mxu0 0.0
    %4695 = vmatprep.subr.mxu0 0.0
    %4696 = vmatpush1.msra.mxu0 0.0
    %4697 = vmatprep.subr.mxu0 0.0
    %4698 = vmatpush1.msra.mxu0 0.0
    %4699 = vmatprep.subr.mxu0 0.0
    %4700 = vmatpush1.msra.mxu0 0.0
    %4701 = vmatprep.subr.mxu0 0.0
    %4702 = vmatpush1.msra.mxu0 0.0
    %4703 = vmatprep.subr.mxu0 0.0
    %4704 = vmatpush1.msra.mxu0 0.0
    %4705 = vmatprep.subr.mxu0 0.0
    %4706 = vmatpush1.msra.mxu0 0.0
    %4707 = vmatprep.subr.mxu0 0.0
    %4708 = vmatpush1.msra.mxu0 0.0
    %4709 = vmatprep.mubr.f32.mxu0 0.0
    %4710 = vmatmul.mubr.f32.gmra.mrb[0].mxu0 %v4643
    %v4711 = vpop.f32.mrb[0].mxu0
    %v4712 = vadd.f32 %v4639, %v4711
    %v4713 = vpop.f32.mrb[0].mxu0
    %4714 = vdwg.mxu0
    %vm4715 = vcmask 74752
    %v4716 = vsel %vm4715, %v4712, -inf
    %4717 = vmax.xlane.f32.xlu0 %v4716
    %v4718 = vpop.xlane.xlu0 %4717
    %v4719 = vsub.f32 %v4712, %v4718
    %v4720 = vmul.f32 %v4719, 1.442695
    %v4721 = vpow.pop %v4720
    %v4722 = vsel %vm4715, %v4721, 0.0
    %4723 = vadd.xlane.f32.xlu0 %v4722
    %v4724 = vpop.xlane.xlu0 %4723
    %v4725 = vlog2.pop %v4724
    %v4726 = vmul.f32 %v4725, 0.6931472
    %v4727 = vsub.f32 %v4719, %v4726
    %4728 = vst.msk [vmem:[#allocation8] sm:$0x3] %vm4715, %v4727
    // Predicated region
    $region30: #{cnn_forward.1} parent=1 // pred_check
      _
    $region31: #{cnn_forward.1} parent=1 // pred_check_branch
      %4730 = sbr.rel (0) target = $region33
    $region32: #{cnn_forward.1} parent=1 // pred_region
      %s4732 = ssub.s32 32, 32
      %4733 = vsyncadd [#allocation9], %s4732
      %s4735 = sshll.u32 [#allocation8], 4
      %s4736 = int_to_ptr.vmem [resolvable:$true] %s4735
      %4738 = dma.vmem_to_hbm [thread:$0]  %s4736, 32, %s7, [#allocation9]
    $region33: #{cnn_forward.1} parent=1 // pred_fallthru
      _
    // Predicated region
    $region34: #{cnn_forward.1} parent=1 // pred_check
      _
    $region35: #{cnn_forward.1} parent=1 // pred_check_branch
      %4740 = sbr.rel (0) target = $region37
    $region36: #{cnn_forward.1} parent=1 // pred_region
      %4741 = dma.done [#allocation9], 32
    $region37: #{cnn_forward.1} parent=1 // pred_fallthru
      _
    %4742 = vsyncpa [#allocation9], 1

</llo_original>
